<compile_context>
chip_gen: v6e
topology: v6e:2x2x1
jax: 0.10.0
libtpu: 0.0.40
codegen_flags: <defaults>
</compile_context>

<pallas_src>
import jax
import jax.numpy as jnp
from jax.experimental import pallas as pl
from jax.experimental.pallas import tpu as pltpu

EPS = 1e-5


# --------------------------------------------------------------------------
# Kernels
# --------------------------------------------------------------------------
def make_encode_kernel(tile_n, n_valid, n_pad):
    n_chunks = tile_n // 128
    n_tiles = n_pad // tile_n
    need_mask = n_valid != n_pad

    def encode_kernel(x_ref, w1_ref, b1_ref, w2_ref, b2_ref, w3_ref,
                      h1_ref, gmax_ref, mrun_ref):
        nt = pl.program_id(1)

        # conv1 + bn1 + relu -> pointfeat (64, tile_n), streamed out in bf16.
        h1 = jnp.maximum(
            jnp.dot(w1_ref[...], x_ref[0], preferred_element_type=jnp.float32)
            + b1_ref[...], 0.0)
        h1_bf = h1.astype(jnp.bfloat16)
        h1_ref[0] = h1_bf

        # conv2 + bn2 + relu
        h2 = jnp.maximum(
            jnp.dot(w2_ref[...], h1_bf, preferred_element_type=jnp.float32)
            + b2_ref[...], 0.0)

        # conv3 WITHOUT its bias (b3 is added once to the global max in the
        # wrapper: max(h + b3) == max(h) + b3), saving a full (1024, tile_n)
        # f32 elementwise pass + stores per tile.
        h3 = jnp.dot(w3_ref[...], h2.astype(jnp.bfloat16),
                     preferred_element_type=jnp.float32)          # (1024, tile_n)

        @pl.when(nt == 0)
        def _():
            mrun_ref[...] = jnp.full(mrun_ref.shape, -jnp.inf, mrun_ref.dtype)

        # Running max kept lane-wide: per-tile updates are pure VPU maxes over
        # 128-lane chunks; the cross-lane reduce is deferred to the last tile.
        m = mrun_ref[...]
        if need_mask:
            lane = jax.lax.broadcasted_iota(jnp.int32, (1024, 128), 1)
            base = nt * tile_n
        for c in range(n_chunks):
            chunk = h3[:, c * 128:(c + 1) * 128]
            # Only trailing chunk(s) of the last tile can contain padded
            # points; the global-index compare is a no-op on earlier tiles.
            if need_mask and (n_tiles - 1) * tile_n + (c + 1) * 128 > n_valid:
                gidx = base + (c * 128) + lane
                chunk = jnp.where(gidx < n_valid, chunk, -jnp.inf)
            m = jnp.maximum(m, chunk)
        mrun_ref[...] = m

        @pl.when(nt == n_tiles - 1)
        def _():
            gmax_ref[0] = jnp.max(m, axis=1, keepdims=True)       # (1024, 1)

    return encode_kernel


def conv4_kernel(h1_ref, gb_ref, w4p_ref, o_ref):
    hp = jnp.dot(w4p_ref[...], h1_ref[0], preferred_element_type=jnp.float32)
    o_ref[0] = jnp.maximum(hp + gb_ref[0], 0.0).astype(o_ref.dtype)


# --------------------------------------------------------------------------
# Parameter folding / helpers
# --------------------------------------------------------------------------
def fold_bn_t(w, b, gamma, beta, mean, var, eps=EPS):
    """Fold eval-mode BatchNorm1d into a transposed (C_out, C_in) bf16 weight
    and a (C_out, 1) f32 bias (channels-first layout)."""
    scale = gamma / jnp.sqrt(var + eps)
    wt = (w * scale[None, :]).T                                   # (Cout, Cin)
    b_eff = (b - mean) * scale + beta                             # (Cout,)
    return wt.astype(jnp.bfloat16), b_eff.reshape(-1, 1).astype(jnp.float32)


def _vmem_limit_bytes():
    """Scoped-VMEM limit sized to the chip generation:
    ~112 MiB on 128 MiB parts (v5e/v6e), ~48 MiB on v7x (64 MiB/TC)."""
    cap = 64 << 20
    try:
        info = pltpu.get_tpu_info()
        cap = int(getattr(info, "vmem_capacity_bytes", cap)) or cap
    except Exception:
        pass
    return int(max(32 << 20, min(cap - (16 << 20), 112 << 20)))


def _pick_tile(n_pad, candidates, budget_bytes, bytes_per_point):
    """Largest candidate tile that divides n_pad and fits the VMEM budget."""
    for t in candidates:
        if n_pad % t == 0 and t * bytes_per_point <= budget_bytes:
            return t
    return 128  # n_pad is always a multiple of 128


# --------------------------------------------------------------------------
# Forward
# --------------------------------------------------------------------------
def pointnet_forward(x_ncw, params, tile_n1=None, tile_n2=None,
                     out_dtype=jnp.float32):
    """x_ncw: (B, 3, N) float32, like the PyTorch module. Returns (B, 1024, N)."""
    B, Cin, N = x_ncw.shape
    assert Cin == 3

    w1, b1 = fold_bn_t(params["w1"], params["cb1"], *params["bn1"])
    w2, b2 = fold_bn_t(params["w2"], params["cb2"], *params["bn2"])
    w3, b3 = fold_bn_t(params["w3"], params["cb3"], *params["bn3"])
    w4, b4 = fold_bn_t(params["w4"], params["cb4"], *params["bn4"])
    # conv4 input is cat([global(1024), pointfeat(64)]) -> split its weight.
    w4g, w4p = w4[:, :1024], w4[:, 1024:]                         # (1024,1024),(1024,64)

    # Pad the point axis up to a lane multiple so every tile is lane-dense;
    # padded points are masked out of the global max inside the kernel and
    # sliced off the final output.
    n_pad = -(-N // 128) * 128
    xb = x_ncw.astype(jnp.bfloat16)
    if n_pad != N:
        xb = jnp.pad(xb, ((0, 0), (0, 0), (0, n_pad - N)))

    vmem_limit = _vmem_limit_bytes()
    budget = max(8 << 20, vmem_limit - (8 << 20))

    # Pass-1 VMEM/point: x(3*2*2) + h1 out(64*2*2) + h2(128*4) + h3(1024*4).
    if tile_n1 is None:
        tile_n1 = _pick_tile(n_pad, (1024, 512, 256, 128), budget, 5 * 1024)
    # Pass-2 VMEM/point: h1 in (64*2*2) + out (1024*itemsize*2, double-buffered).
    if tile_n2 is None:
        osz = jnp.dtype(out_dtype).itemsize
        cand2 = (4096, 2048, 1024, 512, 256, 128) if osz == 2 \
            else (2048, 1024, 512, 256, 128)
        tile_n2 = _pick_tile(n_pad, cand2, budget, 64 * 4 + 1024 * osz * 2)
    assert n_pad % tile_n1 == 0 and n_pad % tile_n2 == 0
    nt1, nt2 = n_pad // tile_n1, n_pad // tile_n2

    const = lambda b, n: (0, 0)

    # ---------------- Pass 1: conv1/2/3 + running global max -----------------
    h1, gmax = pl.pallas_call(
        make_encode_kernel(tile_n1, N, n_pad),
        out_shape=(
            jax.ShapeDtypeStruct((B, 64, n_pad), jnp.bfloat16),
            jax.ShapeDtypeStruct((B, 1024, 1), jnp.float32),
        ),
        grid_spec=pltpu.PrefetchScalarGridSpec(
            num_scalar_prefetch=0,
            grid=(B, nt1),
            in_specs=[
                pl.BlockSpec((1, 3, tile_n1), lambda b, n: (b, 0, n)),   # x
                pl.BlockSpec((64, 3), const), pl.BlockSpec((64, 1), const),
                pl.BlockSpec((128, 64), const), pl.BlockSpec((128, 1), const),
                pl.BlockSpec((1024, 128), const),                        # w3
            ],
            out_specs=[
                pl.BlockSpec((1, 64, tile_n1), lambda b, n: (b, 0, n)),  # pointfeat
                pl.BlockSpec((1, 1024, 1), lambda b, n: (b, 0, 0)),      # gmax
            ],
            scratch_shapes=[pltpu.VMEM((1024, 128), jnp.float32)],       # running max
        ),
        compiler_params=pltpu.CompilerParams(
            dimension_semantics=("parallel", "arbitrary"),
            vmem_limit_bytes=vmem_limit,
        ),
    )(xb, w1, b1, w2, b2, w3)

    # Per-batch conv4-global contribution, computed as a tiny batched gemv in
    # plain XLA (keeps the 2 MiB w4g weight and a degenerate N=1 matmul out of
    # the Pallas pass).  b3 is added here in f32, before the bf16 cast, to
    # match the reference's cast ordering.
    g = (gmax + b3[None]).astype(jnp.bfloat16)                    # (B, 1024, 1)
    gb = jnp.einsum("oc,bcn->bon", w4g, g,
                    preferred_element_type=jnp.float32) + b4[None]

    # ---------------- Pass 2: conv4 on [global | pointfeat] ------------------
    out = pl.pallas_call(
        conv4_kernel,
        out_shape=jax.ShapeDtypeStruct((B, 1024, n_pad), out_dtype),
        grid_spec=pltpu.PrefetchScalarGridSpec(
            num_scalar_prefetch=0,
            grid=(B, nt2),
            in_specs=[
                pl.BlockSpec((1, 64, tile_n2), lambda b, n: (b, 0, n)),  # pointfeat
                pl.BlockSpec((1, 1024, 1), lambda b, n: (b, 0, 0)),      # gb
                pl.BlockSpec((1024, 64), const),                         # w4 (point)
            ],
            out_specs=pl.BlockSpec((1, 1024, tile_n2), lambda b, n: (b, 0, n)),
        ),
        compiler_params=pltpu.CompilerParams(
            dimension_semantics=("parallel", "parallel"),
            vmem_limit_bytes=vmem_limit,
        ),
    )(h1, gb, w4p)

    if n_pad != N:
        out = out[:, :, :N]
    return out                                                     # (B, 1024, N)


# --------------------------------------------------------------------------
# Pure-JAX reference (same eval-mode BN folding + same bf16 casts)
# --------------------------------------------------------------------------
def pointnet_reference(x_ncw, params):
    w1, b1 = fold_bn_t(params["w1"], params["cb1"], *params["bn1"])
    w2, b2 = fold_bn_t(params["w2"], params["cb2"], *params["bn2"])
    w3, b3 = fold_bn_t(params["w3"], params["cb3"], *params["bn3"])
    w4, b4 = fold_bn_t(params["w4"], params["cb4"], *params["bn4"])
    w4g, w4p = w4[:, :1024], w4[:, 1024:]

    xb = x_ncw.astype(jnp.bfloat16)
    mm = lambda w, a: jnp.einsum("oc,bcn->bon", w, a,
                                 preferred_element_type=jnp.float32)
    h1 = jax.nn.relu(mm(w1, xb) + b1)
    h1b = h1.astype(jnp.bfloat16)
    h2 = jax.nn.relu(mm(w2, h1b) + b2)
    h3 = mm(w3, h2.astype(jnp.bfloat16)) + b3
    g = jnp.max(h3, axis=2, keepdims=True)                         # (B, 1024, 1)
    gb = mm(w4g, g.astype(jnp.bfloat16)) + b4                      # (B, 1024, 1)
    return jax.nn.relu(mm(w4p, h1b) + gb)                          # (B, 1024, N)


# --------------------------------------------------------------------------
# Params / test
# --------------------------------------------------------------------------
def init_params(key):
    ks = jax.random.split(key, 16)

    def conv(k, cin, cout, scale=0.1):
        return scale * jax.random.normal(k, (cin, cout), jnp.float32)

    def bn(k, c):
        k1, k2, k3, k4 = jax.random.split(k, 4)
        gamma = 1.0 + 0.1 * jax.random.normal(k1, (c,), jnp.float32)
        beta = 0.1 * jax.random.normal(k2, (c,), jnp.float32)
        mean = 0.1 * jax.random.normal(k3, (c,), jnp.float32)
        var = jax.random.uniform(k4, (c,), jnp.float32, 0.5, 1.5)
        return (gamma, beta, mean, var)

    return {
        "w1": conv(ks[0], 3, 64),     "cb1": 0.1 * jax.random.normal(ks[1], (64,)),
        "w2": conv(ks[2], 64, 128),   "cb2": 0.1 * jax.random.normal(ks[3], (128,)),
        "w3": conv(ks[4], 128, 1024), "cb3": 0.1 * jax.random.normal(ks[5], (1024,)),
        "w4": conv(ks[6], 1088, 1024, scale=0.05),
        "cb4": 0.1 * jax.random.normal(ks[7], (1024,)),
        "bn1": bn(ks[8], 64),
        "bn2": bn(ks[9], 128),
        "bn3": bn(ks[10], 1024),
        "bn4": bn(ks[11], 1024),
    }


if __name__ == "__main__":
    key = jax.random.PRNGKey(0)
    kx, kx2, kp = jax.random.split(key, 3)
    params = init_params(kp)

    # Case 1: B=2, N=256 with 128-point encode tiles -> exercises the deferred
    # running global-max accumulator across tiles and its reset across batch
    # elements, plus the decoupled (larger) pass-2 tile.
    B, N = 2, 256
    x = jax.random.normal(kx, (B, 3, N), jnp.float32)
    out = jax.block_until_ready(pointnet_forward(x, params, tile_n1=128))
    ref = pointnet_reference(x, params)
    assert out.shape == (B, 1024, N), out.shape
    assert jnp.allclose(out, ref, atol=1e-2, rtol=1e-2), "case1 mismatch"

    # Case 2: N not a multiple of 128 -> exercises lane padding + in-kernel
    # masking of padded points in the global max.
    B2, N2 = 1, 200
    x2 = jax.random.normal(kx2, (B2, 3, N2), jnp.float32)
    out2 = jax.block_until_ready(pointnet_forward(x2, params))
    ref2 = pointnet_reference(x2, params)
    assert out2.shape == (B2, 1024, N2), out2.shape
    assert jnp.allclose(out2, ref2, atol=1e-2, rtol=1e-2), "case2 mismatch"

    print("KERNEL_OK")
</pallas_src>

<mosaic_0001>
module attributes {stable_mosaic.version = 11 : i64} {
  func.func @encode_kernel(%arg0: i32, %arg1: i32, %arg2: memref<1x3x128xbf16, #tpu.memory_space<vmem>>, %arg3: memref<64x3xbf16, #tpu.memory_space<vmem>>, %arg4: memref<64x1xf32, #tpu.memory_space<vmem>>, %arg5: memref<128x64xbf16, #tpu.memory_space<vmem>>, %arg6: memref<128x1xf32, #tpu.memory_space<vmem>>, %arg7: memref<1024x128xbf16, #tpu.memory_space<vmem>>, %arg8: memref<1x64x128xbf16, #tpu.memory_space<vmem>>, %arg9: memref<1x1024x1xf32, #tpu.memory_space<vmem>>, %arg10: memref<1024x128xf32, #tpu.memory_space<vmem>>) attributes {dimension_semantics = [#tpu.dimension_semantics<parallel>, #tpu.dimension_semantics<arbitrary>], iteration_bounds = array<i64: 2, 2>, scalar_prefetch = 0 : i64, scratch_operands = 1 : i64, tpu.core_type = #tpu.core_type<tc>, window_params = [{transform_indices = @transform_0, window_bounds = array<i64: 1, 3, 128>}, {pipeline_mode = #tpu.pipeline_mode<synchronous>, transform_indices = @transform_1, window_bounds = array<i64: 64, 3>}, {pipeline_mode = #tpu.pipeline_mode<synchronous>, transform_indices = @transform_2, window_bounds = array<i64: 64, 1>}, {pipeline_mode = #tpu.pipeline_mode<synchronous>, transform_indices = @transform_3, window_bounds = array<i64: 128, 64>}, {pipeline_mode = #tpu.pipeline_mode<synchronous>, transform_indices = @transform_4, window_bounds = array<i64: 128, 1>}, {pipeline_mode = #tpu.pipeline_mode<synchronous>, transform_indices = @transform_5, window_bounds = array<i64: 1024, 128>}, {transform_indices = @transform_6, window_bounds = array<i64: 1, 64, 128>}, {transform_indices = @transform_7, window_bounds = array<i64: 1, 1024, 1>}]} {
    %c0 = arith.constant 0 : index
    %c0_0 = arith.constant 0 : index
    %0 = vector.load %arg3[%c0, %c0_0] : memref<64x3xbf16, #tpu.memory_space<vmem>>, vector<64x3xbf16>
    %c0_1 = arith.constant 0 : index
    %c0_2 = arith.constant 0 : index
    %c0_3 = arith.constant 0 : index
    %1 = vector.load %arg2[%c0_1, %c0_2, %c0_3] : memref<1x3x128xbf16, #tpu.memory_space<vmem>>, vector<1x3x128xbf16>
    %2 = vector.shape_cast %1 : vector<1x3x128xbf16> to vector<3x128xbf16>
    %cst = arith.constant dense<0.000000e+00> : vector<64x128xf32>
    %3 = tpu.matmul %0, %2, %cst {dimension_numbers = #tpu.dot_dimension_numbers<[1], [0], [0], [1], [0, 0, 1, 1], [], []>} : vector<64x3xbf16>, vector<3x128xbf16>, vector<64x128xf32> -> vector<64x128xf32>
    %c0_4 = arith.constant 0 : index
    %c0_5 = arith.constant 0 : index
    %4 = vector.load %arg4[%c0_4, %c0_5] : memref<64x1xf32, #tpu.memory_space<vmem>>, vector<64x1xf32>
    %5 = vector.broadcast %4 : vector<64x1xf32> to vector<64x128xf32>
    %6 = arith.addf %3, %5 : vector<64x128xf32>
    %cst_6 = arith.constant 0.000000e+00 : f32
    %7 = vector.broadcast %cst_6 : f32 to vector<64x128xf32>
    %8 = arith.maximumf %6, %7 : vector<64x128xf32>
    %9 = arith.truncf %8 : vector<64x128xf32> to vector<64x128xbf16>
    %c0_7 = arith.constant 0 : index
    %c0_8 = arith.constant 0 : index
    %c0_9 = arith.constant 0 : index
    %10 = vector.load %arg8[%c0_7, %c0_8, %c0_9] : memref<1x64x128xbf16, #tpu.memory_space<vmem>>, vector<1x64x128xbf16>
    %11 = vector.shape_cast %10 : vector<1x64x128xbf16> to vector<64x128xbf16>
    %12 = vector.shape_cast %9 : vector<64x128xbf16> to vector<1x64x128xbf16>
    tpu.vector_store %arg8[%c0_7, %c0_8, %c0_9], %12 {strides = array<i32>} : memref<1x64x128xbf16, #tpu.memory_space<vmem>>, vector<1x64x128xbf16>,
    %c0_10 = arith.constant 0 : index
    %c0_11 = arith.constant 0 : index
    %13 = vector.load %arg5[%c0_10, %c0_11] : memref<128x64xbf16, #tpu.memory_space<vmem>>, vector<128x64xbf16>
    %cst_12 = arith.constant dense<0.000000e+00> : vector<128x128xf32>
    %14 = tpu.matmul %13, %9, %cst_12 {dimension_numbers = #tpu.dot_dimension_numbers<[1], [0], [0], [1], [0, 0, 1, 1], [], []>} : vector<128x64xbf16>, vector<64x128xbf16>, vector<128x128xf32> -> vector<128x128xf32>
    %c0_13 = arith.constant 0 : index
    %c0_14 = arith.constant 0 : index
    %15 = vector.load %arg6[%c0_13, %c0_14] : memref<128x1xf32, #tpu.memory_space<vmem>>, vector<128x1xf32>
    %16 = vector.broadcast %15 : vector<128x1xf32> to vector<128x128xf32>
    %17 = arith.addf %14, %16 : vector<128x128xf32>
    %cst_15 = arith.constant 0.000000e+00 : f32
    %18 = vector.broadcast %cst_15 : f32 to vector<128x128xf32>
    %19 = arith.maximumf %17, %18 : vector<128x128xf32>
    %c0_16 = arith.constant 0 : index
    %c0_17 = arith.constant 0 : index
    %20 = vector.load %arg7[%c0_16, %c0_17] : memref<1024x128xbf16, #tpu.memory_space<vmem>>, vector<1024x128xbf16>
    %21 = arith.truncf %19 : vector<128x128xf32> to vector<128x128xbf16>
    %cst_18 = arith.constant dense<0.000000e+00> : vector<1024x128xf32>
    %22 = tpu.matmul %20, %21, %cst_18 {dimension_numbers = #tpu.dot_dimension_numbers<[1], [0], [0], [1], [0, 0, 1, 1], [], []>} : vector<1024x128xbf16>, vector<128x128xbf16>, vector<1024x128xf32> -> vector<1024x128xf32>
    %c0_i32 = arith.constant 0 : i32
    %23 = arith.cmpi eq, %arg1, %c0_i32 : i32
    %24 = arith.extui %23 : i1 to i32
    %c0_i32_19 = arith.constant 0 : i32
    %25 = arith.cmpi ne, %24, %c0_i32_19 : i32
    scf.if %25 {
      %cst_25 = arith.constant 0xFF800000 : f32
      %32 = vector.broadcast %cst_25 : f32 to vector<1024x128xf32>
      %c0_26 = arith.constant 0 : index
      %c0_27 = arith.constant 0 : index
      %33 = vector.load %arg10[%c0_26, %c0_27] : memref<1024x128xf32, #tpu.memory_space<vmem>>, vector<1024x128xf32>
      tpu.vector_store %arg10[%c0_26, %c0_27], %32 {strides = array<i32>} : memref<1024x128xf32, #tpu.memory_space<vmem>>, vector<1024x128xf32>,
    } else {
    }
    %c0_20 = arith.constant 0 : index
    %c0_21 = arith.constant 0 : index
    %26 = vector.load %arg10[%c0_20, %c0_21] : memref<1024x128xf32, #tpu.memory_space<vmem>>, vector<1024x128xf32>
    %27 = arith.maximumf %26, %22 : vector<1024x128xf32>
    %c0_22 = arith.constant 0 : index
    %c0_23 = arith.constant 0 : index
    %28 = vector.load %arg10[%c0_22, %c0_23] : memref<1024x128xf32, #tpu.memory_space<vmem>>, vector<1024x128xf32>
    tpu.vector_store %arg10[%c0_22, %c0_23], %27 {strides = array<i32>} : memref<1024x128xf32, #tpu.memory_space<vmem>>, vector<1024x128xf32>,
    %c1_i32 = arith.constant 1 : i32
    %29 = arith.cmpi eq, %arg1, %c1_i32 : i32
    %30 = arith.extui %29 : i1 to i32
    %c0_i32_24 = arith.constant 0 : i32
    %31 = arith.cmpi ne, %30, %c0_i32_24 : i32
    scf.if %31 {
      %cst_25 = arith.constant dense<0xFF800000> : vector<1024xf32>
      %32 = vector.multi_reduction <maximumf>, %27, %cst_25 [1] : vector<1024x128xf32> to vector<1024xf32>
      %33 = vector.shape_cast %32 : vector<1024xf32> to vector<1024x1xf32>
      %c0_26 = arith.constant 0 : index
      %c0_27 = arith.constant 0 : index
      %c0_28 = arith.constant 0 : index
      %34 = vector.load %arg9[%c0_26, %c0_27, %c0_28] : memref<1x1024x1xf32, #tpu.memory_space<vmem>>, vector<1x1024x1xf32>
      %35 = vector.shape_cast %34 : vector<1x1024x1xf32> to vector<1024x1xf32>
      %36 = vector.shape_cast %33 : vector<1024x1xf32> to vector<1x1024x1xf32>
      tpu.vector_store %arg9[%c0_26, %c0_27, %c0_28], %36 {strides = array<i32>} : memref<1x1024x1xf32, #tpu.memory_space<vmem>>, vector<1x1024x1xf32>,
    } else {
    }
    return
  }
  func.func @transform_0(%arg0: i32, %arg1: i32) -> (i32, i32, i32) {
    %c0_i32 = arith.constant 0 : i32
    %c0_i32_0 = arith.constant 0 : i32
    return %arg0, %c0_i32, %arg1 : i32, i32, i32
  }
  func.func @transform_1(%arg0: i32, %arg1: i32) -> (i32, i32) {
    %c0_i32 = arith.constant 0 : i32
    %c0_i32_0 = arith.constant 0 : i32
    %c0_i32_1 = arith.constant 0 : i32
    return %c0_i32, %c0_i32_0 : i32, i32
  }
  func.func @transform_2(%arg0: i32, %arg1: i32) -> (i32, i32) {
    %c0_i32 = arith.constant 0 : i32
    %c0_i32_0 = arith.constant 0 : i32
    %c0_i32_1 = arith.constant 0 : i32
    return %c0_i32, %c0_i32_0 : i32, i32
  }
  func.func @transform_3(%arg0: i32, %arg1: i32) -> (i32, i32) {
    %c0_i32 = arith.constant 0 : i32
    %c0_i32_0 = arith.constant 0 : i32
    %c0_i32_1 = arith.constant 0 : i32
    return %c0_i32, %c0_i32_0 : i32, i32
  }
  func.func @transform_4(%arg0: i32, %arg1: i32) -> (i32, i32) {
    %c0_i32 = arith.constant 0 : i32
    %c0_i32_0 = arith.constant 0 : i32
    %c0_i32_1 = arith.constant 0 : i32
    return %c0_i32, %c0_i32_0 : i32, i32
  }
  func.func @transform_5(%arg0: i32, %arg1: i32) -> (i32, i32) {
    %c0_i32 = arith.constant 0 : i32
    %c0_i32_0 = arith.constant 0 : i32
    %c0_i32_1 = arith.constant 0 : i32
    return %c0_i32, %c0_i32_0 : i32, i32
  }
  func.func @transform_6(%arg0: i32, %arg1: i32) -> (i32, i32, i32) {
    %c0_i32 = arith.constant 0 : i32
    %c0_i32_0 = arith.constant 0 : i32
    return %arg0, %c0_i32, %arg1 : i32, i32, i32
  }
  func.func @transform_7(%arg0: i32, %arg1: i32) -> (i32, i32, i32) {
    %c0_i32 = arith.constant 0 : i32
    %c0_i32_0 = arith.constant 0 : i32
    %c0_i32_1 = arith.constant 0 : i32
    return %arg0, %c0_i32, %c0_i32_0 : i32, i32, i32
  }
}

</mosaic_0001>

<llo_original>
// kernel: tpu_custom_call.1
$region0: #{tpu_custom_call.1}
  #allocation0 [shape = 'u32[]', space=smem, size = 0x4, offset = 0x4, fixed_abs, tag = 'smem constant byte address 0x4 - core index']
  #allocation1 [shape = 'u32[144,128]{1,0:T(1,128)}', space=vmem, size = 0x12000, scoped, tag = 'internal scratch']
  #allocation2 [shape = 'f32[1024,128]{1,0:T(8,128)}', space=vmem, size = 0x80000, scoped, tag = 'scratch operand']
  %s0 = inlined_call_operand.vmem [shape: bf16[2,3,256], index: 0, kind: input, shape index: {}]
  %s1 = inlined_call_operand.vmem [shape: bf16[64,3], index: 1, kind: input, shape index: {}]
  %s2 = inlined_call_operand.vmem [shape: f32[64,1], index: 2, kind: input, shape index: {}]
  %s3 = inlined_call_operand.vmem [shape: bf16[128,64], index: 3, kind: input, shape index: {}]
  %s4 = inlined_call_operand.vmem [shape: f32[128,1], index: 4, kind: input, shape index: {}]
  %s5 = inlined_call_operand.hbm [shape: bf16[1024,128], index: 5, kind: input, shape index: {}]
  %s6 = inlined_call_operand.hbm [shape: bf16[2,64,256], index: 6, kind: output, shape index: {0}]
  %s7 = inlined_call_operand.vmem [shape: f32[2,1024,1], index: 7, kind: output, shape index: {1}]
  %8 = xla_tuple %s6, %s7
  %s9 = sld [smem:[#allocation0]]
  $region77: #{tpu_custom_call.1} parent=0
    _
  %s11 = ssub.s32 1, %s9
  %s12 = scalar_select 0, %s11, %s9
  $region1: #{tpu_custom_call.1} parent=0
    #allocation3 [shape = 'u8[262144]{0}', space=vmem, size = 0x40000, scoped, tag = 'input window, operand 5, single buffered']
    #allocation4 [shape = 's32[2]{0}', space=sflag, size = 0x8, scoped, tag = 'scoped memory for tpu_custom_call.1']
    #allocation5 [shape = 's32[2]{0}', space=sflag, size = 0x8, scoped, tag = 'scoped memory for tpu_custom_call.1']
    #allocation6 [shape = 'u8[32768]{0}', space=vmem, size = 0x8000, scoped, tag = 'output window, operand 0']
    %13 = vsyncpa [#allocation4], 0
    %14 = vsyncpa [#allocation5], 0
    %s15 = scalar_lea.sflag [#allocation5], 1
    %16 = vsyncpa %s15, 0
    loop: start=0, step=1, limit=6
    $region2: #{tpu_custom_call.1} parent=1 // loop_pre_header
      _
    $region3: #{tpu_custom_call.1} parent=1 // loop_header
      %s18 = sphi 0, %s22
      %p19 = scmp.ge.s32.totalorder %s18, 6
      %s25 = sphi 0, %s37
      %s26 = sphi 0, %s33
      %s27 = sphi 0, %s25
      %s28 = sphi 0, %s26
      %s29 = sphi 0, %s27
      %s30 = sphi 0, %s28
      %s42 = sphi 0, %s44
      %s45 = sphi 0, %s42
      %s46 = sphi 0, %s45
      %s62 = sphi 0, %s46
      %s66 = sphi 0, %s66
      %s68 = sphi 0, %s66
      %s69 = sphi 0, %s68
      %s83 = sphi 0, %s69
      %s87 = sphi 0, %s87
      %s89 = sphi 0, %s87
      %s90 = sphi 0, %s89
      %s104 = sphi 0, %s90
      %s108 = sphi 0, %s108
      %s110 = sphi 0, %s108
      %s111 = sphi 0, %s110
      %s125 = sphi 0, %s111
      %s129 = sphi 0, %s129
      %s131 = sphi 0, %s129
      %s132 = sphi 0, %s131
      %s146 = sphi 0, %s132
      %s150 = sphi 0, %s150
      %s152 = sphi 0, %s150
      %s153 = sphi 0, %s152
      %s167 = sphi 0, %s153
      %s175 = sphi 0, %s177
      %s178 = sphi 0, %s175
      %s179 = sphi 0, %s178
      %s195 = sphi 0, %s179
      %s201 = sphi 0, %s203
      %s204 = sphi 0, %s201
      %s205 = sphi 0, %s204
      %s221 = sphi 0, %s205
    $region4: #{tpu_custom_call.1} parent=1 // loop_header_branch
      %21 = sbr.rel (%p19) target = $region8
    $region5: #{tpu_custom_call.1} parent=1 // loop_body
      %s23 = ssub.s32 %s18, 1
      %s24 = ssub.s32 %s18, 2
      %s31 = sadd.s32 1, %s26
      %p32 = scmp.ge.s32.totalorder %s31, 2
      %s33 = scalar_select %p32, 0, %s31
      %s34 = sadd.s32 1, %s25
      %s35 = scalar_select %p32, %s34, %s25
      %p36 = scmp.ge.s32.totalorder %s35, 2
      %s37 = scalar_select %p36, 0, %s35
      %s38 = ssub.s32 %s25, %s37
      %s39 = ssub.s32 %s26, %s33
      %s40 = sor.u32 %s38, %s39
      %p41 = scmp.eq.s32.totalorder %s40, 0
      %s43 = sadd.s32 %s42, 1
      %s44 = scalar_select %p41, %s42, %s43
      %p47 = pneg %p41
      %p48 = scmp.eq.s32.totalorder %s18, 3
      %p49 = por %p47, %p48
      %p50 = scmp.ne.s32.totalorder %s42, %s45
      %p51 = scmp.eq.s32.totalorder %s18, 0
      %p52 = por %p50, %p51
      %p53 = scmp.ne.s32.totalorder %s42, %s45
      %p54 = scmp.eq.s32.totalorder %s23, 3
      %p55 = por %p53, %p54
      %p56 = scmp.ne.s32.totalorder %s45, %s46
      %p57 = scmp.eq.s32.totalorder %s23, 0
      %p58 = por %p56, %p57
      %p59 = scmp.ne.s32.totalorder %s45, %s46
      %p60 = scmp.eq.s32.totalorder %s24, 3
      %p61 = por %p59, %p60
      %p63 = scmp.ne.s32.totalorder %s46, %s62
      %p64 = scmp.eq.s32.totalorder %s24, 0
      %p65 = por %p63, %p64
      %s67 = sadd.s32 %s66, 1
      %p70 = scmp.eq.s32.totalorder %s18, 3
      %p71 = scmp.ne.s32.totalorder %s66, %s68
      %p72 = scmp.eq.s32.totalorder %s18, 0
      %p73 = por %p71, %p72
      %p74 = scmp.ne.s32.totalorder %s66, %s68
      %p75 = scmp.eq.s32.totalorder %s23, 3
      %p76 = por %p74, %p75
      %p77 = scmp.ne.s32.totalorder %s68, %s69
      %p78 = scmp.eq.s32.totalorder %s23, 0
      %p79 = por %p77, %p78
      %p80 = scmp.ne.s32.totalorder %s68, %s69
      %p81 = scmp.eq.s32.totalorder %s24, 3
      %p82 = por %p80, %p81
      %p84 = scmp.ne.s32.totalorder %s69, %s83
      %p85 = scmp.eq.s32.totalorder %s24, 0
      %p86 = por %p84, %p85
      %s88 = sadd.s32 %s87, 1
      %p91 = scmp.eq.s32.totalorder %s18, 3
      %p92 = scmp.ne.s32.totalorder %s87, %s89
      %p93 = scmp.eq.s32.totalorder %s18, 0
      %p94 = por %p92, %p93
      %p95 = scmp.ne.s32.totalorder %s87, %s89
      %p96 = scmp.eq.s32.totalorder %s23, 3
      %p97 = por %p95, %p96
      %p98 = scmp.ne.s32.totalorder %s89, %s90
      %p99 = scmp.eq.s32.totalorder %s23, 0
      %p100 = por %p98, %p99
      %p101 = scmp.ne.s32.totalorder %s89, %s90
      %p102 = scmp.eq.s32.totalorder %s24, 3
      %p103 = por %p101, %p102
      %p105 = scmp.ne.s32.totalorder %s90, %s104
      %p106 = scmp.eq.s32.totalorder %s24, 0
      %p107 = por %p105, %p106
      %s109 = sadd.s32 %s108, 1
      %p112 = scmp.eq.s32.totalorder %s18, 3
      %p113 = scmp.ne.s32.totalorder %s108, %s110
      %p114 = scmp.eq.s32.totalorder %s18, 0
      %p115 = por %p113, %p114
      %p116 = scmp.ne.s32.totalorder %s108, %s110
      %p117 = scmp.eq.s32.totalorder %s23, 3
      %p118 = por %p116, %p117
      %p119 = scmp.ne.s32.totalorder %s110, %s111
      %p120 = scmp.eq.s32.totalorder %s23, 0
      %p121 = por %p119, %p120
      %p122 = scmp.ne.s32.totalorder %s110, %s111
      %p123 = scmp.eq.s32.totalorder %s24, 3
      %p124 = por %p122, %p123
      %p126 = scmp.ne.s32.totalorder %s111, %s125
      %p127 = scmp.eq.s32.totalorder %s24, 0
      %p128 = por %p126, %p127
      %s130 = sadd.s32 %s129, 1
      %p133 = scmp.eq.s32.totalorder %s18, 3
      %p134 = scmp.ne.s32.totalorder %s129, %s131
      %p135 = scmp.eq.s32.totalorder %s18, 0
      %p136 = por %p134, %p135
      %p137 = scmp.ne.s32.totalorder %s129, %s131
      %p138 = scmp.eq.s32.totalorder %s23, 3
      %p139 = por %p137, %p138
      %p140 = scmp.ne.s32.totalorder %s131, %s132
      %p141 = scmp.eq.s32.totalorder %s23, 0
      %p142 = por %p140, %p141
      %p143 = scmp.ne.s32.totalorder %s131, %s132
      %p144 = scmp.eq.s32.totalorder %s24, 3
      %p145 = por %p143, %p144
      %p147 = scmp.ne.s32.totalorder %s132, %s146
      %p148 = scmp.eq.s32.totalorder %s24, 0
      %p149 = por %p147, %p148
      %s151 = sadd.s32 %s150, 1
      %p154 = scmp.eq.s32.totalorder %s18, 3
      %p155 = scmp.ne.s32.totalorder %s150, %s152
      %p156 = scmp.eq.s32.totalorder %s18, 0
      %p157 = por %p155, %p156
      %p158 = scmp.ne.s32.totalorder %s150, %s152
      %p159 = scmp.eq.s32.totalorder %s23, 3
      %p160 = por %p158, %p159
      %p161 = scmp.ne.s32.totalorder %s152, %s153
      %p162 = scmp.eq.s32.totalorder %s23, 0
      %p163 = por %p161, %p162
      %p164 = scmp.ne.s32.totalorder %s152, %s153
      %p165 = scmp.eq.s32.totalorder %s24, 3
      %p166 = por %p164, %p165
      %p168 = scmp.ne.s32.totalorder %s153, %s167
      %p169 = scmp.eq.s32.totalorder %s24, 0
      %p170 = por %p168, %p169
      %s171 = ssub.s32 %s25, %s37
      %s172 = ssub.s32 %s26, %s33
      %s173 = sor.u32 %s171, %s172
      %p174 = scmp.eq.s32.totalorder %s173, 0
      %s176 = sadd.s32 %s175, 1
      %s177 = scalar_select %p174, %s175, %s176
      %p180 = pneg %p174
      %p181 = scmp.eq.s32.totalorder %s18, 3
      %p182 = por %p180, %p181
      %p183 = scmp.ne.s32.totalorder %s175, %s178
      %p184 = scmp.eq.s32.totalorder %s18, 0
      %p185 = por %p183, %p184
      %p186 = scmp.ne.s32.totalorder %s175, %s178
      %p187 = scmp.eq.s32.totalorder %s23, 3
      %p188 = por %p186, %p187
      %p189 = scmp.ne.s32.totalorder %s178, %s179
      %p190 = scmp.eq.s32.totalorder %s23, 0
      %p191 = por %p189, %p190
      %p192 = scmp.ne.s32.totalorder %s178, %s179
      %p193 = scmp.eq.s32.totalorder %s24, 3
      %p194 = por %p192, %p193
      %p196 = scmp.ne.s32.totalorder %s179, %s195
      %p197 = scmp.eq.s32.totalorder %s24, 0
      %p198 = por %p196, %p197
      %s199 = ssub.s32 %s25, %s37
      %p200 = scmp.eq.s32.totalorder %s199, 0
      %s202 = sadd.s32 %s201, 1
      %s203 = scalar_select %p200, %s201, %s202
      %p206 = pneg %p200
      %p207 = scmp.eq.s32.totalorder %s18, 3
      %p208 = por %p206, %p207
      %p209 = scmp.ne.s32.totalorder %s201, %s204
      %p210 = scmp.eq.s32.totalorder %s18, 0
      %p211 = por %p209, %p210
      %p212 = scmp.ne.s32.totalorder %s201, %s204
      %p213 = scmp.eq.s32.totalorder %s23, 3
      %p214 = por %p212, %p213
      %p215 = scmp.ne.s32.totalorder %s204, %s205
      %p216 = scmp.eq.s32.totalorder %s23, 0
      %p217 = por %p215, %p216
      %p218 = scmp.ne.s32.totalorder %s204, %s205
      %p219 = scmp.eq.s32.totalorder %s24, 3
      %p220 = por %p218, %p219
      %p222 = scmp.ne.s32.totalorder %s205, %s221
      %p223 = scmp.eq.s32.totalorder %s24, 0
      %p224 = por %p222, %p223
      %p225 = scmp.le.s32.totalorder 1, %s18
      %p226 = scmp.lt.s32.totalorder %s18, 5
      %p227 = pnand %p225, %p226
      %p228 = pneg %p227
      // Predicated region
      $region9: #{tpu_custom_call.1} parent=5 // pred_check
        _
      $region10: #{tpu_custom_call.1} parent=5 // pred_check_branch
        %230 = sbr.rel (%p227) target = $region12
      $region11: #{tpu_custom_call.1} parent=5 // pred_region
        %s231 = ssub.s32 %s18, 1
        // Predicated region
        $region13: #{tpu_custom_call.1} parent=11 // pred_check
          %p232 = pneg %p79
        $region14: #{tpu_custom_call.1} parent=11 // pred_check_branch
          %234 = sbr.rel (%p232) target = $region16
        $region15: #{tpu_custom_call.1} parent=11 // pred_region
          _
        $region16: #{tpu_custom_call.1} parent=11 // pred_fallthru
          _
        // Predicated region
        $region17: #{tpu_custom_call.1} parent=11 // pred_check
          %p235 = pneg %p100
        $region18: #{tpu_custom_call.1} parent=11 // pred_check_branch
          %237 = sbr.rel (%p235) target = $region20
        $region19: #{tpu_custom_call.1} parent=11 // pred_region
          _
        $region20: #{tpu_custom_call.1} parent=11 // pred_fallthru
          _
        // Predicated region
        $region21: #{tpu_custom_call.1} parent=11 // pred_check
          %p238 = pneg %p121
        $region22: #{tpu_custom_call.1} parent=11 // pred_check_branch
          %240 = sbr.rel (%p238) target = $region24
        $region23: #{tpu_custom_call.1} parent=11 // pred_region
          _
        $region24: #{tpu_custom_call.1} parent=11 // pred_fallthru
          _
        // Predicated region
        $region25: #{tpu_custom_call.1} parent=11 // pred_check
          %p241 = pneg %p142
        $region26: #{tpu_custom_call.1} parent=11 // pred_check_branch
          %243 = sbr.rel (%p241) target = $region28
        $region27: #{tpu_custom_call.1} parent=11 // pred_region
          _
        $region28: #{tpu_custom_call.1} parent=11 // pred_fallthru
          _
        // Predicated region
        $region29: #{tpu_custom_call.1} parent=11 // pred_check
          %p244 = pneg %p163
        $region30: #{tpu_custom_call.1} parent=11 // pred_check_branch
          %246 = sbr.rel (%p244) target = $region32
        $region31: #{tpu_custom_call.1} parent=11 // pred_region
          %s248 = ssub.s32 8192, 8192
          %249 = vsyncadd [#allocation4], %s248
          %s250 = sshll.u32 [#allocation3], 4
          %s251 = int_to_ptr.vmem [resolvable:$true] %s250
          %256 = dma.hbm_to_vmem [thread:$0]  %s5, 8192, %s251, [#allocation4], 64, 64, 4
        $region32: #{tpu_custom_call.1} parent=11 // pred_fallthru
          _
      $region12: #{tpu_custom_call.1} parent=5 // pred_fallthru
        _
      %p257 = scmp.lt.s32.totalorder %s18, 4
      // Predicated region
      $region33: #{tpu_custom_call.1} parent=5 // pred_check
        %p258 = pneg %p257
      $region34: #{tpu_custom_call.1} parent=5 // pred_check_branch
        %260 = sbr.rel (%p258) target = $region36
      $region35: #{tpu_custom_call.1} parent=5 // pred_region
        // Predicated region
        $region37: #{tpu_custom_call.1} parent=35 // pred_check
          %p261 = pneg %p52
        $region38: #{tpu_custom_call.1} parent=35 // pred_check_branch
          %263 = sbr.rel (%p261) target = $region40
        $region39: #{tpu_custom_call.1} parent=35 // pred_region
          %p264 = scmp.lt.s32.totalorder %s25, 1
          %s265 = scalar_select %p264, %s25, 1
          %p266 = scmp.lt.s32.totalorder %s26, 1
          %s267 = scalar_select %p266, %s26, 1
          %s268 = smul.addr %s265, 2
          %s269 = sadd.s32 %s267, %s268
          %s270 = smul.addr %s269, 2
          %s271 = scalar_lea.vmem %s0, %s270
        $region40: #{tpu_custom_call.1} parent=35 // pred_fallthru
          _
      $region36: #{tpu_custom_call.1} parent=5 // pred_fallthru
        _
      %p272 = scmp.le.s32.totalorder 1, %s18
      %p273 = scmp.lt.s32.totalorder %s18, 5
      %p274 = pnand %p272, %p273
      %p275 = pneg %p274
      // Predicated region
      $region41: #{tpu_custom_call.1} parent=5 // pred_check
        _
      $region42: #{tpu_custom_call.1} parent=5 // pred_check_branch
        %277 = sbr.rel (%p274) target = $region44
      $region43: #{tpu_custom_call.1} parent=5 // pred_region
        %s278 = ssub.s32 %s18, 1
        // Predicated region
        $region45: #{tpu_custom_call.1} parent=43 // pred_check
          %p279 = pneg %p163
        $region46: #{tpu_custom_call.1} parent=43 // pred_check_branch
          %281 = sbr.rel (%p279) target = $region48
        $region47: #{tpu_custom_call.1} parent=43 // pred_region
          %282 = dma.done [#allocation4], 8192
        $region48: #{tpu_custom_call.1} parent=43 // pred_fallthru
          _
        %p283 = scmp.lt.s32.totalorder %s27, 1
        %s284 = scalar_select %p283, %s27, 1
        %p285 = scmp.lt.s32.totalorder %s28, 1
        %s286 = scalar_select %p285, %s28, 1
        %s287 = smul.addr %s284, 2
        %s288 = sadd.s32 %s286, %s287
        %s289 = smul.addr %s288, 2
        %s290 = scalar_lea.vmem %s0, %s289
        %p291 = pneg %p58
        %p292 = pneg %p55
        %p293 = pneg %p79
        %p294 = pneg %p76
        %p295 = pneg %p100
        %p296 = pneg %p97
        %p297 = pneg %p121
        %p298 = pneg %p118
        %p299 = pneg %p142
        %p300 = pneg %p139
        %p301 = pneg %p163
        %p302 = pneg %p160
        %p303 = pneg %p191
        %p304 = pneg %p188
        %s305 = sand.u32 %s178, 1
        %s306 = scalar_lea.sflag [#allocation5], %s305
        %s307 = sand.u32 %s178, 1
        %s308 = smul.addr %s307, 32
        %s309 = scalar_lea.vmem [#allocation6], %s308
        %p310 = pneg %p217
        %p311 = pneg %p214
        %p312 = scmp.lt.s32.totalorder %s27, 1
        %s313 = scalar_select %p312, %s27, 1
        %s314 = smul.addr %s313, 128
        %s315 = smul.addr %s314, 8
        %s316 = scalar_lea.vmem %s7, %s315
        %p317 = scmp.lt.s32.totalorder %s27, 1
        %s318 = scalar_select %p317, %s27, 1
        %p319 = scmp.lt.s32.totalorder %s28, 1
        %s320 = scalar_select %p319, %s28, 1
        %s321 = smul.addr %s318, 2
        %s322 = sadd.s32 %s320, %s321
        %s323 = smul.addr %s322, 2
        %s324 = scalar_lea.vmem %s0, %s323
        %p325 = scmp.lt.s32.totalorder %s27, 1
        %s326 = scalar_select %p325, %s27, 1
        %s327 = smul.addr %s326, 128
        %s328 = smul.addr %s327, 8
        %s329 = scalar_lea.vmem %s7, %s328
        %v331 = vld [vmem:[%s1] sm:$0xf]
        %v332 = vld [vmem:[%s1 + $0x4] sm:$0xf]
        %v333 = vld [vmem:[%s1 + $0x8] sm:$0xf]
        %v334 = vld [vmem:[%s1 + $0xc] sm:$0xf]
        %v335 = vld [vmem:[%s1 + $0x10] sm:$0xf]
        %v336 = vld [vmem:[%s1 + $0x14] sm:$0xf]
        %v337 = vld [vmem:[%s1 + $0x18] sm:$0xf]
        %v338 = vld [vmem:[%s1 + $0x1c] sm:$0xf]
        %v339 = vld [vmem:[%s324] sm:$0x3]
        %v340 = vld [vmem:[%s2] sm:$0xff]
        %v341 = vld [vmem:[%s2 + $0x8] sm:$0xff]
        %v342 = vld [vmem:[%s2 + $0x10] sm:$0xff]
        %v343 = vld [vmem:[%s2 + $0x18] sm:$0xff]
        %v344 = vld [vmem:[%s2 + $0x20] sm:$0xff]
        %v345 = vld [vmem:[%s2 + $0x28] sm:$0xff]
        %v346 = vld [vmem:[%s2 + $0x30] sm:$0xff]
        %v347 = vld [vmem:[%s2 + $0x38] sm:$0xff]
        %349 = vset.pattern.permute.xlu0 0
        %350 = vperm.xlu0 %349, %v340
        %v351 = vpop.permute.xlu0 %350
        %354 = vset.pattern.permute.xlu0 0
        %355 = vperm.xlu0 %354, %v341
        %v356 = vpop.permute.xlu0 %355
        %359 = vset.pattern.permute.xlu0 0
        %360 = vperm.xlu0 %359, %v342
        %v361 = vpop.permute.xlu0 %360
        %364 = vset.pattern.permute.xlu0 0
        %365 = vperm.xlu0 %364, %v343
        %v366 = vpop.permute.xlu0 %365
        %369 = vset.pattern.permute.xlu0 0
        %370 = vperm.xlu0 %369, %v344
        %v371 = vpop.permute.xlu0 %370
        %374 = vset.pattern.permute.xlu0 0
        %375 = vperm.xlu0 %374, %v345
        %v376 = vpop.permute.xlu0 %375
        %379 = vset.pattern.permute.xlu0 0
        %380 = vperm.xlu0 %379, %v346
        %v381 = vpop.permute.xlu0 %380
        %384 = vset.pattern.permute.xlu0 0
        %385 = vperm.xlu0 %384, %v347
        %v386 = vpop.permute.xlu0 %385
        %v396 = vunpack.c.l.b16 %v331
        %v397 = vunpack.c.l.b16 %v332
        %v398 = vunpack.c.l.b16 %v333
        %v399 = vunpack.c.l.b16 %v334
        %v400 = vunpack.c.l.b16 %v335
        %v401 = vunpack.c.l.b16 %v336
        %v402 = vunpack.c.l.b16 %v337
        %v403 = vunpack.c.l.b16 %v338
        %v404 = vpack.c.b16 %v397, %v396
        %v405 = vpack.c.b16 %v399, %v398
        %v406 = vpack.c.b16 %v401, %v400
        %v407 = vpack.c.b16 %v403, %v402
        %vm408 = vcmask 23552
        %v410 = vsel %vm408, %v404, 0
        %v413 = vsel %vm408, %v405, 0
        %v416 = vsel %vm408, %v406, 0
        %v419 = vsel %vm408, %v407, 0
        %vm421 = vcmask 1040384
        %vm422 = vcmask 1041408
        %v423 = vsel %vm421, 4294967295, 65535
        %v424 = vsel %vm422, %v423, 0
        %v426 = vand.u32 %v339, %v424
        %428 = vmatprep.subr.bf16.mxu0 0
        %429 = vmatpush1.bf16.msra.mxu0 0
        %430 = vmatprep.subr.bf16.mxu0 0
        %431 = vmatpush1.bf16.msra.mxu0 0
        %432 = vmatprep.subr.bf16.mxu0 0
        %433 = vmatpush1.bf16.msra.mxu0 0
        %434 = vmatprep.subr.bf16.mxu0 0
        %435 = vmatpush1.bf16.msra.mxu0 0
        %436 = vmatprep.subr.bf16.mxu0 0
        %437 = vmatpush1.bf16.msra.mxu0 0
        %438 = vmatprep.subr.bf16.mxu0 0
        %439 = vmatpush1.bf16.msra.mxu0 0
        %440 = vmatprep.subr.bf16.mxu0 0
        %441 = vmatpush1.bf16.msra.mxu0 0
        %442 = vmatprep.subr.bf16.mxu0 0
        %443 = vmatpush1.bf16.msra.mxu0 %v426
        %444 = vmatprep.subr.bf16.mxu0 0
        %445 = vmatpush2.bf16.msra.mxu0 0
        %446 = vmatprep.subr.bf16.mxu0 0
        %447 = vmatpush2.bf16.msra.mxu0 0
        %448 = vmatprep.subr.bf16.mxu0 0
        %449 = vmatpush2.bf16.msra.mxu0 0
        %450 = vmatprep.subr.bf16.mxu0 0
        %451 = vmatpush2.bf16.msra.mxu0 0
        %452 = vmatprep.subr.bf16.mxu0 0
        %453 = vmatpush2.bf16.msra.mxu0 0
        %454 = vmatprep.subr.bf16.mxu0 0
        %455 = vmatpush2.bf16.msra.mxu0 0
        %456 = vmatprep.subr.bf16.mxu0 0
        %457 = vmatpush2.bf16.msra.mxu0 0
        %458 = vmatprep.subr.bf16.mxu0 0
        %459 = vmatpush2.bf16.msra.mxu0 0
        %460 = vmatprep.mubr.bf16.mxu0 0
        %461 = vmatmul.mubr.bf16.gmra.mxu0 %v410
        %v462 = vpop.f32.mrf.mxu0
        %v463 = vadd.f32 %v351, %v462
        %v464 = vpop.f32.mrf.mxu0
        %v465 = vpop.f32.mrf.mxu0
        %v466 = vadd.f32 %v356, %v465
        %v467 = vpop.f32.mrf.mxu0
        %468 = vmatprep.mubr.bf16.mxu0 0
        %469 = vmatmul.mubr.bf16.gmra.mxu0 %v413
        %v470 = vpop.f32.mrf.mxu0
        %v471 = vadd.f32 %v361, %v470
        %v472 = vpop.f32.mrf.mxu0
        %v473 = vpop.f32.mrf.mxu0
        %v474 = vadd.f32 %v366, %v473
        %v475 = vpop.f32.mrf.mxu0
        %476 = vmatprep.mubr.bf16.mxu0 0
        %477 = vmatmul.mubr.bf16.gmra.mxu0 %v416
        %v478 = vpop.f32.mrf.mxu0
        %v479 = vadd.f32 %v371, %v478
        %v480 = vpop.f32.mrf.mxu0
        %v481 = vpop.f32.mrf.mxu0
        %v482 = vadd.f32 %v376, %v481
        %v483 = vpop.f32.mrf.mxu0
        %484 = vmatprep.mubr.bf16.mxu0 0
        %485 = vmatmul.mubr.bf16.gmra.mxu0 %v419
        %v486 = vpop.f32.mrf.mxu0
        %v487 = vadd.f32 %v381, %v486
        %v488 = vpop.f32.mrf.mxu0
        %v489 = vpop.f32.mrf.mxu0
        %v490 = vadd.f32 %v386, %v489
        %v491 = vpop.f32.mrf.mxu0
        %492 = vdwg.mxu0
        %v493 = vmax.f32 %v463, 0.0
        %v494 = vmax.f32 %v466, 0.0
        %v495 = vmax.f32 %v471, 0.0
        %v496 = vmax.f32 %v474, 0.0
        %v497 = vmax.f32 %v479, 0.0
        %v498 = vmax.f32 %v482, 0.0
        %v499 = vmax.f32 %v487, 0.0
        %v500 = vmax.f32 %v490, 0.0
        %v501 = vpack.c.bf16 %v494, %v493
        %v502 = vpack.c.bf16 %v496, %v495
        %v503 = vpack.c.bf16 %v498, %v497
        %v504 = vpack.c.bf16 %v500, %v499
        %v509 = vunpack.c.l.b16 %v501
        %v510 = vunpack.c.h.b16 %v501
        %v511 = vunpack.c.l.b16 %v502
        %v512 = vunpack.c.h.b16 %v502
        %v513 = vunpack.c.l.b16 %v503
        %v514 = vunpack.c.h.b16 %v503
        %v515 = vunpack.c.l.b16 %v504
        %v516 = vunpack.c.h.b16 %v504
        %v517 = vpack.c.b16 %v509, %v509
        %v518 = vpack.c.b16 %v510, %v510
        %v519 = vpack.c.b16 %v511, %v511
        %v520 = vpack.c.b16 %v512, %v512
        %v521 = vpack.c.b16 %v513, %v513
        %v522 = vpack.c.b16 %v514, %v514
        %v523 = vpack.c.b16 %v515, %v515
        %v524 = vpack.c.b16 %v516, %v516
        %533 = vst [vmem:[%s309] sm:$0xf] %v517
        %534 = vst [vmem:[%s309 + $0x4] sm:$0xf] %v518
        %535 = vst [vmem:[%s309 + $0x8] sm:$0xf] %v519
        %536 = vst [vmem:[%s309 + $0xc] sm:$0xf] %v520
        %537 = vst [vmem:[%s309 + $0x10] sm:$0xf] %v521
        %538 = vst [vmem:[%s309 + $0x14] sm:$0xf] %v522
        %539 = vst [vmem:[%s309 + $0x18] sm:$0xf] %v523
        %540 = vst [vmem:[%s309 + $0x1c] sm:$0xf] %v524
        %v541 = vld [vmem:[%s3] sm:$0xf]
        %v542 = vld [vmem:[%s3 + $0x4] sm:$0xf]
        %v543 = vld [vmem:[%s3 + $0x8] sm:$0xf]
        %v544 = vld [vmem:[%s3 + $0xc] sm:$0xf]
        %v545 = vld [vmem:[%s3 + $0x10] sm:$0xf]
        %v546 = vld [vmem:[%s3 + $0x14] sm:$0xf]
        %v547 = vld [vmem:[%s3 + $0x18] sm:$0xf]
        %v548 = vld [vmem:[%s3 + $0x1c] sm:$0xf]
        %v549 = vld [vmem:[%s3 + $0x20] sm:$0xf]
        %v550 = vld [vmem:[%s3 + $0x24] sm:$0xf]
        %v551 = vld [vmem:[%s3 + $0x28] sm:$0xf]
        %v552 = vld [vmem:[%s3 + $0x2c] sm:$0xf]
        %v553 = vld [vmem:[%s3 + $0x30] sm:$0xf]
        %v554 = vld [vmem:[%s3 + $0x34] sm:$0xf]
        %v555 = vld [vmem:[%s3 + $0x38] sm:$0xf]
        %v556 = vld [vmem:[%s3 + $0x3c] sm:$0xf]
        %v557 = vld [vmem:[%s4] sm:$0xff]
        %v558 = vld [vmem:[%s4 + $0x8] sm:$0xff]
        %v559 = vld [vmem:[%s4 + $0x10] sm:$0xff]
        %v560 = vld [vmem:[%s4 + $0x18] sm:$0xff]
        %v561 = vld [vmem:[%s4 + $0x20] sm:$0xff]
        %v562 = vld [vmem:[%s4 + $0x28] sm:$0xff]
        %v563 = vld [vmem:[%s4 + $0x30] sm:$0xff]
        %v564 = vld [vmem:[%s4 + $0x38] sm:$0xff]
        %v565 = vld [vmem:[%s4 + $0x40] sm:$0xff]
        %v566 = vld [vmem:[%s4 + $0x48] sm:$0xff]
        %v567 = vld [vmem:[%s4 + $0x50] sm:$0xff]
        %v568 = vld [vmem:[%s4 + $0x58] sm:$0xff]
        %v569 = vld [vmem:[%s4 + $0x60] sm:$0xff]
        %v570 = vld [vmem:[%s4 + $0x68] sm:$0xff]
        %v571 = vld [vmem:[%s4 + $0x70] sm:$0xff]
        %v572 = vld [vmem:[%s4 + $0x78] sm:$0xff]
        %574 = vset.pattern.permute.xlu0 0
        %575 = vperm.xlu0 %574, %v557
        %v576 = vpop.permute.xlu0 %575
        %579 = vset.pattern.permute.xlu0 0
        %580 = vperm.xlu0 %579, %v558
        %v581 = vpop.permute.xlu0 %580
        %584 = vset.pattern.permute.xlu0 0
        %585 = vperm.xlu0 %584, %v559
        %v586 = vpop.permute.xlu0 %585
        %589 = vset.pattern.permute.xlu0 0
        %590 = vperm.xlu0 %589, %v560
        %v591 = vpop.permute.xlu0 %590
        %594 = vset.pattern.permute.xlu0 0
        %595 = vperm.xlu0 %594, %v561
        %v596 = vpop.permute.xlu0 %595
        %599 = vset.pattern.permute.xlu0 0
        %600 = vperm.xlu0 %599, %v562
        %v601 = vpop.permute.xlu0 %600
        %604 = vset.pattern.permute.xlu0 0
        %605 = vperm.xlu0 %604, %v563
        %v606 = vpop.permute.xlu0 %605
        %609 = vset.pattern.permute.xlu0 0
        %610 = vperm.xlu0 %609, %v564
        %v611 = vpop.permute.xlu0 %610
        %614 = vset.pattern.permute.xlu0 0
        %615 = vperm.xlu0 %614, %v565
        %v616 = vpop.permute.xlu0 %615
        %619 = vset.pattern.permute.xlu0 0
        %620 = vperm.xlu0 %619, %v566
        %v621 = vpop.permute.xlu0 %620
        %624 = vset.pattern.permute.xlu0 0
        %625 = vperm.xlu0 %624, %v567
        %v626 = vpop.permute.xlu0 %625
        %629 = vset.pattern.permute.xlu0 0
        %630 = vperm.xlu0 %629, %v568
        %v631 = vpop.permute.xlu0 %630
        %634 = vset.pattern.permute.xlu0 0
        %635 = vperm.xlu0 %634, %v569
        %v636 = vpop.permute.xlu0 %635
        %639 = vset.pattern.permute.xlu0 0
        %640 = vperm.xlu0 %639, %v570
        %v641 = vpop.permute.xlu0 %640
        %644 = vset.pattern.permute.xlu0 0
        %645 = vperm.xlu0 %644, %v571
        %v646 = vpop.permute.xlu0 %645
        %649 = vset.pattern.permute.xlu0 0
        %650 = vperm.xlu0 %649, %v572
        %v651 = vpop.permute.xlu0 %650
        %v669 = vunpack.c.l.b16 %v541
        %v670 = vunpack.c.l.b16 %v542
        %v671 = vunpack.c.l.b16 %v543
        %v672 = vunpack.c.l.b16 %v544
        %v673 = vunpack.c.l.b16 %v545
        %v674 = vunpack.c.l.b16 %v546
        %v675 = vunpack.c.l.b16 %v547
        %v676 = vunpack.c.l.b16 %v548
        %v677 = vunpack.c.l.b16 %v549
        %v678 = vunpack.c.l.b16 %v550
        %v679 = vunpack.c.l.b16 %v551
        %v680 = vunpack.c.l.b16 %v552
        %v681 = vunpack.c.l.b16 %v553
        %v682 = vunpack.c.l.b16 %v554
        %v683 = vunpack.c.l.b16 %v555
        %v684 = vunpack.c.l.b16 %v556
        %v685 = vpack.c.b16 %v670, %v669
        %v686 = vpack.c.b16 %v672, %v671
        %v687 = vpack.c.b16 %v674, %v673
        %v688 = vpack.c.b16 %v676, %v675
        %v689 = vpack.c.b16 %v678, %v677
        %v690 = vpack.c.b16 %v680, %v679
        %v691 = vpack.c.b16 %v682, %v681
        %v692 = vpack.c.b16 %v684, %v683
        %vm693 = vcmask 523264
        %v695 = vsel %vm693, %v685, 0
        %v698 = vsel %vm693, %v686, 0
        %v701 = vsel %vm693, %v687, 0
        %v704 = vsel %vm693, %v688, 0
        %v707 = vsel %vm693, %v689, 0
        %v710 = vsel %vm693, %v690, 0
        %v713 = vsel %vm693, %v691, 0
        %v716 = vsel %vm693, %v692, 0
        %718 = vmatprep.subr.bf16.mxu0 0
        %719 = vmatpush1.bf16.msra.mxu0 0
        %720 = vmatprep.subr.bf16.mxu0 0
        %721 = vmatpush1.bf16.msra.mxu0 0
        %722 = vmatprep.subr.bf16.mxu0 0
        %723 = vmatpush1.bf16.msra.mxu0 0
        %724 = vmatprep.subr.bf16.mxu0 0
        %725 = vmatpush1.bf16.msra.mxu0 0
        %726 = vmatprep.subr.bf16.mxu0 0
        %727 = vmatpush1.bf16.msra.mxu0 %v504
        %728 = vmatprep.subr.bf16.mxu0 0
        %729 = vmatpush1.bf16.msra.mxu0 %v503
        %730 = vmatprep.subr.bf16.mxu0 0
        %731 = vmatpush1.bf16.msra.mxu0 %v502
        %732 = vmatprep.subr.bf16.mxu0 0
        %733 = vmatpush1.bf16.msra.mxu0 %v501
        %734 = vmatprep.subr.bf16.mxu0 0
        %735 = vmatpush2.bf16.msra.mxu0 0
        %736 = vmatprep.subr.bf16.mxu0 0
        %737 = vmatpush2.bf16.msra.mxu0 0
        %738 = vmatprep.subr.bf16.mxu0 0
        %739 = vmatpush2.bf16.msra.mxu0 0
        %740 = vmatprep.subr.bf16.mxu0 0
        %741 = vmatpush2.bf16.msra.mxu0 0
        %742 = vmatprep.subr.bf16.mxu0 0
        %743 = vmatpush2.bf16.msra.mxu0 0
        %744 = vmatprep.subr.bf16.mxu0 0
        %745 = vmatpush2.bf16.msra.mxu0 0
        %746 = vmatprep.subr.bf16.mxu0 0
        %747 = vmatpush2.bf16.msra.mxu0 0
        %748 = vmatprep.subr.bf16.mxu0 0
        %749 = vmatpush2.bf16.msra.mxu0 0
        %750 = vmatprep.mubr.bf16.mxu0 0
        %751 = vmatmul.mubr.bf16.gmra.mxu0 %v695
        %v752 = vpop.f32.mrf.mxu0
        %v753 = vadd.f32 %v576, %v752
        %v754 = vpop.f32.mrf.mxu0
        %v755 = vpop.f32.mrf.mxu0
        %v756 = vadd.f32 %v581, %v755
        %v757 = vpop.f32.mrf.mxu0
        %758 = vmatprep.mubr.bf16.mxu0 0
        %759 = vmatmul.mubr.bf16.gmra.mxu0 %v698
        %v760 = vpop.f32.mrf.mxu0
        %v761 = vadd.f32 %v586, %v760
        %v762 = vpop.f32.mrf.mxu0
        %v763 = vpop.f32.mrf.mxu0
        %v764 = vadd.f32 %v591, %v763
        %v765 = vpop.f32.mrf.mxu0
        %766 = vmatprep.mubr.bf16.mxu0 0
        %767 = vmatmul.mubr.bf16.gmra.mxu0 %v701
        %v768 = vpop.f32.mrf.mxu0
        %v769 = vadd.f32 %v596, %v768
        %v770 = vpop.f32.mrf.mxu0
        %v771 = vpop.f32.mrf.mxu0
        %v772 = vadd.f32 %v601, %v771
        %v773 = vpop.f32.mrf.mxu0
        %774 = vmatprep.mubr.bf16.mxu0 0
        %775 = vmatmul.mubr.bf16.gmra.mxu0 %v704
        %v776 = vpop.f32.mrf.mxu0
        %v777 = vadd.f32 %v606, %v776
        %v778 = vpop.f32.mrf.mxu0
        %v779 = vpop.f32.mrf.mxu0
        %v780 = vadd.f32 %v611, %v779
        %v781 = vpop.f32.mrf.mxu0
        %782 = vmatprep.mubr.bf16.mxu0 0
        %783 = vmatmul.mubr.bf16.gmra.mxu0 %v707
        %v784 = vpop.f32.mrf.mxu0
        %v785 = vadd.f32 %v616, %v784
        %v786 = vpop.f32.mrf.mxu0
        %v787 = vpop.f32.mrf.mxu0
        %v788 = vadd.f32 %v621, %v787
        %v789 = vpop.f32.mrf.mxu0
        %790 = vmatprep.mubr.bf16.mxu0 0
        %791 = vmatmul.mubr.bf16.gmra.mxu0 %v710
        %v792 = vpop.f32.mrf.mxu0
        %v793 = vadd.f32 %v626, %v792
        %v794 = vpop.f32.mrf.mxu0
        %v795 = vpop.f32.mrf.mxu0
        %v796 = vadd.f32 %v631, %v795
        %v797 = vpop.f32.mrf.mxu0
        %798 = vmatprep.mubr.bf16.mxu0 0
        %799 = vmatmul.mubr.bf16.gmra.mxu0 %v713
        %v800 = vpop.f32.mrf.mxu0
        %v801 = vadd.f32 %v636, %v800
        %v802 = vpop.f32.mrf.mxu0
        %v803 = vpop.f32.mrf.mxu0
        %v804 = vadd.f32 %v641, %v803
        %v805 = vpop.f32.mrf.mxu0
        %806 = vmatprep.mubr.bf16.mxu0 0
        %807 = vmatmul.mubr.bf16.gmra.mxu0 %v716
        %v808 = vpop.f32.mrf.mxu0
        %v809 = vadd.f32 %v646, %v808
        %v810 = vpop.f32.mrf.mxu0
        %v811 = vpop.f32.mrf.mxu0
        %v812 = vadd.f32 %v651, %v811
        %v813 = vpop.f32.mrf.mxu0
        %814 = vdwg.mxu0
        %v815 = vmax.f32 %v753, 0.0
        %v816 = vmax.f32 %v756, 0.0
        %v817 = vmax.f32 %v761, 0.0
        %v818 = vmax.f32 %v764, 0.0
        %v819 = vmax.f32 %v769, 0.0
        %v820 = vmax.f32 %v772, 0.0
        %v821 = vmax.f32 %v777, 0.0
        %v822 = vmax.f32 %v780, 0.0
        %v823 = vmax.f32 %v785, 0.0
        %v824 = vmax.f32 %v788, 0.0
        %v825 = vmax.f32 %v793, 0.0
        %v826 = vmax.f32 %v796, 0.0
        %v827 = vmax.f32 %v801, 0.0
        %v828 = vmax.f32 %v804, 0.0
        %v829 = vmax.f32 %v809, 0.0
        %v830 = vmax.f32 %v812, 0.0
        %v831 = vld [vmem:[#allocation3] sm:$0xf]
        %v832 = vld [vmem:[#allocation3 + $0x4] sm:$0xf]
        %v833 = vld [vmem:[#allocation3 + $0x8] sm:$0xf]
        %v834 = vld [vmem:[#allocation3 + $0xc] sm:$0xf]
        %v835 = vld [vmem:[#allocation3 + $0x10] sm:$0xf]
        %v836 = vld [vmem:[#allocation3 + $0x14] sm:$0xf]
        %v837 = vld [vmem:[#allocation3 + $0x18] sm:$0xf]
        %v838 = vld [vmem:[#allocation3 + $0x1c] sm:$0xf]
        %v839 = vld [vmem:[#allocation3 + $0x20] sm:$0xf]
        %v840 = vld [vmem:[#allocation3 + $0x24] sm:$0xf]
        %v841 = vld [vmem:[#allocation3 + $0x28] sm:$0xf]
        %v842 = vld [vmem:[#allocation3 + $0x2c] sm:$0xf]
        %v843 = vld [vmem:[#allocation3 + $0x30] sm:$0xf]
        %v844 = vld [vmem:[#allocation3 + $0x34] sm:$0xf]
        %v845 = vld [vmem:[#allocation3 + $0x38] sm:$0xf]
        %v846 = vld [vmem:[#allocation3 + $0x3c] sm:$0xf]
        %v847 = vld [vmem:[#allocation3 + $0x40] sm:$0xf]
        %v848 = vld [vmem:[#allocation3 + $0x44] sm:$0xf]
        %v849 = vld [vmem:[#allocation3 + $0x48] sm:$0xf]
        %v850 = vld [vmem:[#allocation3 + $0x4c] sm:$0xf]
        %v851 = vld [vmem:[#allocation3 + $0x50] sm:$0xf]
        %v852 = vld [vmem:[#allocation3 + $0x54] sm:$0xf]
        %v853 = vld [vmem:[#allocation3 + $0x58] sm:$0xf]
        %v854 = vld [vmem:[#allocation3 + $0x5c] sm:$0xf]
        %v855 = vld [vmem:[#allocation3 + $0x60] sm:$0xf]
        %v856 = vld [vmem:[#allocation3 + $0x64] sm:$0xf]
        %v857 = vld [vmem:[#allocation3 + $0x68] sm:$0xf]
        %v858 = vld [vmem:[#allocation3 + $0x6c] sm:$0xf]
        %v859 = vld [vmem:[#allocation3 + $0x70] sm:$0xf]
        %v860 = vld [vmem:[#allocation3 + $0x74] sm:$0xf]
        %v861 = vld [vmem:[#allocation3 + $0x78] sm:$0xf]
        %v862 = vld [vmem:[#allocation3 + $0x7c] sm:$0xf]
        %v863 = vld [vmem:[#allocation3 + $0x80] sm:$0xf]
        %v864 = vld [vmem:[#allocation3 + $0x84] sm:$0xf]
        %v865 = vld [vmem:[#allocation3 + $0x88] sm:$0xf]
        %v866 = vld [vmem:[#allocation3 + $0x8c] sm:$0xf]
        %v867 = vld [vmem:[#allocation3 + $0x90] sm:$0xf]
        %v868 = vld [vmem:[#allocation3 + $0x94] sm:$0xf]
        %v869 = vld [vmem:[#allocation3 + $0x98] sm:$0xf]
        %v870 = vld [vmem:[#allocation3 + $0x9c] sm:$0xf]
        %v871 = vld [vmem:[#allocation3 + $0xa0] sm:$0xf]
        %v872 = vld [vmem:[#allocation3 + $0xa4] sm:$0xf]
        %v873 = vld [vmem:[#allocation3 + $0xa8] sm:$0xf]
        %v874 = vld [vmem:[#allocation3 + $0xac] sm:$0xf]
        %v875 = vld [vmem:[#allocation3 + $0xb0] sm:$0xf]
        %v876 = vld [vmem:[#allocation3 + $0xb4] sm:$0xf]
        %v877 = vld [vmem:[#allocation3 + $0xb8] sm:$0xf]
        %v878 = vld [vmem:[#allocation3 + $0xbc] sm:$0xf]
        %v879 = vld [vmem:[#allocation3 + $0xc0] sm:$0xf]
        %v880 = vld [vmem:[#allocation3 + $0xc4] sm:$0xf]
        %v881 = vld [vmem:[#allocation3 + $0xc8] sm:$0xf]
        %v882 = vld [vmem:[#allocation3 + $0xcc] sm:$0xf]
        %v883 = vld [vmem:[#allocation3 + $0xd0] sm:$0xf]
        %v884 = vld [vmem:[#allocation3 + $0xd4] sm:$0xf]
        %v885 = vld [vmem:[#allocation3 + $0xd8] sm:$0xf]
        %v886 = vld [vmem:[#allocation3 + $0xdc] sm:$0xf]
        %v887 = vld [vmem:[#allocation3 + $0xe0] sm:$0xf]
        %v888 = vld [vmem:[#allocation3 + $0xe4] sm:$0xf]
        %v889 = vld [vmem:[#allocation3 + $0xe8] sm:$0xf]
        %v890 = vld [vmem:[#allocation3 + $0xec] sm:$0xf]
        %v891 = vld [vmem:[#allocation3 + $0xf0] sm:$0xf]
        %v892 = vld [vmem:[#allocation3 + $0xf4] sm:$0xf]
        %v893 = vld [vmem:[#allocation3 + $0xf8] sm:$0xf]
        %v894 = vld [vmem:[#allocation3 + $0xfc] sm:$0xf]
        %v895 = vld [vmem:[#allocation3 + $0x100] sm:$0xf]
        %v896 = vld [vmem:[#allocation3 + $0x104] sm:$0xf]
        %v897 = vld [vmem:[#allocation3 + $0x108] sm:$0xf]
        %v898 = vld [vmem:[#allocation3 + $0x10c] sm:$0xf]
        %v899 = vld [vmem:[#allocation3 + $0x110] sm:$0xf]
        %v900 = vld [vmem:[#allocation3 + $0x114] sm:$0xf]
        %v901 = vld [vmem:[#allocation3 + $0x118] sm:$0xf]
        %v902 = vld [vmem:[#allocation3 + $0x11c] sm:$0xf]
        %v903 = vld [vmem:[#allocation3 + $0x120] sm:$0xf]
        %v904 = vld [vmem:[#allocation3 + $0x124] sm:$0xf]
        %v905 = vld [vmem:[#allocation3 + $0x128] sm:$0xf]
        %v906 = vld [vmem:[#allocation3 + $0x12c] sm:$0xf]
        %v907 = vld [vmem:[#allocation3 + $0x130] sm:$0xf]
        %v908 = vld [vmem:[#allocation3 + $0x134] sm:$0xf]
        %v909 = vld [vmem:[#allocation3 + $0x138] sm:$0xf]
        %v910 = vld [vmem:[#allocation3 + $0x13c] sm:$0xf]
        %v911 = vld [vmem:[#allocation3 + $0x140] sm:$0xf]
        %v912 = vld [vmem:[#allocation3 + $0x144] sm:$0xf]
        %v913 = vld [vmem:[#allocation3 + $0x148] sm:$0xf]
        %v914 = vld [vmem:[#allocation3 + $0x14c] sm:$0xf]
        %v915 = vld [vmem:[#allocation3 + $0x150] sm:$0xf]
        %v916 = vld [vmem:[#allocation3 + $0x154] sm:$0xf]
        %v917 = vld [vmem:[#allocation3 + $0x158] sm:$0xf]
        %v918 = vld [vmem:[#allocation3 + $0x15c] sm:$0xf]
        %v919 = vld [vmem:[#allocation3 + $0x160] sm:$0xf]
        %v920 = vld [vmem:[#allocation3 + $0x164] sm:$0xf]
        %v921 = vld [vmem:[#allocation3 + $0x168] sm:$0xf]
        %v922 = vld [vmem:[#allocation3 + $0x16c] sm:$0xf]
        %v923 = vld [vmem:[#allocation3 + $0x170] sm:$0xf]
        %v924 = vld [vmem:[#allocation3 + $0x174] sm:$0xf]
        %v925 = vld [vmem:[#allocation3 + $0x178] sm:$0xf]
        %v926 = vld [vmem:[#allocation3 + $0x17c] sm:$0xf]
        %v927 = vld [vmem:[#allocation3 + $0x180] sm:$0xf]
        %v928 = vld [vmem:[#allocation3 + $0x184] sm:$0xf]
        %v929 = vld [vmem:[#allocation3 + $0x188] sm:$0xf]
        %v930 = vld [vmem:[#allocation3 + $0x18c] sm:$0xf]
        %v931 = vld [vmem:[#allocation3 + $0x190] sm:$0xf]
        %v932 = vld [vmem:[#allocation3 + $0x194] sm:$0xf]
        %v933 = vld [vmem:[#allocation3 + $0x198] sm:$0xf]
        %v934 = vld [vmem:[#allocation3 + $0x19c] sm:$0xf]
        %v935 = vld [vmem:[#allocation3 + $0x1a0] sm:$0xf]
        %v936 = vld [vmem:[#allocation3 + $0x1a4] sm:$0xf]
        %v937 = vld [vmem:[#allocation3 + $0x1a8] sm:$0xf]
        %v938 = vld [vmem:[#allocation3 + $0x1ac] sm:$0xf]
        %v939 = vld [vmem:[#allocation3 + $0x1b0] sm:$0xf]
        %v940 = vld [vmem:[#allocation3 + $0x1b4] sm:$0xf]
        %v941 = vld [vmem:[#allocation3 + $0x1b8] sm:$0xf]
        %v942 = vld [vmem:[#allocation3 + $0x1bc] sm:$0xf]
        %v943 = vld [vmem:[#allocation3 + $0x1c0] sm:$0xf]
        %v944 = vld [vmem:[#allocation3 + $0x1c4] sm:$0xf]
        %v945 = vld [vmem:[#allocation3 + $0x1c8] sm:$0xf]
        %v946 = vld [vmem:[#allocation3 + $0x1cc] sm:$0xf]
        %v947 = vld [vmem:[#allocation3 + $0x1d0] sm:$0xf]
        %v948 = vld [vmem:[#allocation3 + $0x1d4] sm:$0xf]
        %v949 = vld [vmem:[#allocation3 + $0x1d8] sm:$0xf]
        %v950 = vld [vmem:[#allocation3 + $0x1dc] sm:$0xf]
        %v951 = vld [vmem:[#allocation3 + $0x1e0] sm:$0xf]
        %v952 = vld [vmem:[#allocation3 + $0x1e4] sm:$0xf]
        %v953 = vld [vmem:[#allocation3 + $0x1e8] sm:$0xf]
        %v954 = vld [vmem:[#allocation3 + $0x1ec] sm:$0xf]
        %v955 = vld [vmem:[#allocation3 + $0x1f0] sm:$0xf]
        %v956 = vld [vmem:[#allocation3 + $0x1f4] sm:$0xf]
        %v957 = vld [vmem:[#allocation3 + $0x1f8] sm:$0xf]
        %v958 = vld [vmem:[#allocation3 + $0x1fc] sm:$0xf]
        %v959 = vpack.c.bf16 %v816, %v815
        %v960 = vpack.c.bf16 %v818, %v817
        %v961 = vpack.c.bf16 %v820, %v819
        %v962 = vpack.c.bf16 %v822, %v821
        %v963 = vpack.c.bf16 %v824, %v823
        %v964 = vpack.c.bf16 %v826, %v825
        %v965 = vpack.c.bf16 %v828, %v827
        %v966 = vpack.c.bf16 %v830, %v829
        %v1095 = vunpack.c.l.b16 %v831
        %v1096 = vunpack.c.l.b16 %v832
        %v1097 = vunpack.c.l.b16 %v833
        %v1098 = vunpack.c.l.b16 %v834
        %v1099 = vunpack.c.l.b16 %v835
        %v1100 = vunpack.c.l.b16 %v836
        %v1101 = vunpack.c.l.b16 %v837
        %v1102 = vunpack.c.l.b16 %v838
        %v1103 = vunpack.c.l.b16 %v839
        %v1104 = vunpack.c.l.b16 %v840
        %v1105 = vunpack.c.l.b16 %v841
        %v1106 = vunpack.c.l.b16 %v842
        %v1107 = vunpack.c.l.b16 %v843
        %v1108 = vunpack.c.l.b16 %v844
        %v1109 = vunpack.c.l.b16 %v845
        %v1110 = vunpack.c.l.b16 %v846
        %v1111 = vunpack.c.l.b16 %v847
        %v1112 = vunpack.c.l.b16 %v848
        %v1113 = vunpack.c.l.b16 %v849
        %v1114 = vunpack.c.l.b16 %v850
        %v1115 = vunpack.c.l.b16 %v851
        %v1116 = vunpack.c.l.b16 %v852
        %v1117 = vunpack.c.l.b16 %v853
        %v1118 = vunpack.c.l.b16 %v854
        %v1119 = vunpack.c.l.b16 %v855
        %v1120 = vunpack.c.l.b16 %v856
        %v1121 = vunpack.c.l.b16 %v857
        %v1122 = vunpack.c.l.b16 %v858
        %v1123 = vunpack.c.l.b16 %v859
        %v1124 = vunpack.c.l.b16 %v860
        %v1125 = vunpack.c.l.b16 %v861
        %v1126 = vunpack.c.l.b16 %v862
        %v1127 = vunpack.c.l.b16 %v863
        %v1128 = vunpack.c.l.b16 %v864
        %v1129 = vunpack.c.l.b16 %v865
        %v1130 = vunpack.c.l.b16 %v866
        %v1131 = vunpack.c.l.b16 %v867
        %v1132 = vunpack.c.l.b16 %v868
        %v1133 = vunpack.c.l.b16 %v869
        %v1134 = vunpack.c.l.b16 %v870
        %v1135 = vunpack.c.l.b16 %v871
        %v1136 = vunpack.c.l.b16 %v872
        %v1137 = vunpack.c.l.b16 %v873
        %v1138 = vunpack.c.l.b16 %v874
        %v1139 = vunpack.c.l.b16 %v875
        %v1140 = vunpack.c.l.b16 %v876
        %v1141 = vunpack.c.l.b16 %v877
        %v1142 = vunpack.c.l.b16 %v878
        %v1143 = vunpack.c.l.b16 %v879
        %v1144 = vunpack.c.l.b16 %v880
        %v1145 = vunpack.c.l.b16 %v881
        %v1146 = vunpack.c.l.b16 %v882
        %v1147 = vunpack.c.l.b16 %v883
        %v1148 = vunpack.c.l.b16 %v884
        %v1149 = vunpack.c.l.b16 %v885
        %v1150 = vunpack.c.l.b16 %v886
        %v1151 = vunpack.c.l.b16 %v887
        %v1152 = vunpack.c.l.b16 %v888
        %v1153 = vunpack.c.l.b16 %v889
        %v1154 = vunpack.c.l.b16 %v890
        %v1155 = vunpack.c.l.b16 %v891
        %v1156 = vunpack.c.l.b16 %v892
        %v1157 = vunpack.c.l.b16 %v893
        %v1158 = vunpack.c.l.b16 %v894
        %v1159 = vunpack.c.l.b16 %v895
        %v1160 = vunpack.c.l.b16 %v896
        %v1161 = vunpack.c.l.b16 %v897
        %v1162 = vunpack.c.l.b16 %v898
        %v1163 = vunpack.c.l.b16 %v899
        %v1164 = vunpack.c.l.b16 %v900
        %v1165 = vunpack.c.l.b16 %v901
        %v1166 = vunpack.c.l.b16 %v902
        %v1167 = vunpack.c.l.b16 %v903
        %v1168 = vunpack.c.l.b16 %v904
        %v1169 = vunpack.c.l.b16 %v905
        %v1170 = vunpack.c.l.b16 %v906
        %v1171 = vunpack.c.l.b16 %v907
        %v1172 = vunpack.c.l.b16 %v908
        %v1173 = vunpack.c.l.b16 %v909
        %v1174 = vunpack.c.l.b16 %v910
        %v1175 = vunpack.c.l.b16 %v911
        %v1176 = vunpack.c.l.b16 %v912
        %v1177 = vunpack.c.l.b16 %v913
        %v1178 = vunpack.c.l.b16 %v914
        %v1179 = vunpack.c.l.b16 %v915
        %v1180 = vunpack.c.l.b16 %v916
        %v1181 = vunpack.c.l.b16 %v917
        %v1182 = vunpack.c.l.b16 %v918
        %v1183 = vunpack.c.l.b16 %v919
        %v1184 = vunpack.c.l.b16 %v920
        %v1185 = vunpack.c.l.b16 %v921
        %v1186 = vunpack.c.l.b16 %v922
        %v1187 = vunpack.c.l.b16 %v923
        %v1188 = vunpack.c.l.b16 %v924
        %v1189 = vunpack.c.l.b16 %v925
        %v1190 = vunpack.c.l.b16 %v926
        %v1191 = vunpack.c.l.b16 %v927
        %v1192 = vunpack.c.l.b16 %v928
        %v1193 = vunpack.c.l.b16 %v929
        %v1194 = vunpack.c.l.b16 %v930
        %v1195 = vunpack.c.l.b16 %v931
        %v1196 = vunpack.c.l.b16 %v932
        %v1197 = vunpack.c.l.b16 %v933
        %v1198 = vunpack.c.l.b16 %v934
        %v1199 = vunpack.c.l.b16 %v935
        %v1200 = vunpack.c.l.b16 %v936
        %v1201 = vunpack.c.l.b16 %v937
        %v1202 = vunpack.c.l.b16 %v938
        %v1203 = vunpack.c.l.b16 %v939
        %v1204 = vunpack.c.l.b16 %v940
        %v1205 = vunpack.c.l.b16 %v941
        %v1206 = vunpack.c.l.b16 %v942
        %v1207 = vunpack.c.l.b16 %v943
        %v1208 = vunpack.c.l.b16 %v944
        %v1209 = vunpack.c.l.b16 %v945
        %v1210 = vunpack.c.l.b16 %v946
        %v1211 = vunpack.c.l.b16 %v947
        %v1212 = vunpack.c.l.b16 %v948
        %v1213 = vunpack.c.l.b16 %v949
        %v1214 = vunpack.c.l.b16 %v950
        %v1215 = vunpack.c.l.b16 %v951
        %v1216 = vunpack.c.l.b16 %v952
        %v1217 = vunpack.c.l.b16 %v953
        %v1218 = vunpack.c.l.b16 %v954
        %v1219 = vunpack.c.l.b16 %v955
        %v1220 = vunpack.c.l.b16 %v956
        %v1221 = vunpack.c.l.b16 %v957
        %v1222 = vunpack.c.l.b16 %v958
        %v1223 = vpack.c.b16 %v1096, %v1095
        %v1224 = vpack.c.b16 %v1098, %v1097
        %v1225 = vpack.c.b16 %v1100, %v1099
        %v1226 = vpack.c.b16 %v1102, %v1101
        %v1227 = vpack.c.b16 %v1104, %v1103
        %v1228 = vpack.c.b16 %v1106, %v1105
        %v1229 = vpack.c.b16 %v1108, %v1107
        %v1230 = vpack.c.b16 %v1110, %v1109
        %v1231 = vpack.c.b16 %v1112, %v1111
        %v1232 = vpack.c.b16 %v1114, %v1113
        %v1233 = vpack.c.b16 %v1116, %v1115
        %v1234 = vpack.c.b16 %v1118, %v1117
        %v1235 = vpack.c.b16 %v1120, %v1119
        %v1236 = vpack.c.b16 %v1122, %v1121
        %v1237 = vpack.c.b16 %v1124, %v1123
        %v1238 = vpack.c.b16 %v1126, %v1125
        %v1239 = vpack.c.b16 %v1128, %v1127
        %v1240 = vpack.c.b16 %v1130, %v1129
        %v1241 = vpack.c.b16 %v1132, %v1131
        %v1242 = vpack.c.b16 %v1134, %v1133
        %v1243 = vpack.c.b16 %v1136, %v1135
        %v1244 = vpack.c.b16 %v1138, %v1137
        %v1245 = vpack.c.b16 %v1140, %v1139
        %v1246 = vpack.c.b16 %v1142, %v1141
        %v1247 = vpack.c.b16 %v1144, %v1143
        %v1248 = vpack.c.b16 %v1146, %v1145
        %v1249 = vpack.c.b16 %v1148, %v1147
        %v1250 = vpack.c.b16 %v1150, %v1149
        %v1251 = vpack.c.b16 %v1152, %v1151
        %v1252 = vpack.c.b16 %v1154, %v1153
        %v1253 = vpack.c.b16 %v1156, %v1155
        %v1254 = vpack.c.b16 %v1158, %v1157
        %v1255 = vpack.c.b16 %v1160, %v1159
        %v1256 = vpack.c.b16 %v1162, %v1161
        %v1257 = vpack.c.b16 %v1164, %v1163
        %v1258 = vpack.c.b16 %v1166, %v1165
        %v1259 = vpack.c.b16 %v1168, %v1167
        %v1260 = vpack.c.b16 %v1170, %v1169
        %v1261 = vpack.c.b16 %v1172, %v1171
        %v1262 = vpack.c.b16 %v1174, %v1173
        %v1263 = vpack.c.b16 %v1176, %v1175
        %v1264 = vpack.c.b16 %v1178, %v1177
        %v1265 = vpack.c.b16 %v1180, %v1179
        %v1266 = vpack.c.b16 %v1182, %v1181
        %v1267 = vpack.c.b16 %v1184, %v1183
        %v1268 = vpack.c.b16 %v1186, %v1185
        %v1269 = vpack.c.b16 %v1188, %v1187
        %v1270 = vpack.c.b16 %v1190, %v1189
        %v1271 = vpack.c.b16 %v1192, %v1191
        %v1272 = vpack.c.b16 %v1194, %v1193
        %v1273 = vpack.c.b16 %v1196, %v1195
        %v1274 = vpack.c.b16 %v1198, %v1197
        %v1275 = vpack.c.b16 %v1200, %v1199
        %v1276 = vpack.c.b16 %v1202, %v1201
        %v1277 = vpack.c.b16 %v1204, %v1203
        %v1278 = vpack.c.b16 %v1206, %v1205
        %v1279 = vpack.c.b16 %v1208, %v1207
        %v1280 = vpack.c.b16 %v1210, %v1209
        %v1281 = vpack.c.b16 %v1212, %v1211
        %v1282 = vpack.c.b16 %v1214, %v1213
        %v1283 = vpack.c.b16 %v1216, %v1215
        %v1284 = vpack.c.b16 %v1218, %v1217
        %v1285 = vpack.c.b16 %v1220, %v1219
        %v1286 = vpack.c.b16 %v1222, %v1221
        %1351 = vmatprep.subr.bf16.mxu0 0
        %1352 = vmatpush1.bf16.msra.mxu0 %v966
        %1353 = vmatprep.subr.bf16.mxu0 0
        %1354 = vmatpush1.bf16.msra.mxu0 %v965
        %1355 = vmatprep.subr.bf16.mxu0 0
        %1356 = vmatpush1.bf16.msra.mxu0 %v964
        %1357 = vmatprep.subr.bf16.mxu0 0
        %1358 = vmatpush1.bf16.msra.mxu0 %v963
        %1359 = vmatprep.subr.bf16.mxu0 0
        %1360 = vmatpush1.bf16.msra.mxu0 %v962
        %1361 = vmatprep.subr.bf16.mxu0 0
        %1362 = vmatpush1.bf16.msra.mxu0 %v961
        %1363 = vmatprep.subr.bf16.mxu0 0
        %1364 = vmatpush1.bf16.msra.mxu0 %v960
        %1365 = vmatprep.subr.bf16.mxu0 0
        %1366 = vmatpush1.bf16.msra.mxu0 %v959
        %1367 = vmatprep.subr.bf16.mxu0 0
        %1368 = vmatpush2.bf16.msra.mxu0 0
        %1369 = vmatprep.subr.bf16.mxu0 0
        %1370 = vmatpush2.bf16.msra.mxu0 0
        %1371 = vmatprep.subr.bf16.mxu0 0
        %1372 = vmatpush2.bf16.msra.mxu0 0
        %1373 = vmatprep.subr.bf16.mxu0 0
        %1374 = vmatpush2.bf16.msra.mxu0 0
        %1375 = vmatprep.subr.bf16.mxu0 0
        %1376 = vmatpush2.bf16.msra.mxu0 0
        %1377 = vmatprep.subr.bf16.mxu0 0
        %1378 = vmatpush2.bf16.msra.mxu0 0
        %1379 = vmatprep.subr.bf16.mxu0 0
        %1380 = vmatpush2.bf16.msra.mxu0 0
        %1381 = vmatprep.subr.bf16.mxu0 0
        %1382 = vmatpush2.bf16.msra.mxu0 0
        %1383 = vmatprep.mubr.bf16.mxu0 0
        %1384 = vmatmul.mubr.bf16.gmra.mxu0 %v1223
        %v1385 = vpop.f32.mrf.mxu0
        %v1386 = vadd.f32 0.0, %v1385
        %v1387 = vpop.f32.mrf.mxu0
        %v1388 = vpop.f32.mrf.mxu0
        %v1389 = vadd.f32 0.0, %v1388
        %v1390 = vpop.f32.mrf.mxu0
        %1391 = vmatprep.mubr.bf16.mxu0 0
        %1392 = vmatmul.mubr.bf16.gmra.mxu0 %v1224
        %v1393 = vpop.f32.mrf.mxu0
        %v1394 = vadd.f32 0.0, %v1393
        %v1395 = vpop.f32.mrf.mxu0
        %v1396 = vpop.f32.mrf.mxu0
        %v1397 = vadd.f32 0.0, %v1396
        %v1398 = vpop.f32.mrf.mxu0
        %1399 = vmatprep.mubr.bf16.mxu0 0
        %1400 = vmatmul.mubr.bf16.gmra.mxu0 %v1225
        %v1401 = vpop.f32.mrf.mxu0
        %v1402 = vadd.f32 0.0, %v1401
        %v1403 = vpop.f32.mrf.mxu0
        %v1404 = vpop.f32.mrf.mxu0
        %v1405 = vadd.f32 0.0, %v1404
        %v1406 = vpop.f32.mrf.mxu0
        %1407 = vmatprep.mubr.bf16.mxu0 0
        %1408 = vmatmul.mubr.bf16.gmra.mxu0 %v1226
        %v1409 = vpop.f32.mrf.mxu0
        %v1410 = vadd.f32 0.0, %v1409
        %v1411 = vpop.f32.mrf.mxu0
        %v1412 = vpop.f32.mrf.mxu0
        %v1413 = vadd.f32 0.0, %v1412
        %v1414 = vpop.f32.mrf.mxu0
        %1415 = vmatprep.mubr.bf16.mxu0 0
        %1416 = vmatmul.mubr.bf16.gmra.mxu0 %v1227
        %v1417 = vpop.f32.mrf.mxu0
        %v1418 = vadd.f32 0.0, %v1417
        %v1419 = vpop.f32.mrf.mxu0
        %v1420 = vpop.f32.mrf.mxu0
        %v1421 = vadd.f32 0.0, %v1420
        %v1422 = vpop.f32.mrf.mxu0
        %1423 = vmatprep.mubr.bf16.mxu0 0
        %1424 = vmatmul.mubr.bf16.gmra.mxu0 %v1228
        %v1425 = vpop.f32.mrf.mxu0
        %v1426 = vadd.f32 0.0, %v1425
        %v1427 = vpop.f32.mrf.mxu0
        %v1428 = vpop.f32.mrf.mxu0
        %v1429 = vadd.f32 0.0, %v1428
        %v1430 = vpop.f32.mrf.mxu0
        %1431 = vmatprep.mubr.bf16.mxu0 0
        %1432 = vmatmul.mubr.bf16.gmra.mxu0 %v1229
        %v1433 = vpop.f32.mrf.mxu0
        %v1434 = vadd.f32 0.0, %v1433
        %v1435 = vpop.f32.mrf.mxu0
        %v1436 = vpop.f32.mrf.mxu0
        %v1437 = vadd.f32 0.0, %v1436
        %v1438 = vpop.f32.mrf.mxu0
        %1439 = vmatprep.mubr.bf16.mxu0 0
        %1440 = vmatmul.mubr.bf16.gmra.mxu0 %v1230
        %v1441 = vpop.f32.mrf.mxu0
        %v1442 = vadd.f32 0.0, %v1441
        %v1443 = vpop.f32.mrf.mxu0
        %v1444 = vpop.f32.mrf.mxu0
        %v1445 = vadd.f32 0.0, %v1444
        %v1446 = vpop.f32.mrf.mxu0
        %1447 = vmatprep.mubr.bf16.mxu0 0
        %1448 = vmatmul.mubr.bf16.gmra.mxu0 %v1231
        %v1449 = vpop.f32.mrf.mxu0
        %v1450 = vadd.f32 0.0, %v1449
        %v1451 = vpop.f32.mrf.mxu0
        %v1452 = vpop.f32.mrf.mxu0
        %v1453 = vadd.f32 0.0, %v1452
        %v1454 = vpop.f32.mrf.mxu0
        %1455 = vmatprep.mubr.bf16.mxu0 0
        %1456 = vmatmul.mubr.bf16.gmra.mxu0 %v1232
        %v1457 = vpop.f32.mrf.mxu0
        %v1458 = vadd.f32 0.0, %v1457
        %v1459 = vpop.f32.mrf.mxu0
        %v1460 = vpop.f32.mrf.mxu0
        %v1461 = vadd.f32 0.0, %v1460
        %v1462 = vpop.f32.mrf.mxu0
        %1463 = vmatprep.mubr.bf16.mxu0 0
        %1464 = vmatmul.mubr.bf16.gmra.mxu0 %v1233
        %v1465 = vpop.f32.mrf.mxu0
        %v1466 = vadd.f32 0.0, %v1465
        %v1467 = vpop.f32.mrf.mxu0
        %v1468 = vpop.f32.mrf.mxu0
        %v1469 = vadd.f32 0.0, %v1468
        %v1470 = vpop.f32.mrf.mxu0
        %1471 = vmatprep.mubr.bf16.mxu0 0
        %1472 = vmatmul.mubr.bf16.gmra.mxu0 %v1234
        %v1473 = vpop.f32.mrf.mxu0
        %v1474 = vadd.f32 0.0, %v1473
        %v1475 = vpop.f32.mrf.mxu0
        %v1476 = vpop.f32.mrf.mxu0
        %v1477 = vadd.f32 0.0, %v1476
        %v1478 = vpop.f32.mrf.mxu0
        %1479 = vmatprep.mubr.bf16.mxu0 0
        %1480 = vmatmul.mubr.bf16.gmra.mxu0 %v1235
        %v1481 = vpop.f32.mrf.mxu0
        %v1482 = vadd.f32 0.0, %v1481
        %v1483 = vpop.f32.mrf.mxu0
        %v1484 = vpop.f32.mrf.mxu0
        %v1485 = vadd.f32 0.0, %v1484
        %v1486 = vpop.f32.mrf.mxu0
        %1487 = vmatprep.mubr.bf16.mxu0 0
        %1488 = vmatmul.mubr.bf16.gmra.mxu0 %v1236
        %v1489 = vpop.f32.mrf.mxu0
        %v1490 = vadd.f32 0.0, %v1489
        %v1491 = vpop.f32.mrf.mxu0
        %v1492 = vpop.f32.mrf.mxu0
        %v1493 = vadd.f32 0.0, %v1492
        %v1494 = vpop.f32.mrf.mxu0
        %1495 = vmatprep.mubr.bf16.mxu0 0
        %1496 = vmatmul.mubr.bf16.gmra.mxu0 %v1237
        %v1497 = vpop.f32.mrf.mxu0
        %v1498 = vadd.f32 0.0, %v1497
        %v1499 = vpop.f32.mrf.mxu0
        %v1500 = vpop.f32.mrf.mxu0
        %v1501 = vadd.f32 0.0, %v1500
        %v1502 = vpop.f32.mrf.mxu0
        %1503 = vmatprep.mubr.bf16.mxu0 0
        %1504 = vmatmul.mubr.bf16.gmra.mxu0 %v1238
        %v1505 = vpop.f32.mrf.mxu0
        %v1506 = vadd.f32 0.0, %v1505
        %v1507 = vpop.f32.mrf.mxu0
        %v1508 = vpop.f32.mrf.mxu0
        %v1509 = vadd.f32 0.0, %v1508
        %v1510 = vpop.f32.mrf.mxu0
        %1511 = vmatprep.mubr.bf16.mxu0 0
        %1512 = vmatmul.mubr.bf16.gmra.mxu0 %v1239
        %v1513 = vpop.f32.mrf.mxu0
        %v1514 = vadd.f32 0.0, %v1513
        %v1515 = vpop.f32.mrf.mxu0
        %v1516 = vpop.f32.mrf.mxu0
        %v1517 = vadd.f32 0.0, %v1516
        %v1518 = vpop.f32.mrf.mxu0
        %1519 = vmatprep.mubr.bf16.mxu0 0
        %1520 = vmatmul.mubr.bf16.gmra.mxu0 %v1240
        %v1521 = vpop.f32.mrf.mxu0
        %v1522 = vadd.f32 0.0, %v1521
        %v1523 = vpop.f32.mrf.mxu0
        %v1524 = vpop.f32.mrf.mxu0
        %v1525 = vadd.f32 0.0, %v1524
        %v1526 = vpop.f32.mrf.mxu0
        %1527 = vmatprep.mubr.bf16.mxu0 0
        %1528 = vmatmul.mubr.bf16.gmra.mxu0 %v1241
        %v1529 = vpop.f32.mrf.mxu0
        %v1530 = vadd.f32 0.0, %v1529
        %v1531 = vpop.f32.mrf.mxu0
        %v1532 = vpop.f32.mrf.mxu0
        %v1533 = vadd.f32 0.0, %v1532
        %v1534 = vpop.f32.mrf.mxu0
        %1535 = vmatprep.mubr.bf16.mxu0 0
        %1536 = vmatmul.mubr.bf16.gmra.mxu0 %v1242
        %v1537 = vpop.f32.mrf.mxu0
        %v1538 = vadd.f32 0.0, %v1537
        %v1539 = vpop.f32.mrf.mxu0
        %v1540 = vpop.f32.mrf.mxu0
        %v1541 = vadd.f32 0.0, %v1540
        %v1542 = vpop.f32.mrf.mxu0
        %1543 = vmatprep.mubr.bf16.mxu0 0
        %1544 = vmatmul.mubr.bf16.gmra.mxu0 %v1243
        %v1545 = vpop.f32.mrf.mxu0
        %v1546 = vadd.f32 0.0, %v1545
        %v1547 = vpop.f32.mrf.mxu0
        %v1548 = vpop.f32.mrf.mxu0
        %v1549 = vadd.f32 0.0, %v1548
        %v1550 = vpop.f32.mrf.mxu0
        %1551 = vmatprep.mubr.bf16.mxu0 0
        %1552 = vmatmul.mubr.bf16.gmra.mxu0 %v1244
        %v1553 = vpop.f32.mrf.mxu0
        %v1554 = vadd.f32 0.0, %v1553
        %v1555 = vpop.f32.mrf.mxu0
        %v1556 = vpop.f32.mrf.mxu0
        %v1557 = vadd.f32 0.0, %v1556
        %v1558 = vpop.f32.mrf.mxu0
        %1559 = vmatprep.mubr.bf16.mxu0 0
        %1560 = vmatmul.mubr.bf16.gmra.mxu0 %v1245
        %v1561 = vpop.f32.mrf.mxu0
        %v1562 = vadd.f32 0.0, %v1561
        %v1563 = vpop.f32.mrf.mxu0
        %v1564 = vpop.f32.mrf.mxu0
        %v1565 = vadd.f32 0.0, %v1564
        %v1566 = vpop.f32.mrf.mxu0
        %1567 = vmatprep.mubr.bf16.mxu0 0
        %1568 = vmatmul.mubr.bf16.gmra.mxu0 %v1246
        %v1569 = vpop.f32.mrf.mxu0
        %v1570 = vadd.f32 0.0, %v1569
        %v1571 = vpop.f32.mrf.mxu0
        %v1572 = vpop.f32.mrf.mxu0
        %v1573 = vadd.f32 0.0, %v1572
        %v1574 = vpop.f32.mrf.mxu0
        %1575 = vmatprep.mubr.bf16.mxu0 0
        %1576 = vmatmul.mubr.bf16.gmra.mxu0 %v1247
        %v1577 = vpop.f32.mrf.mxu0
        %v1578 = vadd.f32 0.0, %v1577
        %v1579 = vpop.f32.mrf.mxu0
        %v1580 = vpop.f32.mrf.mxu0
        %v1581 = vadd.f32 0.0, %v1580
        %v1582 = vpop.f32.mrf.mxu0
        %1583 = vmatprep.mubr.bf16.mxu0 0
        %1584 = vmatmul.mubr.bf16.gmra.mxu0 %v1248
        %v1585 = vpop.f32.mrf.mxu0
        %v1586 = vadd.f32 0.0, %v1585
        %v1587 = vpop.f32.mrf.mxu0
        %v1588 = vpop.f32.mrf.mxu0
        %v1589 = vadd.f32 0.0, %v1588
        %v1590 = vpop.f32.mrf.mxu0
        %1591 = vmatprep.mubr.bf16.mxu0 0
        %1592 = vmatmul.mubr.bf16.gmra.mxu0 %v1249
        %v1593 = vpop.f32.mrf.mxu0
        %v1594 = vadd.f32 0.0, %v1593
        %v1595 = vpop.f32.mrf.mxu0
        %v1596 = vpop.f32.mrf.mxu0
        %v1597 = vadd.f32 0.0, %v1596
        %v1598 = vpop.f32.mrf.mxu0
        %1599 = vmatprep.mubr.bf16.mxu0 0
        %1600 = vmatmul.mubr.bf16.gmra.mxu0 %v1250
        %v1601 = vpop.f32.mrf.mxu0
        %v1602 = vadd.f32 0.0, %v1601
        %v1603 = vpop.f32.mrf.mxu0
        %v1604 = vpop.f32.mrf.mxu0
        %v1605 = vadd.f32 0.0, %v1604
        %v1606 = vpop.f32.mrf.mxu0
        %1607 = vmatprep.mubr.bf16.mxu0 0
        %1608 = vmatmul.mubr.bf16.gmra.mxu0 %v1251
        %v1609 = vpop.f32.mrf.mxu0
        %v1610 = vadd.f32 0.0, %v1609
        %v1611 = vpop.f32.mrf.mxu0
        %v1612 = vpop.f32.mrf.mxu0
        %v1613 = vadd.f32 0.0, %v1612
        %v1614 = vpop.f32.mrf.mxu0
        %1615 = vmatprep.mubr.bf16.mxu0 0
        %1616 = vmatmul.mubr.bf16.gmra.mxu0 %v1252
        %v1617 = vpop.f32.mrf.mxu0
        %v1618 = vadd.f32 0.0, %v1617
        %v1619 = vpop.f32.mrf.mxu0
        %v1620 = vpop.f32.mrf.mxu0
        %v1621 = vadd.f32 0.0, %v1620
        %v1622 = vpop.f32.mrf.mxu0
        %1623 = vmatprep.mubr.bf16.mxu0 0
        %1624 = vmatmul.mubr.bf16.gmra.mxu0 %v1253
        %v1625 = vpop.f32.mrf.mxu0
        %v1626 = vadd.f32 0.0, %v1625
        %v1627 = vpop.f32.mrf.mxu0
        %v1628 = vpop.f32.mrf.mxu0
        %v1629 = vadd.f32 0.0, %v1628
        %v1630 = vpop.f32.mrf.mxu0
        %1631 = vmatprep.mubr.bf16.mxu0 0
        %1632 = vmatmul.mubr.bf16.gmra.mxu0 %v1254
        %v1633 = vpop.f32.mrf.mxu0
        %v1634 = vadd.f32 0.0, %v1633
        %v1635 = vpop.f32.mrf.mxu0
        %v1636 = vpop.f32.mrf.mxu0
        %v1637 = vadd.f32 0.0, %v1636
        %v1638 = vpop.f32.mrf.mxu0
        %1639 = vmatprep.mubr.bf16.mxu0 0
        %1640 = vmatmul.mubr.bf16.gmra.mxu0 %v1255
        %v1641 = vpop.f32.mrf.mxu0
        %v1642 = vadd.f32 0.0, %v1641
        %v1643 = vpop.f32.mrf.mxu0
        %v1644 = vpop.f32.mrf.mxu0
        %v1645 = vadd.f32 0.0, %v1644
        %v1646 = vpop.f32.mrf.mxu0
        %1647 = vmatprep.mubr.bf16.mxu0 0
        %1648 = vmatmul.mubr.bf16.gmra.mxu0 %v1256
        %v1649 = vpop.f32.mrf.mxu0
        %v1650 = vadd.f32 0.0, %v1649
        %v1651 = vpop.f32.mrf.mxu0
        %v1652 = vpop.f32.mrf.mxu0
        %v1653 = vadd.f32 0.0, %v1652
        %v1654 = vpop.f32.mrf.mxu0
        %1655 = vmatprep.mubr.bf16.mxu0 0
        %1656 = vmatmul.mubr.bf16.gmra.mxu0 %v1257
        %v1657 = vpop.f32.mrf.mxu0
        %v1658 = vadd.f32 0.0, %v1657
        %v1659 = vpop.f32.mrf.mxu0
        %v1660 = vpop.f32.mrf.mxu0
        %v1661 = vadd.f32 0.0, %v1660
        %v1662 = vpop.f32.mrf.mxu0
        %1663 = vmatprep.mubr.bf16.mxu0 0
        %1664 = vmatmul.mubr.bf16.gmra.mxu0 %v1258
        %v1665 = vpop.f32.mrf.mxu0
        %v1666 = vadd.f32 0.0, %v1665
        %v1667 = vpop.f32.mrf.mxu0
        %v1668 = vpop.f32.mrf.mxu0
        %v1669 = vadd.f32 0.0, %v1668
        %v1670 = vpop.f32.mrf.mxu0
        %1671 = vmatprep.mubr.bf16.mxu0 0
        %1672 = vmatmul.mubr.bf16.gmra.mxu0 %v1259
        %v1673 = vpop.f32.mrf.mxu0
        %v1674 = vadd.f32 0.0, %v1673
        %v1675 = vpop.f32.mrf.mxu0
        %v1676 = vpop.f32.mrf.mxu0
        %v1677 = vadd.f32 0.0, %v1676
        %v1678 = vpop.f32.mrf.mxu0
        %1679 = vmatprep.mubr.bf16.mxu0 0
        %1680 = vmatmul.mubr.bf16.gmra.mxu0 %v1260
        %v1681 = vpop.f32.mrf.mxu0
        %v1682 = vadd.f32 0.0, %v1681
        %v1683 = vpop.f32.mrf.mxu0
        %v1684 = vpop.f32.mrf.mxu0
        %v1685 = vadd.f32 0.0, %v1684
        %v1686 = vpop.f32.mrf.mxu0
        %1687 = vmatprep.mubr.bf16.mxu0 0
        %1688 = vmatmul.mubr.bf16.gmra.mxu0 %v1261
        %v1689 = vpop.f32.mrf.mxu0
        %v1690 = vadd.f32 0.0, %v1689
        %v1691 = vpop.f32.mrf.mxu0
        %v1692 = vpop.f32.mrf.mxu0
        %v1693 = vadd.f32 0.0, %v1692
        %v1694 = vpop.f32.mrf.mxu0
        %1695 = vmatprep.mubr.bf16.mxu0 0
        %1696 = vmatmul.mubr.bf16.gmra.mxu0 %v1262
        %v1697 = vpop.f32.mrf.mxu0
        %v1698 = vadd.f32 0.0, %v1697
        %v1699 = vpop.f32.mrf.mxu0
        %v1700 = vpop.f32.mrf.mxu0
        %v1701 = vadd.f32 0.0, %v1700
        %v1702 = vpop.f32.mrf.mxu0
        %1703 = vmatprep.mubr.bf16.mxu0 0
        %1704 = vmatmul.mubr.bf16.gmra.mxu0 %v1263
        %v1705 = vpop.f32.mrf.mxu0
        %v1706 = vadd.f32 0.0, %v1705
        %v1707 = vpop.f32.mrf.mxu0
        %v1708 = vpop.f32.mrf.mxu0
        %v1709 = vadd.f32 0.0, %v1708
        %v1710 = vpop.f32.mrf.mxu0
        %1711 = vmatprep.mubr.bf16.mxu0 0
        %1712 = vmatmul.mubr.bf16.gmra.mxu0 %v1264
        %v1713 = vpop.f32.mrf.mxu0
        %v1714 = vadd.f32 0.0, %v1713
        %v1715 = vpop.f32.mrf.mxu0
        %v1716 = vpop.f32.mrf.mxu0
        %v1717 = vadd.f32 0.0, %v1716
        %v1718 = vpop.f32.mrf.mxu0
        %1719 = vmatprep.mubr.bf16.mxu0 0
        %1720 = vmatmul.mubr.bf16.gmra.mxu0 %v1265
        %v1721 = vpop.f32.mrf.mxu0
        %v1722 = vadd.f32 0.0, %v1721
        %v1723 = vpop.f32.mrf.mxu0
        %v1724 = vpop.f32.mrf.mxu0
        %v1725 = vadd.f32 0.0, %v1724
        %v1726 = vpop.f32.mrf.mxu0
        %1727 = vmatprep.mubr.bf16.mxu0 0
        %1728 = vmatmul.mubr.bf16.gmra.mxu0 %v1266
        %v1729 = vpop.f32.mrf.mxu0
        %v1730 = vadd.f32 0.0, %v1729
        %v1731 = vpop.f32.mrf.mxu0
        %v1732 = vpop.f32.mrf.mxu0
        %v1733 = vadd.f32 0.0, %v1732
        %v1734 = vpop.f32.mrf.mxu0
        %1735 = vmatprep.mubr.bf16.mxu0 0
        %1736 = vmatmul.mubr.bf16.gmra.mxu0 %v1267
        %v1737 = vpop.f32.mrf.mxu0
        %v1738 = vadd.f32 0.0, %v1737
        %v1739 = vpop.f32.mrf.mxu0
        %v1740 = vpop.f32.mrf.mxu0
        %v1741 = vadd.f32 0.0, %v1740
        %v1742 = vpop.f32.mrf.mxu0
        %1743 = vmatprep.mubr.bf16.mxu0 0
        %1744 = vmatmul.mubr.bf16.gmra.mxu0 %v1268
        %v1745 = vpop.f32.mrf.mxu0
        %v1746 = vadd.f32 0.0, %v1745
        %v1747 = vpop.f32.mrf.mxu0
        %v1748 = vpop.f32.mrf.mxu0
        %v1749 = vadd.f32 0.0, %v1748
        %v1750 = vpop.f32.mrf.mxu0
        %1751 = vmatprep.mubr.bf16.mxu0 0
        %1752 = vmatmul.mubr.bf16.gmra.mxu0 %v1269
        %v1753 = vpop.f32.mrf.mxu0
        %v1754 = vadd.f32 0.0, %v1753
        %v1755 = vpop.f32.mrf.mxu0
        %v1756 = vpop.f32.mrf.mxu0
        %v1757 = vadd.f32 0.0, %v1756
        %v1758 = vpop.f32.mrf.mxu0
        %1759 = vmatprep.mubr.bf16.mxu0 0
        %1760 = vmatmul.mubr.bf16.gmra.mxu0 %v1270
        %v1761 = vpop.f32.mrf.mxu0
        %v1762 = vadd.f32 0.0, %v1761
        %v1763 = vpop.f32.mrf.mxu0
        %v1764 = vpop.f32.mrf.mxu0
        %v1765 = vadd.f32 0.0, %v1764
        %v1766 = vpop.f32.mrf.mxu0
        %1767 = vmatprep.mubr.bf16.mxu0 0
        %1768 = vmatmul.mubr.bf16.gmra.mxu0 %v1271
        %v1769 = vpop.f32.mrf.mxu0
        %v1770 = vadd.f32 0.0, %v1769
        %v1771 = vpop.f32.mrf.mxu0
        %v1772 = vpop.f32.mrf.mxu0
        %v1773 = vadd.f32 0.0, %v1772
        %v1774 = vpop.f32.mrf.mxu0
        %1775 = vmatprep.mubr.bf16.mxu0 0
        %1776 = vmatmul.mubr.bf16.gmra.mxu0 %v1272
        %v1777 = vpop.f32.mrf.mxu0
        %v1778 = vadd.f32 0.0, %v1777
        %v1779 = vpop.f32.mrf.mxu0
        %v1780 = vpop.f32.mrf.mxu0
        %v1781 = vadd.f32 0.0, %v1780
        %v1782 = vpop.f32.mrf.mxu0
        %1783 = vmatprep.mubr.bf16.mxu0 0
        %1784 = vmatmul.mubr.bf16.gmra.mxu0 %v1273
        %v1785 = vpop.f32.mrf.mxu0
        %v1786 = vadd.f32 0.0, %v1785
        %v1787 = vpop.f32.mrf.mxu0
        %v1788 = vpop.f32.mrf.mxu0
        %v1789 = vadd.f32 0.0, %v1788
        %v1790 = vpop.f32.mrf.mxu0
        %1791 = vmatprep.mubr.bf16.mxu0 0
        %1792 = vmatmul.mubr.bf16.gmra.mxu0 %v1274
        %v1793 = vpop.f32.mrf.mxu0
        %v1794 = vadd.f32 0.0, %v1793
        %v1795 = vpop.f32.mrf.mxu0
        %v1796 = vpop.f32.mrf.mxu0
        %v1797 = vadd.f32 0.0, %v1796
        %v1798 = vpop.f32.mrf.mxu0
        %1799 = vmatprep.mubr.bf16.mxu0 0
        %1800 = vmatmul.mubr.bf16.gmra.mxu0 %v1275
        %v1801 = vpop.f32.mrf.mxu0
        %v1802 = vadd.f32 0.0, %v1801
        %v1803 = vpop.f32.mrf.mxu0
        %v1804 = vpop.f32.mrf.mxu0
        %v1805 = vadd.f32 0.0, %v1804
        %v1806 = vpop.f32.mrf.mxu0
        %1807 = vmatprep.mubr.bf16.mxu0 0
        %1808 = vmatmul.mubr.bf16.gmra.mxu0 %v1276
        %v1809 = vpop.f32.mrf.mxu0
        %v1810 = vadd.f32 0.0, %v1809
        %v1811 = vpop.f32.mrf.mxu0
        %v1812 = vpop.f32.mrf.mxu0
        %v1813 = vadd.f32 0.0, %v1812
        %v1814 = vpop.f32.mrf.mxu0
        %1815 = vmatprep.mubr.bf16.mxu0 0
        %1816 = vmatmul.mubr.bf16.gmra.mxu0 %v1277
        %v1817 = vpop.f32.mrf.mxu0
        %v1818 = vadd.f32 0.0, %v1817
        %v1819 = vpop.f32.mrf.mxu0
        %v1820 = vpop.f32.mrf.mxu0
        %v1821 = vadd.f32 0.0, %v1820
        %v1822 = vpop.f32.mrf.mxu0
        %1823 = vmatprep.mubr.bf16.mxu0 0
        %1824 = vmatmul.mubr.bf16.gmra.mxu0 %v1278
        %v1825 = vpop.f32.mrf.mxu0
        %v1826 = vadd.f32 0.0, %v1825
        %v1827 = vpop.f32.mrf.mxu0
        %v1828 = vpop.f32.mrf.mxu0
        %v1829 = vadd.f32 0.0, %v1828
        %v1830 = vpop.f32.mrf.mxu0
        %1831 = vmatprep.mubr.bf16.mxu0 0
        %1832 = vmatmul.mubr.bf16.gmra.mxu0 %v1279
        %v1833 = vpop.f32.mrf.mxu0
        %v1834 = vadd.f32 0.0, %v1833
        %v1835 = vpop.f32.mrf.mxu0
        %v1836 = vpop.f32.mrf.mxu0
        %v1837 = vadd.f32 0.0, %v1836
        %v1838 = vpop.f32.mrf.mxu0
        %1839 = vmatprep.mubr.bf16.mxu0 0
        %1840 = vmatmul.mubr.bf16.gmra.mxu0 %v1280
        %v1841 = vpop.f32.mrf.mxu0
        %v1842 = vadd.f32 0.0, %v1841
        %v1843 = vpop.f32.mrf.mxu0
        %v1844 = vpop.f32.mrf.mxu0
        %v1845 = vadd.f32 0.0, %v1844
        %v1846 = vpop.f32.mrf.mxu0
        %1847 = vmatprep.mubr.bf16.mxu0 0
        %1848 = vmatmul.mubr.bf16.gmra.mxu0 %v1281
        %v1849 = vpop.f32.mrf.mxu0
        %v1850 = vadd.f32 0.0, %v1849
        %v1851 = vpop.f32.mrf.mxu0
        %v1852 = vpop.f32.mrf.mxu0
        %v1853 = vadd.f32 0.0, %v1852
        %v1854 = vpop.f32.mrf.mxu0
        %1855 = vmatprep.mubr.bf16.mxu0 0
        %1856 = vmatmul.mubr.bf16.gmra.mxu0 %v1282
        %v1857 = vpop.f32.mrf.mxu0
        %v1858 = vadd.f32 0.0, %v1857
        %v1859 = vpop.f32.mrf.mxu0
        %v1860 = vpop.f32.mrf.mxu0
        %v1861 = vadd.f32 0.0, %v1860
        %v1862 = vpop.f32.mrf.mxu0
        %1863 = vmatprep.mubr.bf16.mxu0 0
        %1864 = vmatmul.mubr.bf16.gmra.mxu0 %v1283
        %v1865 = vpop.f32.mrf.mxu0
        %v1866 = vadd.f32 0.0, %v1865
        %v1867 = vpop.f32.mrf.mxu0
        %v1868 = vpop.f32.mrf.mxu0
        %v1869 = vadd.f32 0.0, %v1868
        %v1870 = vpop.f32.mrf.mxu0
        %1871 = vmatprep.mubr.bf16.mxu0 0
        %1872 = vmatmul.mubr.bf16.gmra.mxu0 %v1284
        %v1873 = vpop.f32.mrf.mxu0
        %v1874 = vadd.f32 0.0, %v1873
        %v1875 = vpop.f32.mrf.mxu0
        %v1876 = vpop.f32.mrf.mxu0
        %v1877 = vadd.f32 0.0, %v1876
        %v1878 = vpop.f32.mrf.mxu0
        %1879 = vmatprep.mubr.bf16.mxu0 0
        %1880 = vmatmul.mubr.bf16.gmra.mxu0 %v1285
        %v1881 = vpop.f32.mrf.mxu0
        %v1882 = vadd.f32 0.0, %v1881
        %v1883 = vpop.f32.mrf.mxu0
        %v1884 = vpop.f32.mrf.mxu0
        %v1885 = vadd.f32 0.0, %v1884
        %v1886 = vpop.f32.mrf.mxu0
        %1887 = vmatprep.mubr.bf16.mxu0 0
        %1888 = vmatmul.mubr.bf16.gmra.mxu0 %v1286
        %v1889 = vpop.f32.mrf.mxu0
        %v1890 = vadd.f32 0.0, %v1889
        %v1891 = vpop.f32.mrf.mxu0
        %v1892 = vpop.f32.mrf.mxu0
        %v1893 = vadd.f32 0.0, %v1892
        %v1894 = vpop.f32.mrf.mxu0
        %1895 = vdwg.mxu0
        %p1896 = scmp.eq.s32.totalorder %s28, 0
        // Predicated region
        $region49: #{tpu_custom_call.1} parent=43 // pred_check
          %p1897 = pneg %p1896
        $region50: #{tpu_custom_call.1} parent=43 // pred_check_branch
          %1899 = sbr.rel (%p1897) target = $region52
        $region51: #{tpu_custom_call.1} parent=43 // pred_region
          %1900 = vst [vmem:[#allocation2] sm:$0xff] -inf
          %1901 = vst [vmem:[#allocation2 + $0x8] sm:$0xff] -inf
          %1902 = vst [vmem:[#allocation2 + $0x10] sm:$0xff] -inf
          %1903 = vst [vmem:[#allocation2 + $0x18] sm:$0xff] -inf
          %1904 = vst [vmem:[#allocation2 + $0x20] sm:$0xff] -inf
          %1905 = vst [vmem:[#allocation2 + $0x28] sm:$0xff] -inf
          %1906 = vst [vmem:[#allocation2 + $0x30] sm:$0xff] -inf
          %1907 = vst [vmem:[#allocation2 + $0x38] sm:$0xff] -inf
          %1908 = vst [vmem:[#allocation2 + $0x40] sm:$0xff] -inf
          %1909 = vst [vmem:[#allocation2 + $0x48] sm:$0xff] -inf
          %1910 = vst [vmem:[#allocation2 + $0x50] sm:$0xff] -inf
          %1911 = vst [vmem:[#allocation2 + $0x58] sm:$0xff] -inf
          %1912 = vst [vmem:[#allocation2 + $0x60] sm:$0xff] -inf
          %1913 = vst [vmem:[#allocation2 + $0x68] sm:$0xff] -inf
          %1914 = vst [vmem:[#allocation2 + $0x70] sm:$0xff] -inf
          %1915 = vst [vmem:[#allocation2 + $0x78] sm:$0xff] -inf
          %1916 = vst [vmem:[#allocation2 + $0x80] sm:$0xff] -inf
          %1917 = vst [vmem:[#allocation2 + $0x88] sm:$0xff] -inf
          %1918 = vst [vmem:[#allocation2 + $0x90] sm:$0xff] -inf
          %1919 = vst [vmem:[#allocation2 + $0x98] sm:$0xff] -inf
          %1920 = vst [vmem:[#allocation2 + $0xa0] sm:$0xff] -inf
          %1921 = vst [vmem:[#allocation2 + $0xa8] sm:$0xff] -inf
          %1922 = vst [vmem:[#allocation2 + $0xb0] sm:$0xff] -inf
          %1923 = vst [vmem:[#allocation2 + $0xb8] sm:$0xff] -inf
          %1924 = vst [vmem:[#allocation2 + $0xc0] sm:$0xff] -inf
          %1925 = vst [vmem:[#allocation2 + $0xc8] sm:$0xff] -inf
          %1926 = vst [vmem:[#allocation2 + $0xd0] sm:$0xff] -inf
          %1927 = vst [vmem:[#allocation2 + $0xd8] sm:$0xff] -inf
          %1928 = vst [vmem:[#allocation2 + $0xe0] sm:$0xff] -inf
          %1929 = vst [vmem:[#allocation2 + $0xe8] sm:$0xff] -inf
          %1930 = vst [vmem:[#allocation2 + $0xf0] sm:$0xff] -inf
          %1931 = vst [vmem:[#allocation2 + $0xf8] sm:$0xff] -inf
          %1932 = vst [vmem:[#allocation2 + $0x100] sm:$0xff] -inf
          %1933 = vst [vmem:[#allocation2 + $0x108] sm:$0xff] -inf
          %1934 = vst [vmem:[#allocation2 + $0x110] sm:$0xff] -inf
          %1935 = vst [vmem:[#allocation2 + $0x118] sm:$0xff] -inf
          %1936 = vst [vmem:[#allocation2 + $0x120] sm:$0xff] -inf
          %1937 = vst [vmem:[#allocation2 + $0x128] sm:$0xff] -inf
          %1938 = vst [vmem:[#allocation2 + $0x130] sm:$0xff] -inf
          %1939 = vst [vmem:[#allocation2 + $0x138] sm:$0xff] -inf
          %1940 = vst [vmem:[#allocation2 + $0x140] sm:$0xff] -inf
          %1941 = vst [vmem:[#allocation2 + $0x148] sm:$0xff] -inf
          %1942 = vst [vmem:[#allocation2 + $0x150] sm:$0xff] -inf
          %1943 = vst [vmem:[#allocation2 + $0x158] sm:$0xff] -inf
          %1944 = vst [vmem:[#allocation2 + $0x160] sm:$0xff] -inf
          %1945 = vst [vmem:[#allocation2 + $0x168] sm:$0xff] -inf
          %1946 = vst [vmem:[#allocation2 + $0x170] sm:$0xff] -inf
          %1947 = vst [vmem:[#allocation2 + $0x178] sm:$0xff] -inf
          %1948 = vst [vmem:[#allocation2 + $0x180] sm:$0xff] -inf
          %1949 = vst [vmem:[#allocation2 + $0x188] sm:$0xff] -inf
          %1950 = vst [vmem:[#allocation2 + $0x190] sm:$0xff] -inf
          %1951 = vst [vmem:[#allocation2 + $0x198] sm:$0xff] -inf
          %1952 = vst [vmem:[#allocation2 + $0x1a0] sm:$0xff] -inf
          %1953 = vst [vmem:[#allocation2 + $0x1a8] sm:$0xff] -inf
          %1954 = vst [vmem:[#allocation2 + $0x1b0] sm:$0xff] -inf
          %1955 = vst [vmem:[#allocation2 + $0x1b8] sm:$0xff] -inf
          %1956 = vst [vmem:[#allocation2 + $0x1c0] sm:$0xff] -inf
          %1957 = vst [vmem:[#allocation2 + $0x1c8] sm:$0xff] -inf
          %1958 = vst [vmem:[#allocation2 + $0x1d0] sm:$0xff] -inf
          %1959 = vst [vmem:[#allocation2 + $0x1d8] sm:$0xff] -inf
          %1960 = vst [vmem:[#allocation2 + $0x1e0] sm:$0xff] -inf
          %1961 = vst [vmem:[#allocation2 + $0x1e8] sm:$0xff] -inf
          %1962 = vst [vmem:[#allocation2 + $0x1f0] sm:$0xff] -inf
          %1963 = vst [vmem:[#allocation2 + $0x1f8] sm:$0xff] -inf
          %1964 = vst [vmem:[#allocation2 + $0x200] sm:$0xff] -inf
          %1965 = vst [vmem:[#allocation2 + $0x208] sm:$0xff] -inf
          %1966 = vst [vmem:[#allocation2 + $0x210] sm:$0xff] -inf
          %1967 = vst [vmem:[#allocation2 + $0x218] sm:$0xff] -inf
          %1968 = vst [vmem:[#allocation2 + $0x220] sm:$0xff] -inf
          %1969 = vst [vmem:[#allocation2 + $0x228] sm:$0xff] -inf
          %1970 = vst [vmem:[#allocation2 + $0x230] sm:$0xff] -inf
          %1971 = vst [vmem:[#allocation2 + $0x238] sm:$0xff] -inf
          %1972 = vst [vmem:[#allocation2 + $0x240] sm:$0xff] -inf
          %1973 = vst [vmem:[#allocation2 + $0x248] sm:$0xff] -inf
          %1974 = vst [vmem:[#allocation2 + $0x250] sm:$0xff] -inf
          %1975 = vst [vmem:[#allocation2 + $0x258] sm:$0xff] -inf
          %1976 = vst [vmem:[#allocation2 + $0x260] sm:$0xff] -inf
          %1977 = vst [vmem:[#allocation2 + $0x268] sm:$0xff] -inf
          %1978 = vst [vmem:[#allocation2 + $0x270] sm:$0xff] -inf
          %1979 = vst [vmem:[#allocation2 + $0x278] sm:$0xff] -inf
          %1980 = vst [vmem:[#allocation2 + $0x280] sm:$0xff] -inf
          %1981 = vst [vmem:[#allocation2 + $0x288] sm:$0xff] -inf
          %1982 = vst [vmem:[#allocation2 + $0x290] sm:$0xff] -inf
          %1983 = vst [vmem:[#allocation2 + $0x298] sm:$0xff] -inf
          %1984 = vst [vmem:[#allocation2 + $0x2a0] sm:$0xff] -inf
          %1985 = vst [vmem:[#allocation2 + $0x2a8] sm:$0xff] -inf
          %1986 = vst [vmem:[#allocation2 + $0x2b0] sm:$0xff] -inf
          %1987 = vst [vmem:[#allocation2 + $0x2b8] sm:$0xff] -inf
          %1988 = vst [vmem:[#allocation2 + $0x2c0] sm:$0xff] -inf
          %1989 = vst [vmem:[#allocation2 + $0x2c8] sm:$0xff] -inf
          %1990 = vst [vmem:[#allocation2 + $0x2d0] sm:$0xff] -inf
          %1991 = vst [vmem:[#allocation2 + $0x2d8] sm:$0xff] -inf
          %1992 = vst [vmem:[#allocation2 + $0x2e0] sm:$0xff] -inf
          %1993 = vst [vmem:[#allocation2 + $0x2e8] sm:$0xff] -inf
          %1994 = vst [vmem:[#allocation2 + $0x2f0] sm:$0xff] -inf
          %1995 = vst [vmem:[#allocation2 + $0x2f8] sm:$0xff] -inf
          %1996 = vst [vmem:[#allocation2 + $0x300] sm:$0xff] -inf
          %1997 = vst [vmem:[#allocation2 + $0x308] sm:$0xff] -inf
          %1998 = vst [vmem:[#allocation2 + $0x310] sm:$0xff] -inf
          %1999 = vst [vmem:[#allocation2 + $0x318] sm:$0xff] -inf
          %2000 = vst [vmem:[#allocation2 + $0x320] sm:$0xff] -inf
          %2001 = vst [vmem:[#allocation2 + $0x328] sm:$0xff] -inf
          %2002 = vst [vmem:[#allocation2 + $0x330] sm:$0xff] -inf
          %2003 = vst [vmem:[#allocation2 + $0x338] sm:$0xff] -inf
          %2004 = vst [vmem:[#allocation2 + $0x340] sm:$0xff] -inf
          %2005 = vst [vmem:[#allocation2 + $0x348] sm:$0xff] -inf
          %2006 = vst [vmem:[#allocation2 + $0x350] sm:$0xff] -inf
          %2007 = vst [vmem:[#allocation2 + $0x358] sm:$0xff] -inf
          %2008 = vst [vmem:[#allocation2 + $0x360] sm:$0xff] -inf
          %2009 = vst [vmem:[#allocation2 + $0x368] sm:$0xff] -inf
          %2010 = vst [vmem:[#allocation2 + $0x370] sm:$0xff] -inf
          %2011 = vst [vmem:[#allocation2 + $0x378] sm:$0xff] -inf
          %2012 = vst [vmem:[#allocation2 + $0x380] sm:$0xff] -inf
          %2013 = vst [vmem:[#allocation2 + $0x388] sm:$0xff] -inf
          %2014 = vst [vmem:[#allocation2 + $0x390] sm:$0xff] -inf
          %2015 = vst [vmem:[#allocation2 + $0x398] sm:$0xff] -inf
          %2016 = vst [vmem:[#allocation2 + $0x3a0] sm:$0xff] -inf
          %2017 = vst [vmem:[#allocation2 + $0x3a8] sm:$0xff] -inf
          %2018 = vst [vmem:[#allocation2 + $0x3b0] sm:$0xff] -inf
          %2019 = vst [vmem:[#allocation2 + $0x3b8] sm:$0xff] -inf
          %2020 = vst [vmem:[#allocation2 + $0x3c0] sm:$0xff] -inf
          %2021 = vst [vmem:[#allocation2 + $0x3c8] sm:$0xff] -inf
          %2022 = vst [vmem:[#allocation2 + $0x3d0] sm:$0xff] -inf
          %2023 = vst [vmem:[#allocation2 + $0x3d8] sm:$0xff] -inf
          %2024 = vst [vmem:[#allocation2 + $0x3e0] sm:$0xff] -inf
          %2025 = vst [vmem:[#allocation2 + $0x3e8] sm:$0xff] -inf
          %2026 = vst [vmem:[#allocation2 + $0x3f0] sm:$0xff] -inf
          %2027 = vst [vmem:[#allocation2 + $0x3f8] sm:$0xff] -inf
        $region52: #{tpu_custom_call.1} parent=43 // pred_fallthru
          _
        %v2028 = vld [vmem:[#allocation2] sm:$0xff]
        %v2029 = vld [vmem:[#allocation2 + $0x8] sm:$0xff]
        %v2030 = vld [vmem:[#allocation2 + $0x10] sm:$0xff]
        %v2031 = vld [vmem:[#allocation2 + $0x18] sm:$0xff]
        %v2032 = vld [vmem:[#allocation2 + $0x20] sm:$0xff]
        %v2033 = vld [vmem:[#allocation2 + $0x28] sm:$0xff]
        %v2034 = vld [vmem:[#allocation2 + $0x30] sm:$0xff]
        %v2035 = vld [vmem:[#allocation2 + $0x38] sm:$0xff]
        %v2036 = vld [vmem:[#allocation2 + $0x40] sm:$0xff]
        %v2037 = vld [vmem:[#allocation2 + $0x48] sm:$0xff]
        %v2038 = vld [vmem:[#allocation2 + $0x50] sm:$0xff]
        %v2039 = vld [vmem:[#allocation2 + $0x58] sm:$0xff]
        %v2040 = vld [vmem:[#allocation2 + $0x60] sm:$0xff]
        %v2041 = vld [vmem:[#allocation2 + $0x68] sm:$0xff]
        %v2042 = vld [vmem:[#allocation2 + $0x70] sm:$0xff]
        %v2043 = vld [vmem:[#allocation2 + $0x78] sm:$0xff]
        %v2044 = vld [vmem:[#allocation2 + $0x80] sm:$0xff]
        %v2045 = vld [vmem:[#allocation2 + $0x88] sm:$0xff]
        %v2046 = vld [vmem:[#allocation2 + $0x90] sm:$0xff]
        %v2047 = vld [vmem:[#allocation2 + $0x98] sm:$0xff]
        %v2048 = vld [vmem:[#allocation2 + $0xa0] sm:$0xff]
        %v2049 = vld [vmem:[#allocation2 + $0xa8] sm:$0xff]
        %v2050 = vld [vmem:[#allocation2 + $0xb0] sm:$0xff]
        %v2051 = vld [vmem:[#allocation2 + $0xb8] sm:$0xff]
        %v2052 = vld [vmem:[#allocation2 + $0xc0] sm:$0xff]
        %v2053 = vld [vmem:[#allocation2 + $0xc8] sm:$0xff]
        %v2054 = vld [vmem:[#allocation2 + $0xd0] sm:$0xff]
        %v2055 = vld [vmem:[#allocation2 + $0xd8] sm:$0xff]
        %v2056 = vld [vmem:[#allocation2 + $0xe0] sm:$0xff]
        %v2057 = vld [vmem:[#allocation2 + $0xe8] sm:$0xff]
        %v2058 = vld [vmem:[#allocation2 + $0xf0] sm:$0xff]
        %v2059 = vld [vmem:[#allocation2 + $0xf8] sm:$0xff]
        %v2060 = vld [vmem:[#allocation2 + $0x100] sm:$0xff]
        %v2061 = vld [vmem:[#allocation2 + $0x108] sm:$0xff]
        %v2062 = vld [vmem:[#allocation2 + $0x110] sm:$0xff]
        %v2063 = vld [vmem:[#allocation2 + $0x118] sm:$0xff]
        %v2064 = vld [vmem:[#allocation2 + $0x120] sm:$0xff]
        %v2065 = vld [vmem:[#allocation2 + $0x128] sm:$0xff]
        %v2066 = vld [vmem:[#allocation2 + $0x130] sm:$0xff]
        %v2067 = vld [vmem:[#allocation2 + $0x138] sm:$0xff]
        %v2068 = vld [vmem:[#allocation2 + $0x140] sm:$0xff]
        %v2069 = vld [vmem:[#allocation2 + $0x148] sm:$0xff]
        %v2070 = vld [vmem:[#allocation2 + $0x150] sm:$0xff]
        %v2071 = vld [vmem:[#allocation2 + $0x158] sm:$0xff]
        %v2072 = vld [vmem:[#allocation2 + $0x160] sm:$0xff]
        %v2073 = vld [vmem:[#allocation2 + $0x168] sm:$0xff]
        %v2074 = vld [vmem:[#allocation2 + $0x170] sm:$0xff]
        %v2075 = vld [vmem:[#allocation2 + $0x178] sm:$0xff]
        %v2076 = vld [vmem:[#allocation2 + $0x180] sm:$0xff]
        %v2077 = vld [vmem:[#allocation2 + $0x188] sm:$0xff]
        %v2078 = vld [vmem:[#allocation2 + $0x190] sm:$0xff]
        %v2079 = vld [vmem:[#allocation2 + $0x198] sm:$0xff]
        %v2080 = vld [vmem:[#allocation2 + $0x1a0] sm:$0xff]
        %v2081 = vld [vmem:[#allocation2 + $0x1a8] sm:$0xff]
        %v2082 = vld [vmem:[#allocation2 + $0x1b0] sm:$0xff]
        %v2083 = vld [vmem:[#allocation2 + $0x1b8] sm:$0xff]
        %v2084 = vld [vmem:[#allocation2 + $0x1c0] sm:$0xff]
        %v2085 = vld [vmem:[#allocation2 + $0x1c8] sm:$0xff]
        %v2086 = vld [vmem:[#allocation2 + $0x1d0] sm:$0xff]
        %v2087 = vld [vmem:[#allocation2 + $0x1d8] sm:$0xff]
        %v2088 = vld [vmem:[#allocation2 + $0x1e0] sm:$0xff]
        %v2089 = vld [vmem:[#allocation2 + $0x1e8] sm:$0xff]
        %v2090 = vld [vmem:[#allocation2 + $0x1f0] sm:$0xff]
        %v2091 = vld [vmem:[#allocation2 + $0x1f8] sm:$0xff]
        %v2092 = vld [vmem:[#allocation2 + $0x200] sm:$0xff]
        %v2093 = vld [vmem:[#allocation2 + $0x208] sm:$0xff]
        %v2094 = vld [vmem:[#allocation2 + $0x210] sm:$0xff]
        %v2095 = vld [vmem:[#allocation2 + $0x218] sm:$0xff]
        %v2096 = vld [vmem:[#allocation2 + $0x220] sm:$0xff]
        %v2097 = vld [vmem:[#allocation2 + $0x228] sm:$0xff]
        %v2098 = vld [vmem:[#allocation2 + $0x230] sm:$0xff]
        %v2099 = vld [vmem:[#allocation2 + $0x238] sm:$0xff]
        %v2100 = vld [vmem:[#allocation2 + $0x240] sm:$0xff]
        %v2101 = vld [vmem:[#allocation2 + $0x248] sm:$0xff]
        %v2102 = vld [vmem:[#allocation2 + $0x250] sm:$0xff]
        %v2103 = vld [vmem:[#allocation2 + $0x258] sm:$0xff]
        %v2104 = vld [vmem:[#allocation2 + $0x260] sm:$0xff]
        %v2105 = vld [vmem:[#allocation2 + $0x268] sm:$0xff]
        %v2106 = vld [vmem:[#allocation2 + $0x270] sm:$0xff]
        %v2107 = vld [vmem:[#allocation2 + $0x278] sm:$0xff]
        %v2108 = vld [vmem:[#allocation2 + $0x280] sm:$0xff]
        %v2109 = vld [vmem:[#allocation2 + $0x288] sm:$0xff]
        %v2110 = vld [vmem:[#allocation2 + $0x290] sm:$0xff]
        %v2111 = vld [vmem:[#allocation2 + $0x298] sm:$0xff]
        %v2112 = vld [vmem:[#allocation2 + $0x2a0] sm:$0xff]
        %v2113 = vld [vmem:[#allocation2 + $0x2a8] sm:$0xff]
        %v2114 = vld [vmem:[#allocation2 + $0x2b0] sm:$0xff]
        %v2115 = vld [vmem:[#allocation2 + $0x2b8] sm:$0xff]
        %v2116 = vld [vmem:[#allocation2 + $0x2c0] sm:$0xff]
        %v2117 = vld [vmem:[#allocation2 + $0x2c8] sm:$0xff]
        %v2118 = vld [vmem:[#allocation2 + $0x2d0] sm:$0xff]
        %v2119 = vld [vmem:[#allocation2 + $0x2d8] sm:$0xff]
        %v2120 = vld [vmem:[#allocation2 + $0x2e0] sm:$0xff]
        %v2121 = vld [vmem:[#allocation2 + $0x2e8] sm:$0xff]
        %v2122 = vld [vmem:[#allocation2 + $0x2f0] sm:$0xff]
        %v2123 = vld [vmem:[#allocation2 + $0x2f8] sm:$0xff]
        %v2124 = vld [vmem:[#allocation2 + $0x300] sm:$0xff]
        %v2125 = vld [vmem:[#allocation2 + $0x308] sm:$0xff]
        %v2126 = vld [vmem:[#allocation2 + $0x310] sm:$0xff]
        %v2127 = vld [vmem:[#allocation2 + $0x318] sm:$0xff]
        %v2128 = vld [vmem:[#allocation2 + $0x320] sm:$0xff]
        %v2129 = vld [vmem:[#allocation2 + $0x328] sm:$0xff]
        %v2130 = vld [vmem:[#allocation2 + $0x330] sm:$0xff]
        %v2131 = vld [vmem:[#allocation2 + $0x338] sm:$0xff]
        %v2132 = vld [vmem:[#allocation2 + $0x340] sm:$0xff]
        %v2133 = vld [vmem:[#allocation2 + $0x348] sm:$0xff]
        %v2134 = vld [vmem:[#allocation2 + $0x350] sm:$0xff]
        %v2135 = vld [vmem:[#allocation2 + $0x358] sm:$0xff]
        %v2136 = vld [vmem:[#allocation2 + $0x360] sm:$0xff]
        %v2137 = vld [vmem:[#allocation2 + $0x368] sm:$0xff]
        %v2138 = vld [vmem:[#allocation2 + $0x370] sm:$0xff]
        %v2139 = vld [vmem:[#allocation2 + $0x378] sm:$0xff]
        %v2140 = vld [vmem:[#allocation2 + $0x380] sm:$0xff]
        %v2141 = vld [vmem:[#allocation2 + $0x388] sm:$0xff]
        %v2142 = vld [vmem:[#allocation2 + $0x390] sm:$0xff]
        %v2143 = vld [vmem:[#allocation2 + $0x398] sm:$0xff]
        %v2144 = vld [vmem:[#allocation2 + $0x3a0] sm:$0xff]
        %v2145 = vld [vmem:[#allocation2 + $0x3a8] sm:$0xff]
        %v2146 = vld [vmem:[#allocation2 + $0x3b0] sm:$0xff]
        %v2147 = vld [vmem:[#allocation2 + $0x3b8] sm:$0xff]
        %v2148 = vld [vmem:[#allocation2 + $0x3c0] sm:$0xff]
        %v2149 = vld [vmem:[#allocation2 + $0x3c8] sm:$0xff]
        %v2150 = vld [vmem:[#allocation2 + $0x3d0] sm:$0xff]
        %v2151 = vld [vmem:[#allocation2 + $0x3d8] sm:$0xff]
        %v2152 = vld [vmem:[#allocation2 + $0x3e0] sm:$0xff]
        %v2153 = vld [vmem:[#allocation2 + $0x3e8] sm:$0xff]
        %v2154 = vld [vmem:[#allocation2 + $0x3f0] sm:$0xff]
        %v2155 = vld [vmem:[#allocation2 + $0x3f8] sm:$0xff]
        %v2156 = vmax.f32 %v2028, %v1386
        %v2157 = vmax.f32 %v2029, %v1389
        %v2158 = vmax.f32 %v2030, %v1394
        %v2159 = vmax.f32 %v2031, %v1397
        %v2160 = vmax.f32 %v2032, %v1402
        %v2161 = vmax.f32 %v2033, %v1405
        %v2162 = vmax.f32 %v2034, %v1410
        %v2163 = vmax.f32 %v2035, %v1413
        %v2164 = vmax.f32 %v2036, %v1418
        %v2165 = vmax.f32 %v2037, %v1421
        %v2166 = vmax.f32 %v2038, %v1426
        %v2167 = vmax.f32 %v2039, %v1429
        %v2168 = vmax.f32 %v2040, %v1434
        %v2169 = vmax.f32 %v2041, %v1437
        %v2170 = vmax.f32 %v2042, %v1442
        %v2171 = vmax.f32 %v2043, %v1445
        %v2172 = vmax.f32 %v2044, %v1450
        %v2173 = vmax.f32 %v2045, %v1453
        %v2174 = vmax.f32 %v2046, %v1458
        %v2175 = vmax.f32 %v2047, %v1461
        %v2176 = vmax.f32 %v2048, %v1466
        %v2177 = vmax.f32 %v2049, %v1469
        %v2178 = vmax.f32 %v2050, %v1474
        %v2179 = vmax.f32 %v2051, %v1477
        %v2180 = vmax.f32 %v2052, %v1482
        %v2181 = vmax.f32 %v2053, %v1485
        %v2182 = vmax.f32 %v2054, %v1490
        %v2183 = vmax.f32 %v2055, %v1493
        %v2184 = vmax.f32 %v2056, %v1498
        %v2185 = vmax.f32 %v2057, %v1501
        %v2186 = vmax.f32 %v2058, %v1506
        %v2187 = vmax.f32 %v2059, %v1509
        %v2188 = vmax.f32 %v2060, %v1514
        %v2189 = vmax.f32 %v2061, %v1517
        %v2190 = vmax.f32 %v2062, %v1522
        %v2191 = vmax.f32 %v2063, %v1525
        %v2192 = vmax.f32 %v2064, %v1530
        %v2193 = vmax.f32 %v2065, %v1533
        %v2194 = vmax.f32 %v2066, %v1538
        %v2195 = vmax.f32 %v2067, %v1541
        %v2196 = vmax.f32 %v2068, %v1546
        %v2197 = vmax.f32 %v2069, %v1549
        %v2198 = vmax.f32 %v2070, %v1554
        %v2199 = vmax.f32 %v2071, %v1557
        %v2200 = vmax.f32 %v2072, %v1562
        %v2201 = vmax.f32 %v2073, %v1565
        %v2202 = vmax.f32 %v2074, %v1570
        %v2203 = vmax.f32 %v2075, %v1573
        %v2204 = vmax.f32 %v2076, %v1578
        %v2205 = vmax.f32 %v2077, %v1581
        %v2206 = vmax.f32 %v2078, %v1586
        %v2207 = vmax.f32 %v2079, %v1589
        %v2208 = vmax.f32 %v2080, %v1594
        %v2209 = vmax.f32 %v2081, %v1597
        %v2210 = vmax.f32 %v2082, %v1602
        %v2211 = vmax.f32 %v2083, %v1605
        %v2212 = vmax.f32 %v2084, %v1610
        %v2213 = vmax.f32 %v2085, %v1613
        %v2214 = vmax.f32 %v2086, %v1618
        %v2215 = vmax.f32 %v2087, %v1621
        %v2216 = vmax.f32 %v2088, %v1626
        %v2217 = vmax.f32 %v2089, %v1629
        %v2218 = vmax.f32 %v2090, %v1634
        %v2219 = vmax.f32 %v2091, %v1637
        %v2220 = vmax.f32 %v2092, %v1642
        %v2221 = vmax.f32 %v2093, %v1645
        %v2222 = vmax.f32 %v2094, %v1650
        %v2223 = vmax.f32 %v2095, %v1653
        %v2224 = vmax.f32 %v2096, %v1658
        %v2225 = vmax.f32 %v2097, %v1661
        %v2226 = vmax.f32 %v2098, %v1666
        %v2227 = vmax.f32 %v2099, %v1669
        %v2228 = vmax.f32 %v2100, %v1674
        %v2229 = vmax.f32 %v2101, %v1677
        %v2230 = vmax.f32 %v2102, %v1682
        %v2231 = vmax.f32 %v2103, %v1685
        %v2232 = vmax.f32 %v2104, %v1690
        %v2233 = vmax.f32 %v2105, %v1693
        %v2234 = vmax.f32 %v2106, %v1698
        %v2235 = vmax.f32 %v2107, %v1701
        %v2236 = vmax.f32 %v2108, %v1706
        %v2237 = vmax.f32 %v2109, %v1709
        %v2238 = vmax.f32 %v2110, %v1714
        %v2239 = vmax.f32 %v2111, %v1717
        %v2240 = vmax.f32 %v2112, %v1722
        %v2241 = vmax.f32 %v2113, %v1725
        %v2242 = vmax.f32 %v2114, %v1730
        %v2243 = vmax.f32 %v2115, %v1733
        %v2244 = vmax.f32 %v2116, %v1738
        %v2245 = vmax.f32 %v2117, %v1741
        %v2246 = vmax.f32 %v2118, %v1746
        %v2247 = vmax.f32 %v2119, %v1749
        %v2248 = vmax.f32 %v2120, %v1754
        %v2249 = vmax.f32 %v2121, %v1757
        %v2250 = vmax.f32 %v2122, %v1762
        %v2251 = vmax.f32 %v2123, %v1765
        %v2252 = vmax.f32 %v2124, %v1770
        %v2253 = vmax.f32 %v2125, %v1773
        %v2254 = vmax.f32 %v2126, %v1778
        %v2255 = vmax.f32 %v2127, %v1781
        %v2256 = vmax.f32 %v2128, %v1786
        %v2257 = vmax.f32 %v2129, %v1789
        %v2258 = vmax.f32 %v2130, %v1794
        %v2259 = vmax.f32 %v2131, %v1797
        %v2260 = vmax.f32 %v2132, %v1802
        %v2261 = vmax.f32 %v2133, %v1805
        %v2262 = vmax.f32 %v2134, %v1810
        %v2263 = vmax.f32 %v2135, %v1813
        %v2264 = vmax.f32 %v2136, %v1818
        %v2265 = vmax.f32 %v2137, %v1821
        %v2266 = vmax.f32 %v2138, %v1826
        %v2267 = vmax.f32 %v2139, %v1829
        %v2268 = vmax.f32 %v2140, %v1834
        %v2269 = vmax.f32 %v2141, %v1837
        %v2270 = vmax.f32 %v2142, %v1842
        %v2271 = vmax.f32 %v2143, %v1845
        %v2272 = vmax.f32 %v2144, %v1850
        %v2273 = vmax.f32 %v2145, %v1853
        %v2274 = vmax.f32 %v2146, %v1858
        %v2275 = vmax.f32 %v2147, %v1861
        %v2276 = vmax.f32 %v2148, %v1866
        %v2277 = vmax.f32 %v2149, %v1869
        %v2278 = vmax.f32 %v2150, %v1874
        %v2279 = vmax.f32 %v2151, %v1877
        %v2280 = vmax.f32 %v2152, %v1882
        %v2281 = vmax.f32 %v2153, %v1885
        %v2282 = vmax.f32 %v2154, %v1890
        %v2283 = vmax.f32 %v2155, %v1893
        %2284 = vst [vmem:[#allocation2] sm:$0xff] %v2156
        %2285 = vst [vmem:[#allocation2 + $0x8] sm:$0xff] %v2157
        %2286 = vst [vmem:[#allocation2 + $0x10] sm:$0xff] %v2158
        %2287 = vst [vmem:[#allocation2 + $0x18] sm:$0xff] %v2159
        %2288 = vst [vmem:[#allocation2 + $0x20] sm:$0xff] %v2160
        %2289 = vst [vmem:[#allocation2 + $0x28] sm:$0xff] %v2161
        %2290 = vst [vmem:[#allocation2 + $0x30] sm:$0xff] %v2162
        %2291 = vst [vmem:[#allocation2 + $0x38] sm:$0xff] %v2163
        %2292 = vst [vmem:[#allocation2 + $0x40] sm:$0xff] %v2164
        %2293 = vst [vmem:[#allocation2 + $0x48] sm:$0xff] %v2165
        %2294 = vst [vmem:[#allocation2 + $0x50] sm:$0xff] %v2166
        %2295 = vst [vmem:[#allocation2 + $0x58] sm:$0xff] %v2167
        %2296 = vst [vmem:[#allocation2 + $0x60] sm:$0xff] %v2168
        %2297 = vst [vmem:[#allocation2 + $0x68] sm:$0xff] %v2169
        %2298 = vst [vmem:[#allocation2 + $0x70] sm:$0xff] %v2170
        %2299 = vst [vmem:[#allocation2 + $0x78] sm:$0xff] %v2171
        %2300 = vst [vmem:[#allocation2 + $0x80] sm:$0xff] %v2172
        %2301 = vst [vmem:[#allocation2 + $0x88] sm:$0xff] %v2173
        %2302 = vst [vmem:[#allocation2 + $0x90] sm:$0xff] %v2174
        %2303 = vst [vmem:[#allocation2 + $0x98] sm:$0xff] %v2175
        %2304 = vst [vmem:[#allocation2 + $0xa0] sm:$0xff] %v2176
        %2305 = vst [vmem:[#allocation2 + $0xa8] sm:$0xff] %v2177
        %2306 = vst [vmem:[#allocation2 + $0xb0] sm:$0xff] %v2178
        %2307 = vst [vmem:[#allocation2 + $0xb8] sm:$0xff] %v2179
        %2308 = vst [vmem:[#allocation2 + $0xc0] sm:$0xff] %v2180
        %2309 = vst [vmem:[#allocation2 + $0xc8] sm:$0xff] %v2181
        %2310 = vst [vmem:[#allocation2 + $0xd0] sm:$0xff] %v2182
        %2311 = vst [vmem:[#allocation2 + $0xd8] sm:$0xff] %v2183
        %2312 = vst [vmem:[#allocation2 + $0xe0] sm:$0xff] %v2184
        %2313 = vst [vmem:[#allocation2 + $0xe8] sm:$0xff] %v2185
        %2314 = vst [vmem:[#allocation2 + $0xf0] sm:$0xff] %v2186
        %2315 = vst [vmem:[#allocation2 + $0xf8] sm:$0xff] %v2187
        %2316 = vst [vmem:[#allocation2 + $0x100] sm:$0xff] %v2188
        %2317 = vst [vmem:[#allocation2 + $0x108] sm:$0xff] %v2189
        %2318 = vst [vmem:[#allocation2 + $0x110] sm:$0xff] %v2190
        %2319 = vst [vmem:[#allocation2 + $0x118] sm:$0xff] %v2191
        %2320 = vst [vmem:[#allocation2 + $0x120] sm:$0xff] %v2192
        %2321 = vst [vmem:[#allocation2 + $0x128] sm:$0xff] %v2193
        %2322 = vst [vmem:[#allocation2 + $0x130] sm:$0xff] %v2194
        %2323 = vst [vmem:[#allocation2 + $0x138] sm:$0xff] %v2195
        %2324 = vst [vmem:[#allocation2 + $0x140] sm:$0xff] %v2196
        %2325 = vst [vmem:[#allocation2 + $0x148] sm:$0xff] %v2197
        %2326 = vst [vmem:[#allocation2 + $0x150] sm:$0xff] %v2198
        %2327 = vst [vmem:[#allocation2 + $0x158] sm:$0xff] %v2199
        %2328 = vst [vmem:[#allocation2 + $0x160] sm:$0xff] %v2200
        %2329 = vst [vmem:[#allocation2 + $0x168] sm:$0xff] %v2201
        %2330 = vst [vmem:[#allocation2 + $0x170] sm:$0xff] %v2202
        %2331 = vst [vmem:[#allocation2 + $0x178] sm:$0xff] %v2203
        %2332 = vst [vmem:[#allocation2 + $0x180] sm:$0xff] %v2204
        %2333 = vst [vmem:[#allocation2 + $0x188] sm:$0xff] %v2205
        %2334 = vst [vmem:[#allocation2 + $0x190] sm:$0xff] %v2206
        %2335 = vst [vmem:[#allocation2 + $0x198] sm:$0xff] %v2207
        %2336 = vst [vmem:[#allocation2 + $0x1a0] sm:$0xff] %v2208
        %2337 = vst [vmem:[#allocation2 + $0x1a8] sm:$0xff] %v2209
        %2338 = vst [vmem:[#allocation2 + $0x1b0] sm:$0xff] %v2210
        %2339 = vst [vmem:[#allocation2 + $0x1b8] sm:$0xff] %v2211
        %2340 = vst [vmem:[#allocation2 + $0x1c0] sm:$0xff] %v2212
        %2341 = vst [vmem:[#allocation2 + $0x1c8] sm:$0xff] %v2213
        %2342 = vst [vmem:[#allocation2 + $0x1d0] sm:$0xff] %v2214
        %2343 = vst [vmem:[#allocation2 + $0x1d8] sm:$0xff] %v2215
        %2344 = vst [vmem:[#allocation2 + $0x1e0] sm:$0xff] %v2216
        %2345 = vst [vmem:[#allocation2 + $0x1e8] sm:$0xff] %v2217
        %2346 = vst [vmem:[#allocation2 + $0x1f0] sm:$0xff] %v2218
        %2347 = vst [vmem:[#allocation2 + $0x1f8] sm:$0xff] %v2219
        %2348 = vst [vmem:[#allocation2 + $0x200] sm:$0xff] %v2220
        %2349 = vst [vmem:[#allocation2 + $0x208] sm:$0xff] %v2221
        %2350 = vst [vmem:[#allocation2 + $0x210] sm:$0xff] %v2222
        %2351 = vst [vmem:[#allocation2 + $0x218] sm:$0xff] %v2223
        %2352 = vst [vmem:[#allocation2 + $0x220] sm:$0xff] %v2224
        %2353 = vst [vmem:[#allocation2 + $0x228] sm:$0xff] %v2225
        %2354 = vst [vmem:[#allocation2 + $0x230] sm:$0xff] %v2226
        %2355 = vst [vmem:[#allocation2 + $0x238] sm:$0xff] %v2227
        %2356 = vst [vmem:[#allocation2 + $0x240] sm:$0xff] %v2228
        %2357 = vst [vmem:[#allocation2 + $0x248] sm:$0xff] %v2229
        %2358 = vst [vmem:[#allocation2 + $0x250] sm:$0xff] %v2230
        %2359 = vst [vmem:[#allocation2 + $0x258] sm:$0xff] %v2231
        %2360 = vst [vmem:[#allocation2 + $0x260] sm:$0xff] %v2232
        %2361 = vst [vmem:[#allocation2 + $0x268] sm:$0xff] %v2233
        %2362 = vst [vmem:[#allocation2 + $0x270] sm:$0xff] %v2234
        %2363 = vst [vmem:[#allocation2 + $0x278] sm:$0xff] %v2235
        %2364 = vst [vmem:[#allocation2 + $0x280] sm:$0xff] %v2236
        %2365 = vst [vmem:[#allocation2 + $0x288] sm:$0xff] %v2237
        %2366 = vst [vmem:[#allocation2 + $0x290] sm:$0xff] %v2238
        %2367 = vst [vmem:[#allocation2 + $0x298] sm:$0xff] %v2239
        %2368 = vst [vmem:[#allocation2 + $0x2a0] sm:$0xff] %v2240
        %2369 = vst [vmem:[#allocation2 + $0x2a8] sm:$0xff] %v2241
        %2370 = vst [vmem:[#allocation2 + $0x2b0] sm:$0xff] %v2242
        %2371 = vst [vmem:[#allocation2 + $0x2b8] sm:$0xff] %v2243
        %2372 = vst [vmem:[#allocation2 + $0x2c0] sm:$0xff] %v2244
        %2373 = vst [vmem:[#allocation2 + $0x2c8] sm:$0xff] %v2245
        %2374 = vst [vmem:[#allocation2 + $0x2d0] sm:$0xff] %v2246
        %2375 = vst [vmem:[#allocation2 + $0x2d8] sm:$0xff] %v2247
        %2376 = vst [vmem:[#allocation2 + $0x2e0] sm:$0xff] %v2248
        %2377 = vst [vmem:[#allocation2 + $0x2e8] sm:$0xff] %v2249
        %2378 = vst [vmem:[#allocation2 + $0x2f0] sm:$0xff] %v2250
        %2379 = vst [vmem:[#allocation2 + $0x2f8] sm:$0xff] %v2251
        %2380 = vst [vmem:[#allocation2 + $0x300] sm:$0xff] %v2252
        %2381 = vst [vmem:[#allocation2 + $0x308] sm:$0xff] %v2253
        %2382 = vst [vmem:[#allocation2 + $0x310] sm:$0xff] %v2254
        %2383 = vst [vmem:[#allocation2 + $0x318] sm:$0xff] %v2255
        %2384 = vst [vmem:[#allocation2 + $0x320] sm:$0xff] %v2256
        %2385 = vst [vmem:[#allocation2 + $0x328] sm:$0xff] %v2257
        %2386 = vst [vmem:[#allocation2 + $0x330] sm:$0xff] %v2258
        %2387 = vst [vmem:[#allocation2 + $0x338] sm:$0xff] %v2259
        %2388 = vst [vmem:[#allocation2 + $0x340] sm:$0xff] %v2260
        %2389 = vst [vmem:[#allocation2 + $0x348] sm:$0xff] %v2261
        %2390 = vst [vmem:[#allocation2 + $0x350] sm:$0xff] %v2262
        %2391 = vst [vmem:[#allocation2 + $0x358] sm:$0xff] %v2263
        %2392 = vst [vmem:[#allocation2 + $0x360] sm:$0xff] %v2264
        %2393 = vst [vmem:[#allocation2 + $0x368] sm:$0xff] %v2265
        %2394 = vst [vmem:[#allocation2 + $0x370] sm:$0xff] %v2266
        %2395 = vst [vmem:[#allocation2 + $0x378] sm:$0xff] %v2267
        %2396 = vst [vmem:[#allocation2 + $0x380] sm:$0xff] %v2268
        %2397 = vst [vmem:[#allocation2 + $0x388] sm:$0xff] %v2269
        %2398 = vst [vmem:[#allocation2 + $0x390] sm:$0xff] %v2270
        %2399 = vst [vmem:[#allocation2 + $0x398] sm:$0xff] %v2271
        %2400 = vst [vmem:[#allocation2 + $0x3a0] sm:$0xff] %v2272
        %2401 = vst [vmem:[#allocation2 + $0x3a8] sm:$0xff] %v2273
        %2402 = vst [vmem:[#allocation2 + $0x3b0] sm:$0xff] %v2274
        %2403 = vst [vmem:[#allocation2 + $0x3b8] sm:$0xff] %v2275
        %2404 = vst [vmem:[#allocation2 + $0x3c0] sm:$0xff] %v2276
        %2405 = vst [vmem:[#allocation2 + $0x3c8] sm:$0xff] %v2277
        %2406 = vst [vmem:[#allocation2 + $0x3d0] sm:$0xff] %v2278
        %2407 = vst [vmem:[#allocation2 + $0x3d8] sm:$0xff] %v2279
        %2408 = vst [vmem:[#allocation2 + $0x3e0] sm:$0xff] %v2280
        %2409 = vst [vmem:[#allocation2 + $0x3e8] sm:$0xff] %v2281
        %2410 = vst [vmem:[#allocation2 + $0x3f0] sm:$0xff] %v2282
        %2411 = vst [vmem:[#allocation2 + $0x3f8] sm:$0xff] %v2283
        %p2412 = scmp.eq.s32.totalorder %s28, 1
        // Predicated region
        $region53: #{tpu_custom_call.1} parent=43 // pred_check
          %p2413 = pneg %p2412
        $region54: #{tpu_custom_call.1} parent=43 // pred_check_branch
          %2415 = sbr.rel (%p2413) target = $region56
        $region55: #{tpu_custom_call.1} parent=43 // pred_region
          %2416 = vmax.xlane.f32.xlu0 %v2156
          %v2417 = vpop.xlane.xlu0 %2416
          %2418 = vmax.xlane.f32.xlu0 %v2157
          %v2419 = vpop.xlane.xlu0 %2418
          %2420 = vmax.xlane.f32.xlu0 %v2158
          %v2421 = vpop.xlane.xlu0 %2420
          %2422 = vmax.xlane.f32.xlu0 %v2159
          %v2423 = vpop.xlane.xlu0 %2422
          %2424 = vmax.xlane.f32.xlu0 %v2160
          %v2425 = vpop.xlane.xlu0 %2424
          %2426 = vmax.xlane.f32.xlu0 %v2161
          %v2427 = vpop.xlane.xlu0 %2426
          %2428 = vmax.xlane.f32.xlu0 %v2162
          %v2429 = vpop.xlane.xlu0 %2428
          %2430 = vmax.xlane.f32.xlu0 %v2163
          %v2431 = vpop.xlane.xlu0 %2430
          %2432 = vmax.xlane.f32.xlu0 %v2164
          %v2433 = vpop.xlane.xlu0 %2432
          %2434 = vmax.xlane.f32.xlu0 %v2165
          %v2435 = vpop.xlane.xlu0 %2434
          %2436 = vmax.xlane.f32.xlu0 %v2166
          %v2437 = vpop.xlane.xlu0 %2436
          %2438 = vmax.xlane.f32.xlu0 %v2167
          %v2439 = vpop.xlane.xlu0 %2438
          %2440 = vmax.xlane.f32.xlu0 %v2168
          %v2441 = vpop.xlane.xlu0 %2440
          %2442 = vmax.xlane.f32.xlu0 %v2169
          %v2443 = vpop.xlane.xlu0 %2442
          %2444 = vmax.xlane.f32.xlu0 %v2170
          %v2445 = vpop.xlane.xlu0 %2444
          %2446 = vmax.xlane.f32.xlu0 %v2171
          %v2447 = vpop.xlane.xlu0 %2446
          %2448 = vmax.xlane.f32.xlu0 %v2172
          %v2449 = vpop.xlane.xlu0 %2448
          %2450 = vmax.xlane.f32.xlu0 %v2173
          %v2451 = vpop.xlane.xlu0 %2450
          %2452 = vmax.xlane.f32.xlu0 %v2174
          %v2453 = vpop.xlane.xlu0 %2452
          %2454 = vmax.xlane.f32.xlu0 %v2175
          %v2455 = vpop.xlane.xlu0 %2454
          %2456 = vmax.xlane.f32.xlu0 %v2176
          %v2457 = vpop.xlane.xlu0 %2456
          %2458 = vmax.xlane.f32.xlu0 %v2177
          %v2459 = vpop.xlane.xlu0 %2458
          %2460 = vmax.xlane.f32.xlu0 %v2178
          %v2461 = vpop.xlane.xlu0 %2460
          %2462 = vmax.xlane.f32.xlu0 %v2179
          %v2463 = vpop.xlane.xlu0 %2462
          %2464 = vmax.xlane.f32.xlu0 %v2180
          %v2465 = vpop.xlane.xlu0 %2464
          %2466 = vmax.xlane.f32.xlu0 %v2181
          %v2467 = vpop.xlane.xlu0 %2466
          %2468 = vmax.xlane.f32.xlu0 %v2182
          %v2469 = vpop.xlane.xlu0 %2468
          %2470 = vmax.xlane.f32.xlu0 %v2183
          %v2471 = vpop.xlane.xlu0 %2470
          %2472 = vmax.xlane.f32.xlu0 %v2184
          %v2473 = vpop.xlane.xlu0 %2472
          %2474 = vmax.xlane.f32.xlu0 %v2185
          %v2475 = vpop.xlane.xlu0 %2474
          %2476 = vmax.xlane.f32.xlu0 %v2186
          %v2477 = vpop.xlane.xlu0 %2476
          %2478 = vmax.xlane.f32.xlu0 %v2187
          %v2479 = vpop.xlane.xlu0 %2478
          %2480 = vmax.xlane.f32.xlu0 %v2188
          %v2481 = vpop.xlane.xlu0 %2480
          %2482 = vmax.xlane.f32.xlu0 %v2189
          %v2483 = vpop.xlane.xlu0 %2482
          %2484 = vmax.xlane.f32.xlu0 %v2190
          %v2485 = vpop.xlane.xlu0 %2484
          %2486 = vmax.xlane.f32.xlu0 %v2191
          %v2487 = vpop.xlane.xlu0 %2486
          %2488 = vmax.xlane.f32.xlu0 %v2192
          %v2489 = vpop.xlane.xlu0 %2488
          %2490 = vmax.xlane.f32.xlu0 %v2193
          %v2491 = vpop.xlane.xlu0 %2490
          %2492 = vmax.xlane.f32.xlu0 %v2194
          %v2493 = vpop.xlane.xlu0 %2492
          %2494 = vmax.xlane.f32.xlu0 %v2195
          %v2495 = vpop.xlane.xlu0 %2494
          %2496 = vmax.xlane.f32.xlu0 %v2196
          %v2497 = vpop.xlane.xlu0 %2496
          %2498 = vmax.xlane.f32.xlu0 %v2197
          %v2499 = vpop.xlane.xlu0 %2498
          %2500 = vmax.xlane.f32.xlu0 %v2198
          %v2501 = vpop.xlane.xlu0 %2500
          %2502 = vmax.xlane.f32.xlu0 %v2199
          %v2503 = vpop.xlane.xlu0 %2502
          %2504 = vmax.xlane.f32.xlu0 %v2200
          %v2505 = vpop.xlane.xlu0 %2504
          %2506 = vmax.xlane.f32.xlu0 %v2201
          %v2507 = vpop.xlane.xlu0 %2506
          %2508 = vmax.xlane.f32.xlu0 %v2202
          %v2509 = vpop.xlane.xlu0 %2508
          %2510 = vmax.xlane.f32.xlu0 %v2203
          %v2511 = vpop.xlane.xlu0 %2510
          %2512 = vmax.xlane.f32.xlu0 %v2204
          %v2513 = vpop.xlane.xlu0 %2512
          %2514 = vmax.xlane.f32.xlu0 %v2205
          %v2515 = vpop.xlane.xlu0 %2514
          %2516 = vmax.xlane.f32.xlu0 %v2206
          %v2517 = vpop.xlane.xlu0 %2516
          %2518 = vmax.xlane.f32.xlu0 %v2207
          %v2519 = vpop.xlane.xlu0 %2518
          %2520 = vmax.xlane.f32.xlu0 %v2208
          %v2521 = vpop.xlane.xlu0 %2520
          %2522 = vmax.xlane.f32.xlu0 %v2209
          %v2523 = vpop.xlane.xlu0 %2522
          %2524 = vmax.xlane.f32.xlu0 %v2210
          %v2525 = vpop.xlane.xlu0 %2524
          %2526 = vmax.xlane.f32.xlu0 %v2211
          %v2527 = vpop.xlane.xlu0 %2526
          %2528 = vmax.xlane.f32.xlu0 %v2212
          %v2529 = vpop.xlane.xlu0 %2528
          %2530 = vmax.xlane.f32.xlu0 %v2213
          %v2531 = vpop.xlane.xlu0 %2530
          %2532 = vmax.xlane.f32.xlu0 %v2214
          %v2533 = vpop.xlane.xlu0 %2532
          %2534 = vmax.xlane.f32.xlu0 %v2215
          %v2535 = vpop.xlane.xlu0 %2534
          %2536 = vmax.xlane.f32.xlu0 %v2216
          %v2537 = vpop.xlane.xlu0 %2536
          %2538 = vmax.xlane.f32.xlu0 %v2217
          %v2539 = vpop.xlane.xlu0 %2538
          %2540 = vmax.xlane.f32.xlu0 %v2218
          %v2541 = vpop.xlane.xlu0 %2540
          %2542 = vmax.xlane.f32.xlu0 %v2219
          %v2543 = vpop.xlane.xlu0 %2542
          %2544 = vmax.xlane.f32.xlu0 %v2220
          %v2545 = vpop.xlane.xlu0 %2544
          %2546 = vmax.xlane.f32.xlu0 %v2221
          %v2547 = vpop.xlane.xlu0 %2546
          %2548 = vmax.xlane.f32.xlu0 %v2222
          %v2549 = vpop.xlane.xlu0 %2548
          %2550 = vmax.xlane.f32.xlu0 %v2223
          %v2551 = vpop.xlane.xlu0 %2550
          %2552 = vmax.xlane.f32.xlu0 %v2224
          %v2553 = vpop.xlane.xlu0 %2552
          %2554 = vmax.xlane.f32.xlu0 %v2225
          %v2555 = vpop.xlane.xlu0 %2554
          %2556 = vmax.xlane.f32.xlu0 %v2226
          %v2557 = vpop.xlane.xlu0 %2556
          %2558 = vmax.xlane.f32.xlu0 %v2227
          %v2559 = vpop.xlane.xlu0 %2558
          %2560 = vmax.xlane.f32.xlu0 %v2228
          %v2561 = vpop.xlane.xlu0 %2560
          %2562 = vmax.xlane.f32.xlu0 %v2229
          %v2563 = vpop.xlane.xlu0 %2562
          %2564 = vmax.xlane.f32.xlu0 %v2230
          %v2565 = vpop.xlane.xlu0 %2564
          %2566 = vmax.xlane.f32.xlu0 %v2231
          %v2567 = vpop.xlane.xlu0 %2566
          %2568 = vmax.xlane.f32.xlu0 %v2232
          %v2569 = vpop.xlane.xlu0 %2568
          %2570 = vmax.xlane.f32.xlu0 %v2233
          %v2571 = vpop.xlane.xlu0 %2570
          %2572 = vmax.xlane.f32.xlu0 %v2234
          %v2573 = vpop.xlane.xlu0 %2572
          %2574 = vmax.xlane.f32.xlu0 %v2235
          %v2575 = vpop.xlane.xlu0 %2574
          %2576 = vmax.xlane.f32.xlu0 %v2236
          %v2577 = vpop.xlane.xlu0 %2576
          %2578 = vmax.xlane.f32.xlu0 %v2237
          %v2579 = vpop.xlane.xlu0 %2578
          %2580 = vmax.xlane.f32.xlu0 %v2238
          %v2581 = vpop.xlane.xlu0 %2580
          %2582 = vmax.xlane.f32.xlu0 %v2239
          %v2583 = vpop.xlane.xlu0 %2582
          %2584 = vmax.xlane.f32.xlu0 %v2240
          %v2585 = vpop.xlane.xlu0 %2584
          %2586 = vmax.xlane.f32.xlu0 %v2241
          %v2587 = vpop.xlane.xlu0 %2586
          %2588 = vmax.xlane.f32.xlu0 %v2242
          %v2589 = vpop.xlane.xlu0 %2588
          %2590 = vmax.xlane.f32.xlu0 %v2243
          %v2591 = vpop.xlane.xlu0 %2590
          %2592 = vmax.xlane.f32.xlu0 %v2244
          %v2593 = vpop.xlane.xlu0 %2592
          %2594 = vmax.xlane.f32.xlu0 %v2245
          %v2595 = vpop.xlane.xlu0 %2594
          %2596 = vmax.xlane.f32.xlu0 %v2246
          %v2597 = vpop.xlane.xlu0 %2596
          %2598 = vmax.xlane.f32.xlu0 %v2247
          %v2599 = vpop.xlane.xlu0 %2598
          %2600 = vmax.xlane.f32.xlu0 %v2248
          %v2601 = vpop.xlane.xlu0 %2600
          %2602 = vmax.xlane.f32.xlu0 %v2249
          %v2603 = vpop.xlane.xlu0 %2602
          %2604 = vmax.xlane.f32.xlu0 %v2250
          %v2605 = vpop.xlane.xlu0 %2604
          %2606 = vmax.xlane.f32.xlu0 %v2251
          %v2607 = vpop.xlane.xlu0 %2606
          %2608 = vmax.xlane.f32.xlu0 %v2252
          %v2609 = vpop.xlane.xlu0 %2608
          %2610 = vmax.xlane.f32.xlu0 %v2253
          %v2611 = vpop.xlane.xlu0 %2610
          %2612 = vmax.xlane.f32.xlu0 %v2254
          %v2613 = vpop.xlane.xlu0 %2612
          %2614 = vmax.xlane.f32.xlu0 %v2255
          %v2615 = vpop.xlane.xlu0 %2614
          %2616 = vmax.xlane.f32.xlu0 %v2256
          %v2617 = vpop.xlane.xlu0 %2616
          %2618 = vmax.xlane.f32.xlu0 %v2257
          %v2619 = vpop.xlane.xlu0 %2618
          %2620 = vmax.xlane.f32.xlu0 %v2258
          %v2621 = vpop.xlane.xlu0 %2620
          %2622 = vmax.xlane.f32.xlu0 %v2259
          %v2623 = vpop.xlane.xlu0 %2622
          %2624 = vmax.xlane.f32.xlu0 %v2260
          %v2625 = vpop.xlane.xlu0 %2624
          %2626 = vmax.xlane.f32.xlu0 %v2261
          %v2627 = vpop.xlane.xlu0 %2626
          %2628 = vmax.xlane.f32.xlu0 %v2262
          %v2629 = vpop.xlane.xlu0 %2628
          %2630 = vmax.xlane.f32.xlu0 %v2263
          %v2631 = vpop.xlane.xlu0 %2630
          %2632 = vmax.xlane.f32.xlu0 %v2264
          %v2633 = vpop.xlane.xlu0 %2632
          %2634 = vmax.xlane.f32.xlu0 %v2265
          %v2635 = vpop.xlane.xlu0 %2634
          %2636 = vmax.xlane.f32.xlu0 %v2266
          %v2637 = vpop.xlane.xlu0 %2636
          %2638 = vmax.xlane.f32.xlu0 %v2267
          %v2639 = vpop.xlane.xlu0 %2638
          %2640 = vmax.xlane.f32.xlu0 %v2268
          %v2641 = vpop.xlane.xlu0 %2640
          %2642 = vmax.xlane.f32.xlu0 %v2269
          %v2643 = vpop.xlane.xlu0 %2642
          %2644 = vmax.xlane.f32.xlu0 %v2270
          %v2645 = vpop.xlane.xlu0 %2644
          %2646 = vmax.xlane.f32.xlu0 %v2271
          %v2647 = vpop.xlane.xlu0 %2646
          %2648 = vmax.xlane.f32.xlu0 %v2272
          %v2649 = vpop.xlane.xlu0 %2648
          %2650 = vmax.xlane.f32.xlu0 %v2273
          %v2651 = vpop.xlane.xlu0 %2650
          %2652 = vmax.xlane.f32.xlu0 %v2274
          %v2653 = vpop.xlane.xlu0 %2652
          %2654 = vmax.xlane.f32.xlu0 %v2275
          %v2655 = vpop.xlane.xlu0 %2654
          %2656 = vmax.xlane.f32.xlu0 %v2276
          %v2657 = vpop.xlane.xlu0 %2656
          %2658 = vmax.xlane.f32.xlu0 %v2277
          %v2659 = vpop.xlane.xlu0 %2658
          %2660 = vmax.xlane.f32.xlu0 %v2278
          %v2661 = vpop.xlane.xlu0 %2660
          %2662 = vmax.xlane.f32.xlu0 %v2279
          %v2663 = vpop.xlane.xlu0 %2662
          %2664 = vmax.xlane.f32.xlu0 %v2280
          %v2665 = vpop.xlane.xlu0 %2664
          %2666 = vmax.xlane.f32.xlu0 %v2281
          %v2667 = vpop.xlane.xlu0 %2666
          %2668 = vmax.xlane.f32.xlu0 %v2282
          %v2669 = vpop.xlane.xlu0 %2668
          %2670 = vmax.xlane.f32.xlu0 %v2283
          %v2671 = vpop.xlane.xlu0 %2670
          %vm2672 = vcmask 7168
          %2673 = vst.msk [vmem:[%s329] sm:$0xff] %vm2672, %v2417
          %2674 = vst.msk [vmem:[%s329 + $0x8] sm:$0xff] %vm2672, %v2419
          %2675 = vst.msk [vmem:[%s329 + $0x10] sm:$0xff] %vm2672, %v2421
          %2676 = vst.msk [vmem:[%s329 + $0x18] sm:$0xff] %vm2672, %v2423
          %2677 = vst.msk [vmem:[%s329 + $0x20] sm:$0xff] %vm2672, %v2425
          %2678 = vst.msk [vmem:[%s329 + $0x28] sm:$0xff] %vm2672, %v2427
          %2679 = vst.msk [vmem:[%s329 + $0x30] sm:$0xff] %vm2672, %v2429
          %2680 = vst.msk [vmem:[%s329 + $0x38] sm:$0xff] %vm2672, %v2431
          %2681 = vst.msk [vmem:[%s329 + $0x40] sm:$0xff] %vm2672, %v2433
          %2682 = vst.msk [vmem:[%s329 + $0x48] sm:$0xff] %vm2672, %v2435
          %2683 = vst.msk [vmem:[%s329 + $0x50] sm:$0xff] %vm2672, %v2437
          %2684 = vst.msk [vmem:[%s329 + $0x58] sm:$0xff] %vm2672, %v2439
          %2685 = vst.msk [vmem:[%s329 + $0x60] sm:$0xff] %vm2672, %v2441
          %2686 = vst.msk [vmem:[%s329 + $0x68] sm:$0xff] %vm2672, %v2443
          %2687 = vst.msk [vmem:[%s329 + $0x70] sm:$0xff] %vm2672, %v2445
          %2688 = vst.msk [vmem:[%s329 + $0x78] sm:$0xff] %vm2672, %v2447
          %2689 = vst.msk [vmem:[%s329 + $0x80] sm:$0xff] %vm2672, %v2449
          %2690 = vst.msk [vmem:[%s329 + $0x88] sm:$0xff] %vm2672, %v2451
          %2691 = vst.msk [vmem:[%s329 + $0x90] sm:$0xff] %vm2672, %v2453
          %2692 = vst.msk [vmem:[%s329 + $0x98] sm:$0xff] %vm2672, %v2455
          %2693 = vst.msk [vmem:[%s329 + $0xa0] sm:$0xff] %vm2672, %v2457
          %2694 = vst.msk [vmem:[%s329 + $0xa8] sm:$0xff] %vm2672, %v2459
          %2695 = vst.msk [vmem:[%s329 + $0xb0] sm:$0xff] %vm2672, %v2461
          %2696 = vst.msk [vmem:[%s329 + $0xb8] sm:$0xff] %vm2672, %v2463
          %2697 = vst.msk [vmem:[%s329 + $0xc0] sm:$0xff] %vm2672, %v2465
          %2698 = vst.msk [vmem:[%s329 + $0xc8] sm:$0xff] %vm2672, %v2467
          %2699 = vst.msk [vmem:[%s329 + $0xd0] sm:$0xff] %vm2672, %v2469
          %2700 = vst.msk [vmem:[%s329 + $0xd8] sm:$0xff] %vm2672, %v2471
          %2701 = vst.msk [vmem:[%s329 + $0xe0] sm:$0xff] %vm2672, %v2473
          %2702 = vst.msk [vmem:[%s329 + $0xe8] sm:$0xff] %vm2672, %v2475
          %2703 = vst.msk [vmem:[%s329 + $0xf0] sm:$0xff] %vm2672, %v2477
          %2704 = vst.msk [vmem:[%s329 + $0xf8] sm:$0xff] %vm2672, %v2479
          %2705 = vst.msk [vmem:[%s329 + $0x100] sm:$0xff] %vm2672, %v2481
          %2706 = vst.msk [vmem:[%s329 + $0x108] sm:$0xff] %vm2672, %v2483
          %2707 = vst.msk [vmem:[%s329 + $0x110] sm:$0xff] %vm2672, %v2485
          %2708 = vst.msk [vmem:[%s329 + $0x118] sm:$0xff] %vm2672, %v2487
          %2709 = vst.msk [vmem:[%s329 + $0x120] sm:$0xff] %vm2672, %v2489
          %2710 = vst.msk [vmem:[%s329 + $0x128] sm:$0xff] %vm2672, %v2491
          %2711 = vst.msk [vmem:[%s329 + $0x130] sm:$0xff] %vm2672, %v2493
          %2712 = vst.msk [vmem:[%s329 + $0x138] sm:$0xff] %vm2672, %v2495
          %2713 = vst.msk [vmem:[%s329 + $0x140] sm:$0xff] %vm2672, %v2497
          %2714 = vst.msk [vmem:[%s329 + $0x148] sm:$0xff] %vm2672, %v2499
          %2715 = vst.msk [vmem:[%s329 + $0x150] sm:$0xff] %vm2672, %v2501
          %2716 = vst.msk [vmem:[%s329 + $0x158] sm:$0xff] %vm2672, %v2503
          %2717 = vst.msk [vmem:[%s329 + $0x160] sm:$0xff] %vm2672, %v2505
          %2718 = vst.msk [vmem:[%s329 + $0x168] sm:$0xff] %vm2672, %v2507
          %2719 = vst.msk [vmem:[%s329 + $0x170] sm:$0xff] %vm2672, %v2509
          %2720 = vst.msk [vmem:[%s329 + $0x178] sm:$0xff] %vm2672, %v2511
          %2721 = vst.msk [vmem:[%s329 + $0x180] sm:$0xff] %vm2672, %v2513
          %2722 = vst.msk [vmem:[%s329 + $0x188] sm:$0xff] %vm2672, %v2515
          %2723 = vst.msk [vmem:[%s329 + $0x190] sm:$0xff] %vm2672, %v2517
          %2724 = vst.msk [vmem:[%s329 + $0x198] sm:$0xff] %vm2672, %v2519
          %2725 = vst.msk [vmem:[%s329 + $0x1a0] sm:$0xff] %vm2672, %v2521
          %2726 = vst.msk [vmem:[%s329 + $0x1a8] sm:$0xff] %vm2672, %v2523
          %2727 = vst.msk [vmem:[%s329 + $0x1b0] sm:$0xff] %vm2672, %v2525
          %2728 = vst.msk [vmem:[%s329 + $0x1b8] sm:$0xff] %vm2672, %v2527
          %2729 = vst.msk [vmem:[%s329 + $0x1c0] sm:$0xff] %vm2672, %v2529
          %2730 = vst.msk [vmem:[%s329 + $0x1c8] sm:$0xff] %vm2672, %v2531
          %2731 = vst.msk [vmem:[%s329 + $0x1d0] sm:$0xff] %vm2672, %v2533
          %2732 = vst.msk [vmem:[%s329 + $0x1d8] sm:$0xff] %vm2672, %v2535
          %2733 = vst.msk [vmem:[%s329 + $0x1e0] sm:$0xff] %vm2672, %v2537
          %2734 = vst.msk [vmem:[%s329 + $0x1e8] sm:$0xff] %vm2672, %v2539
          %2735 = vst.msk [vmem:[%s329 + $0x1f0] sm:$0xff] %vm2672, %v2541
          %2736 = vst.msk [vmem:[%s329 + $0x1f8] sm:$0xff] %vm2672, %v2543
          %2737 = vst.msk [vmem:[%s329 + $0x200] sm:$0xff] %vm2672, %v2545
          %2738 = vst.msk [vmem:[%s329 + $0x208] sm:$0xff] %vm2672, %v2547
          %2739 = vst.msk [vmem:[%s329 + $0x210] sm:$0xff] %vm2672, %v2549
          %2740 = vst.msk [vmem:[%s329 + $0x218] sm:$0xff] %vm2672, %v2551
          %2741 = vst.msk [vmem:[%s329 + $0x220] sm:$0xff] %vm2672, %v2553
          %2742 = vst.msk [vmem:[%s329 + $0x228] sm:$0xff] %vm2672, %v2555
          %2743 = vst.msk [vmem:[%s329 + $0x230] sm:$0xff] %vm2672, %v2557
          %2744 = vst.msk [vmem:[%s329 + $0x238] sm:$0xff] %vm2672, %v2559
          %2745 = vst.msk [vmem:[%s329 + $0x240] sm:$0xff] %vm2672, %v2561
          %2746 = vst.msk [vmem:[%s329 + $0x248] sm:$0xff] %vm2672, %v2563
          %2747 = vst.msk [vmem:[%s329 + $0x250] sm:$0xff] %vm2672, %v2565
          %2748 = vst.msk [vmem:[%s329 + $0x258] sm:$0xff] %vm2672, %v2567
          %2749 = vst.msk [vmem:[%s329 + $0x260] sm:$0xff] %vm2672, %v2569
          %2750 = vst.msk [vmem:[%s329 + $0x268] sm:$0xff] %vm2672, %v2571
          %2751 = vst.msk [vmem:[%s329 + $0x270] sm:$0xff] %vm2672, %v2573
          %2752 = vst.msk [vmem:[%s329 + $0x278] sm:$0xff] %vm2672, %v2575
          %2753 = vst.msk [vmem:[%s329 + $0x280] sm:$0xff] %vm2672, %v2577
          %2754 = vst.msk [vmem:[%s329 + $0x288] sm:$0xff] %vm2672, %v2579
          %2755 = vst.msk [vmem:[%s329 + $0x290] sm:$0xff] %vm2672, %v2581
          %2756 = vst.msk [vmem:[%s329 + $0x298] sm:$0xff] %vm2672, %v2583
          %2757 = vst.msk [vmem:[%s329 + $0x2a0] sm:$0xff] %vm2672, %v2585
          %2758 = vst.msk [vmem:[%s329 + $0x2a8] sm:$0xff] %vm2672, %v2587
          %2759 = vst.msk [vmem:[%s329 + $0x2b0] sm:$0xff] %vm2672, %v2589
          %2760 = vst.msk [vmem:[%s329 + $0x2b8] sm:$0xff] %vm2672, %v2591
          %2761 = vst.msk [vmem:[%s329 + $0x2c0] sm:$0xff] %vm2672, %v2593
          %2762 = vst.msk [vmem:[%s329 + $0x2c8] sm:$0xff] %vm2672, %v2595
          %2763 = vst.msk [vmem:[%s329 + $0x2d0] sm:$0xff] %vm2672, %v2597
          %2764 = vst.msk [vmem:[%s329 + $0x2d8] sm:$0xff] %vm2672, %v2599
          %2765 = vst.msk [vmem:[%s329 + $0x2e0] sm:$0xff] %vm2672, %v2601
          %2766 = vst.msk [vmem:[%s329 + $0x2e8] sm:$0xff] %vm2672, %v2603
          %2767 = vst.msk [vmem:[%s329 + $0x2f0] sm:$0xff] %vm2672, %v2605
          %2768 = vst.msk [vmem:[%s329 + $0x2f8] sm:$0xff] %vm2672, %v2607
          %2769 = vst.msk [vmem:[%s329 + $0x300] sm:$0xff] %vm2672, %v2609
          %2770 = vst.msk [vmem:[%s329 + $0x308] sm:$0xff] %vm2672, %v2611
          %2771 = vst.msk [vmem:[%s329 + $0x310] sm:$0xff] %vm2672, %v2613
          %2772 = vst.msk [vmem:[%s329 + $0x318] sm:$0xff] %vm2672, %v2615
          %2773 = vst.msk [vmem:[%s329 + $0x320] sm:$0xff] %vm2672, %v2617
          %2774 = vst.msk [vmem:[%s329 + $0x328] sm:$0xff] %vm2672, %v2619
          %2775 = vst.msk [vmem:[%s329 + $0x330] sm:$0xff] %vm2672, %v2621
          %2776 = vst.msk [vmem:[%s329 + $0x338] sm:$0xff] %vm2672, %v2623
          %2777 = vst.msk [vmem:[%s329 + $0x340] sm:$0xff] %vm2672, %v2625
          %2778 = vst.msk [vmem:[%s329 + $0x348] sm:$0xff] %vm2672, %v2627
          %2779 = vst.msk [vmem:[%s329 + $0x350] sm:$0xff] %vm2672, %v2629
          %2780 = vst.msk [vmem:[%s329 + $0x358] sm:$0xff] %vm2672, %v2631
          %2781 = vst.msk [vmem:[%s329 + $0x360] sm:$0xff] %vm2672, %v2633
          %2782 = vst.msk [vmem:[%s329 + $0x368] sm:$0xff] %vm2672, %v2635
          %2783 = vst.msk [vmem:[%s329 + $0x370] sm:$0xff] %vm2672, %v2637
          %2784 = vst.msk [vmem:[%s329 + $0x378] sm:$0xff] %vm2672, %v2639
          %2785 = vst.msk [vmem:[%s329 + $0x380] sm:$0xff] %vm2672, %v2641
          %2786 = vst.msk [vmem:[%s329 + $0x388] sm:$0xff] %vm2672, %v2643
          %2787 = vst.msk [vmem:[%s329 + $0x390] sm:$0xff] %vm2672, %v2645
          %2788 = vst.msk [vmem:[%s329 + $0x398] sm:$0xff] %vm2672, %v2647
          %2789 = vst.msk [vmem:[%s329 + $0x3a0] sm:$0xff] %vm2672, %v2649
          %2790 = vst.msk [vmem:[%s329 + $0x3a8] sm:$0xff] %vm2672, %v2651
          %2791 = vst.msk [vmem:[%s329 + $0x3b0] sm:$0xff] %vm2672, %v2653
          %2792 = vst.msk [vmem:[%s329 + $0x3b8] sm:$0xff] %vm2672, %v2655
          %2793 = vst.msk [vmem:[%s329 + $0x3c0] sm:$0xff] %vm2672, %v2657
          %2794 = vst.msk [vmem:[%s329 + $0x3c8] sm:$0xff] %vm2672, %v2659
          %2795 = vst.msk [vmem:[%s329 + $0x3d0] sm:$0xff] %vm2672, %v2661
          %2796 = vst.msk [vmem:[%s329 + $0x3d8] sm:$0xff] %vm2672, %v2663
          %2797 = vst.msk [vmem:[%s329 + $0x3e0] sm:$0xff] %vm2672, %v2665
          %2798 = vst.msk [vmem:[%s329 + $0x3e8] sm:$0xff] %vm2672, %v2667
          %2799 = vst.msk [vmem:[%s329 + $0x3f0] sm:$0xff] %vm2672, %v2669
          %2800 = vst.msk [vmem:[%s329 + $0x3f8] sm:$0xff] %vm2672, %v2671
        $region56: #{tpu_custom_call.1} parent=43 // pred_fallthru
          _
        %s2801 = sand.u32 %s178, 1
        %s2802 = scalar_lea.sflag [#allocation5], %s2801
        %s2803 = sand.u32 %s178, 1
        %s2804 = smul.addr %s2803, 32
        %s2805 = scalar_lea.vmem [#allocation6], %s2804
        %p2806 = scmp.lt.s32.totalorder %s27, 1
        %s2807 = scalar_select %p2806, %s27, 1
        %s2808 = smul.addr %s2807, 128
        %s2809 = smul.addr %s2808, 8
        %s2810 = scalar_lea.vmem %s7, %s2809
        // Predicated region
        $region57: #{tpu_custom_call.1} parent=43 // pred_check
          %p2811 = pneg %p188
        $region58: #{tpu_custom_call.1} parent=43 // pred_check_branch
          %2813 = sbr.rel (%p2811) target = $region60
        $region59: #{tpu_custom_call.1} parent=43 // pred_region
          %s2815 = ssub.s32 512, 512
          %2816 = vsyncadd %s2802, %s2815
          %s2817 = smul.addr %s27, 16
          %s2818 = sadd.s32 %s28, %s2817
          %s2819 = smul.addr %s2818, 64
          %s2820 = scalar_lea.hbm %s6, %s2819
          %s2821 = sshll.u32 %s2805, 4
          %s2822 = int_to_ptr.vmem [resolvable:$true] %s2821
          %2827 = dma.vmem_to_hbm [thread:$0]  %s2822, 512, %s2820, %s2802, 64, 128, 4
        $region60: #{tpu_custom_call.1} parent=43 // pred_fallthru
          _
        // Predicated region
        $region61: #{tpu_custom_call.1} parent=43 // pred_check
          %p2828 = pneg %p214
        $region62: #{tpu_custom_call.1} parent=43 // pred_check_branch
          %2830 = sbr.rel (%p2828) target = $region64
        $region63: #{tpu_custom_call.1} parent=43 // pred_region
          _
        $region64: #{tpu_custom_call.1} parent=43 // pred_fallthru
          _
      $region44: #{tpu_custom_call.1} parent=5 // pred_fallthru
        _
      %p2831 = scmp.le.s32.totalorder 2, %s18
      // Predicated region
      $region65: #{tpu_custom_call.1} parent=5 // pred_check
        %p2832 = pneg %p2831
      $region66: #{tpu_custom_call.1} parent=5 // pred_check_branch
        %2834 = sbr.rel (%p2832) target = $region68
      $region67: #{tpu_custom_call.1} parent=5 // pred_region
        %s2835 = ssub.s32 %s18, 2
        // Predicated region
        $region69: #{tpu_custom_call.1} parent=67 // pred_check
          %p2836 = pneg %p194
        $region70: #{tpu_custom_call.1} parent=67 // pred_check_branch
          %2838 = sbr.rel (%p2836) target = $region72
        $region71: #{tpu_custom_call.1} parent=67 // pred_region
          %s2839 = sand.u32 %s179, 1
          %s2840 = scalar_lea.sflag [#allocation5], %s2839
          %s2841 = sand.u32 %s179, 1
          %s2842 = smul.addr %s2841, 32
          %s2843 = scalar_lea.vmem [#allocation6], %s2842
          %2844 = dma.done %s2840, 512
        $region72: #{tpu_custom_call.1} parent=67 // pred_fallthru
          _
        // Predicated region
        $region73: #{tpu_custom_call.1} parent=67 // pred_check
          %p2845 = pneg %p220
        $region74: #{tpu_custom_call.1} parent=67 // pred_check_branch
          %2847 = sbr.rel (%p2845) target = $region76
        $region75: #{tpu_custom_call.1} parent=67 // pred_region
          %p2848 = scmp.lt.s32.totalorder %s29, 1
          %s2849 = scalar_select %p2848, %s29, 1
          %s2850 = smul.addr %s2849, 128
          %s2851 = smul.addr %s2850, 8
          %s2852 = scalar_lea.vmem %s7, %s2851
        $region76: #{tpu_custom_call.1} parent=67 // pred_fallthru
          _
      $region68: #{tpu_custom_call.1} parent=5 // pred_fallthru
        _
    $region6: #{tpu_custom_call.1} parent=1 // loop_footer
      %s22 = sadd.s32 1, %s18
    $region7: #{tpu_custom_call.1} parent=1 // loop_footer_branch
      %17 = sbr.rel target = $region3
    $region8: #{tpu_custom_call.1} parent=1 // loop_exit
      _
    %2853 = vsyncpa [#allocation4], 1
    %s2854 = scalar_lea.sflag [#allocation4], 1
    %2855 = vsyncpa %s2854, 1
    %2856 = vsyncpa [#allocation5], 1
    %s2857 = scalar_lea.sflag [#allocation5], 1
    %2858 = vsyncpa %s2857, 1

</llo_original>
